<compile_context>
chip_gen: v6e
topology: v6e:2x2x1
jax: 0.10.0
libtpu: 0.0.40
codegen_flags: <defaults>
</compile_context>

<pallas_src>
import math

import jax
import jax.numpy as jnp
from jax import lax
from jax.experimental import pallas as pl
from jax.experimental.pallas import tpu as pltpu


# --------------------------------------------------------------------------
# In-kernel helpers
# --------------------------------------------------------------------------

def _taps_matmul(xp, w, H, W):
    """xp: (H+2, W+2, C) padded activation in VMEM; w: (9*C, Cout).

    Forms the 9 shifted 3x3 windows with static slices, concatenates them along
    the channel (lane) axis and performs a single MXU matmul with K = 9*C.
    """
    C = xp.shape[-1]
    taps = [xp[kh:kh + H, kw:kw + W, :].reshape(H * W, C)
            for kh in range(3) for kw in range(3)]
    t = jnp.concatenate(taps, axis=-1)                  # (HW, 9*C)
    return jnp.dot(t, w, preferred_element_type=jnp.float32)


def _store_stats(st_ref, c):
    s = jnp.sum(c, axis=0, keepdims=True)               # (1, Cout)
    ss = jnp.sum(c * c, axis=0, keepdims=True)          # (1, Cout)
    st_ref[0] = jnp.concatenate([s, ss], axis=0)        # (2, Cout)


# --------------------------------------------------------------------------
# Pallas kernels
# --------------------------------------------------------------------------

def conv1_kernel(xp_ref, w_ref, c_ref, st_ref):
    # xp (1, H+2, W+2, Cin), w (9*Cin, 64), c (1, HW, 64), st (1, 2, 64)
    Hp, Wp = xp_ref.shape[1], xp_ref.shape[2]
    H, W = Hp - 2, Wp - 2
    c = _taps_matmul(xp_ref[0], w_ref[...], H, W)
    c_ref[0] = c
    _store_stats(st_ref, c)


def conv2_bn_fused_kernel(c1p_ref, mask_ref, sc_ref, sh_ref, w_ref, c_ref, st_ref):
    # BN1 + ReLU fused into conv2.  Border of the padded block is forced back to
    # zero with `mask` so conv2 sees zero-padded ReLU(BN(c1)), as PyTorch does.
    # c1p (1, H+2, W+2, 64), mask (H+2, W+2, 1), sc/sh (1, 64), w (9*64, Cin)
    Hp, Wp = c1p_ref.shape[1], c1p_ref.shape[2]
    H, W = Hp - 2, Wp - 2
    a1p = jnp.maximum(c1p_ref[0] * sc_ref[...] + sh_ref[...], 0.0) * mask_ref[...]
    c = _taps_matmul(a1p, w_ref[...], H, W)
    c_ref[0] = c
    _store_stats(st_ref, c)


def head_kernel(c2t_ref, xt_ref, sc_ref, sh_ref, w_ref, b_ref, bt_ref, o_ref):
    # Channel-major:  c2t/xt (1, Cin, HW), sc/sh (Cin, 1), w (ncls, Cin),
    # b (ncls, 1), bt (HW, Ho*Wo), o (1, ncls, Ho*Wo).
    z = jnp.maximum(c2t_ref[0] * sc_ref[...] + sh_ref[...] + xt_ref[0], 0.0)
    y = jnp.dot(w_ref[...], z, preferred_element_type=jnp.float32) + b_ref[...]
    # Kronecker upsample matrix rows sum to 1, so the bias passes through exactly.
    o_ref[0] = jnp.dot(y, bt_ref[...], preferred_element_type=jnp.float32)


# --------------------------------------------------------------------------
# pallas_call wrappers
# --------------------------------------------------------------------------

def _conv1(xp, w_flat, cout):
    N, Hp, Wp, Cin = xp.shape
    H, W = Hp - 2, Wp - 2
    HW = H * W
    return pl.pallas_call(
        conv1_kernel,
        out_shape=(jax.ShapeDtypeStruct((N, HW, cout), jnp.float32),
                   jax.ShapeDtypeStruct((N, 2, cout), jnp.float32)),
        grid=(N,),
        in_specs=[pl.BlockSpec((1, Hp, Wp, Cin), lambda n: (n, 0, 0, 0)),
                  pl.BlockSpec((9 * Cin, cout), lambda n: (0, 0))],
        out_specs=(pl.BlockSpec((1, HW, cout), lambda n: (n, 0, 0)),
                   pl.BlockSpec((1, 2, cout), lambda n: (n, 0, 0))),
        compiler_params=pltpu.CompilerParams(
            dimension_semantics=("parallel",)),
    )(xp, w_flat)


def _conv2_bn_fused(c1p, mask, sc1, sh1, w_flat, cout):
    N, Hp, Wp, C = c1p.shape
    H, W = Hp - 2, Wp - 2
    HW = H * W
    return pl.pallas_call(
        conv2_bn_fused_kernel,
        out_shape=(jax.ShapeDtypeStruct((N, HW, cout), jnp.float32),
                   jax.ShapeDtypeStruct((N, 2, cout), jnp.float32)),
        grid=(N,),
        in_specs=[pl.BlockSpec((1, Hp, Wp, C), lambda n: (n, 0, 0, 0)),
                  pl.BlockSpec((Hp, Wp, 1), lambda n: (0, 0, 0)),
                  pl.BlockSpec((1, C), lambda n: (0, 0)),
                  pl.BlockSpec((1, C), lambda n: (0, 0)),
                  pl.BlockSpec((9 * C, cout), lambda n: (0, 0))],
        out_specs=(pl.BlockSpec((1, HW, cout), lambda n: (n, 0, 0)),
                   pl.BlockSpec((1, 2, cout), lambda n: (n, 0, 0))),
        compiler_params=pltpu.CompilerParams(
            dimension_semantics=("parallel",)),
    )(c1p, mask, sc1, sh1, w_flat)


def _head_fused(c2t, xt, sc2, sh2, w3ft, b3ft, bT):
    N, Cin, HW = c2t.shape
    ncls = w3ft.shape[0]
    HoWo = bT.shape[1]
    return pl.pallas_call(
        head_kernel,
        out_shape=jax.ShapeDtypeStruct((N, ncls, HoWo), jnp.float32),
        grid=(N,),
        in_specs=[pl.BlockSpec((1, Cin, HW), lambda n: (n, 0, 0)),
                  pl.BlockSpec((1, Cin, HW), lambda n: (n, 0, 0)),
                  pl.BlockSpec((Cin, 1), lambda n: (0, 0)),
                  pl.BlockSpec((Cin, 1), lambda n: (0, 0)),
                  pl.BlockSpec((ncls, Cin), lambda n: (0, 0)),
                  pl.BlockSpec((ncls, 1), lambda n: (0, 0)),
                  pl.BlockSpec((HW, HoWo), lambda n: (0, 0))],
        out_specs=pl.BlockSpec((1, ncls, HoWo), lambda n: (n, 0, 0)),
        compiler_params=pltpu.CompilerParams(
            dimension_semantics=("parallel",)),
    )(c2t, xt, sc2, sh2, w3ft, b3ft, bT)


# --------------------------------------------------------------------------
# Glue (padding, BN affine from per-batch stats, interpolation matrices)
# --------------------------------------------------------------------------

def _bn_scale_shift(stats, gamma, beta, count, eps=1e-5):
    # Training-mode BatchNorm (fresh nn.Module defaults to train()): batch stats,
    # biased variance, eps=1e-5.  stats: (N, 2, C) per-batch [sum; sumsq].
    # NOTE: E[x^2]-E[x]^2 can cancel catastrophically at large N*HW; fine at toy size.
    s = jnp.sum(stats[:, 0, :], axis=0)
    ss = jnp.sum(stats[:, 1, :], axis=0)
    mean = s / count
    var = ss / count - mean * mean
    scale = gamma * lax.rsqrt(var + eps)
    shift = beta - mean * scale
    return scale, shift


def _bilinear_matrix(n_in, n_out):
    # align_corners=True: src = dst * (n_in - 1) / (n_out - 1); rows sum to 1.
    if n_in == 1 or n_out == 1:
        return jnp.ones((n_out, n_in), jnp.float32) / n_in
    src = jnp.arange(n_out, dtype=jnp.float32) * (n_in - 1) / (n_out - 1)
    i0 = jnp.clip(jnp.floor(src).astype(jnp.int32), 0, n_in - 1)
    i1 = jnp.clip(i0 + 1, 0, n_in - 1)
    frac = src - i0.astype(jnp.float32)
    rows = jnp.arange(n_out)
    A = jnp.zeros((n_out, n_in), jnp.float32)
    A = A.at[rows, i0].add(1.0 - frac)
    A = A.at[rows, i1].add(frac)
    return A


# --------------------------------------------------------------------------
# DeepSupervisionBlockV2 forward
# --------------------------------------------------------------------------

def deep_supervision_block_v2(x_nchw, params, up_scale):
    N, Cin, H, W = x_nchw.shape
    inter = params["w1"].shape[-1]
    num_cls = params["w3"].shape[1]
    HW = H * W
    Ho, Wo = H * up_scale, W * up_scale

    # --- conv1 + per-batch BN1 stats -------------------------------------
    x_nhwc = jnp.transpose(x_nchw, (0, 2, 3, 1))
    xp = jnp.pad(x_nhwc, ((0, 0), (1, 1), (1, 1), (0, 0)))
    w1_flat = params["w1"].reshape(9 * Cin, inter)
    c1, st1 = _conv1(xp, w1_flat, inter)                       # (N, HW, 64)
    sc1, sh1 = _bn_scale_shift(st1, params["g1"], params["b1"], N * HW)

    # --- BN1 + ReLU fused with conv2 + per-batch BN2 stats ----------------
    c1p = jnp.pad(c1.reshape(N, H, W, inter), ((0, 0), (1, 1), (1, 1), (0, 0)))
    mask = jnp.zeros((H + 2, W + 2, 1), jnp.float32)
    mask = mask.at[1:H + 1, 1:W + 1, :].set(1.0)
    w2_flat = params["w2"].reshape(9 * inter, Cin)
    c2, st2 = _conv2_bn_fused(c1p, mask, sc1.reshape(1, inter),
                              sh1.reshape(1, inter), w2_flat, Cin)  # (N, HW, Cin)
    sc2, sh2 = _bn_scale_shift(st2, params["g2"], params["b2"], N * HW)

    # --- fused head: fold w4/b4 into w3/b3, Kronecker bilinear upsample ---
    w3f_t = (params["w3"] @ params["w4"].T).T                   # (ncls, Cin)
    b3f_t = (params["b3"] @ params["w4"].T + params["b4"].T).T  # (ncls, 1)
    Ah = _bilinear_matrix(H, Ho)
    Aw = _bilinear_matrix(W, Wo)
    bT = jnp.kron(Ah, Aw).T                                     # (HW, Ho*Wo)

    c2t = jnp.transpose(c2, (0, 2, 1))                          # (N, Cin, HW)
    xt = x_nchw.reshape(N, Cin, HW)                             # identity, free reshape
    out = _head_fused(c2t, xt, sc2.reshape(Cin, 1), sh2.reshape(Cin, 1),
                      w3f_t, b3f_t, bT)                         # (N, ncls, Ho*Wo)
    return out.reshape(N, num_cls, Ho, Wo)                      # NCHW, like PyTorch


# --------------------------------------------------------------------------
# Pure-JAX reference (guards BN, residual, upsample and the w4-folding invariant)
# --------------------------------------------------------------------------

def reference_forward(x_nchw, p, up_scale, eps=1e-5):
    x = jnp.transpose(x_nchw, (0, 2, 3, 1))

    def conv3x3(h, w):
        return lax.conv_general_dilated(h, w, (1, 1), ((1, 1), (1, 1)),
                                        dimension_numbers=("NHWC", "HWIO", "NHWC"))

    def bn_train(h, g, b):
        m = jnp.mean(h, axis=(0, 1, 2))
        v = jnp.mean(jnp.square(h - m), axis=(0, 1, 2))
        return (h - m) * lax.rsqrt(v + eps) * g + b

    h = jax.nn.relu(bn_train(conv3x3(x, p["w1"]), p["g1"], p["b1"]))
    h = bn_train(conv3x3(h, p["w2"]), p["g2"], p["b2"])
    h = jax.nn.relu(h + x)
    h = jnp.einsum("nhwc,co->nhwo", h, p["w3"]) + p["b3"][0]
    _, H, W, _ = h.shape
    Ah = _bilinear_matrix(H, H * up_scale)
    Aw = _bilinear_matrix(W, W * up_scale)
    h = jnp.einsum("oh,nhwc->nowc", Ah, h)
    h = jnp.einsum("pw,nowc->nopc", Aw, h)
    h = jnp.einsum("nhwc,dc->nhwd", h, p["w4"]) + p["b4"][:, 0]
    return jnp.transpose(h, (0, 3, 1, 2))


# --------------------------------------------------------------------------
# Main
# --------------------------------------------------------------------------

if __name__ == "__main__":
    in_ch, num_cls, up_scale = 4, 3, 2
    inter = 64                    # ResBlock inter_ch default
    N, H, W = 2, 16, 16

    key = jax.random.PRNGKey(0)
    k1, k2, k3, k4, kx = jax.random.split(key, 5)

    # Deterministic synthetic init matching initialize_weights():
    #   Conv2d: kaiming_normal (std = sqrt(2/fan_in)), bias = 0
    #   BatchNorm2d: weight = 1, bias = 0
    params = {
        "w1": jax.random.normal(k1, (3, 3, in_ch, inter), jnp.float32)
              * math.sqrt(2.0 / (in_ch * 9)),
        "g1": jnp.ones((inter,), jnp.float32),
        "b1": jnp.zeros((inter,), jnp.float32),
        "w2": jax.random.normal(k2, (3, 3, inter, in_ch), jnp.float32)
              * math.sqrt(2.0 / (inter * 9)),
        "g2": jnp.ones((in_ch,), jnp.float32),
        "b2": jnp.zeros((in_ch,), jnp.float32),
        "w3": jax.random.normal(k3, (in_ch, num_cls), jnp.float32)
              * math.sqrt(2.0 / in_ch),
        "b3": jnp.zeros((1, num_cls), jnp.float32),
        "w4": jax.random.normal(k4, (num_cls, num_cls), jnp.float32)
              * math.sqrt(2.0 / num_cls),
        "b4": jnp.zeros((num_cls, 1), jnp.float32),
    }

    x = jax.random.normal(kx, (N, in_ch, H, W), jnp.float32)

    fwd = jax.jit(deep_supervision_block_v2, static_argnums=2)
    out = jax.block_until_ready(fwd(x, params, up_scale))

    ref = reference_forward(x, params, up_scale)
    assert out.shape == (N, num_cls, H * up_scale, W * up_scale), out.shape
    max_err = float(jnp.max(jnp.abs(out - ref)))
    assert jnp.allclose(out, ref, rtol=1e-3, atol=1e-3), max_err

    print("KERNEL_OK")
</pallas_src>

<mosaic_0001>
module attributes {stable_mosaic.version = 11 : i64} {
  func.func private @main(%arg0: i32) attributes {dimension_semantics = [#tpu.dimension_semantics<core_parallel>], iteration_bounds = array<i64: 2>, tpu.core_type = #tpu.core_type<sc_scalar_subcore>, window_params = []} {
    return
  }
}

module attributes {stable_mosaic.version = 11 : i64} {
  func.func private @main(%arg0: i32) attributes {dimension_semantics = [#tpu.dimension_semantics<core_parallel>], iteration_bounds = array<i64: 2>, tpu.core_type = #tpu.core_type<sc_scalar_subcore>, window_params = []} {
    return
  }
}

module attributes {stable_mosaic.version = 11 : i64} {
  func.func @conv1_kernel(%arg0: i32, %arg1: memref<1x18x18x4xf32, #tpu.memory_space<vmem>>, %arg2: memref<36x64xf32, #tpu.memory_space<vmem>>, %arg3: memref<1x256x64xf32, #tpu.memory_space<vmem>>, %arg4: memref<1x2x64xf32, #tpu.memory_space<vmem>>) attributes {dimension_semantics = [#tpu.dimension_semantics<parallel>], iteration_bounds = array<i64: 2>, scalar_prefetch = 0 : i64, scratch_operands = 0 : i64, tpu.core_type = #tpu.core_type<tc>, window_params = [{transform_indices = @transform_0, window_bounds = array<i64: 1, 18, 18, 4>}, {pipeline_mode = #tpu.pipeline_mode<synchronous>, transform_indices = @transform_1, window_bounds = array<i64: 36, 64>}, {transform_indices = @transform_2, window_bounds = array<i64: 1, 256, 64>}, {transform_indices = @transform_3, window_bounds = array<i64: 1, 2, 64>}]} {
    %c0 = arith.constant 0 : index
    %c0_0 = arith.constant 0 : index
    %c0_1 = arith.constant 0 : index
    %c0_2 = arith.constant 0 : index
    %0 = vector.load %arg1[%c0, %c0_0, %c0_1, %c0_2] : memref<1x18x18x4xf32, #tpu.memory_space<vmem>>, vector<1x18x18x4xf32>
    %1 = vector.shape_cast %0 : vector<1x18x18x4xf32> to vector<18x18x4xf32>
    %c0_3 = arith.constant 0 : index
    %c0_4 = arith.constant 0 : index
    %2 = vector.load %arg2[%c0_3, %c0_4] : memref<36x64xf32, #tpu.memory_space<vmem>>, vector<36x64xf32>
    %3 = vector.extract_strided_slice %1 {offsets = [0, 0, 0], sizes = [16, 16, 4], strides = [1, 1, 1]} : vector<18x18x4xf32> to vector<16x16x4xf32>
    %4 = vector.shape_cast %3 : vector<16x16x4xf32> to vector<256x4xf32>
    %5 = vector.extract_strided_slice %1 {offsets = [0, 1, 0], sizes = [16, 16, 4], strides = [1, 1, 1]} : vector<18x18x4xf32> to vector<16x16x4xf32>
    %6 = vector.shape_cast %5 : vector<16x16x4xf32> to vector<256x4xf32>
    %7 = vector.extract_strided_slice %1 {offsets = [0, 2, 0], sizes = [16, 16, 4], strides = [1, 1, 1]} : vector<18x18x4xf32> to vector<16x16x4xf32>
    %8 = vector.shape_cast %7 : vector<16x16x4xf32> to vector<256x4xf32>
    %9 = vector.extract_strided_slice %1 {offsets = [1, 0, 0], sizes = [16, 16, 4], strides = [1, 1, 1]} : vector<18x18x4xf32> to vector<16x16x4xf32>
    %10 = vector.shape_cast %9 : vector<16x16x4xf32> to vector<256x4xf32>
    %11 = vector.extract_strided_slice %1 {offsets = [1, 1, 0], sizes = [16, 16, 4], strides = [1, 1, 1]} : vector<18x18x4xf32> to vector<16x16x4xf32>
    %12 = vector.shape_cast %11 : vector<16x16x4xf32> to vector<256x4xf32>
    %13 = vector.extract_strided_slice %1 {offsets = [1, 2, 0], sizes = [16, 16, 4], strides = [1, 1, 1]} : vector<18x18x4xf32> to vector<16x16x4xf32>
    %14 = vector.shape_cast %13 : vector<16x16x4xf32> to vector<256x4xf32>
    %15 = vector.extract_strided_slice %1 {offsets = [2, 0, 0], sizes = [16, 16, 4], strides = [1, 1, 1]} : vector<18x18x4xf32> to vector<16x16x4xf32>
    %16 = vector.shape_cast %15 : vector<16x16x4xf32> to vector<256x4xf32>
    %17 = vector.extract_strided_slice %1 {offsets = [2, 1, 0], sizes = [16, 16, 4], strides = [1, 1, 1]} : vector<18x18x4xf32> to vector<16x16x4xf32>
    %18 = vector.shape_cast %17 : vector<16x16x4xf32> to vector<256x4xf32>
    %19 = vector.extract_strided_slice %1 {offsets = [2, 2, 0], sizes = [16, 16, 4], strides = [1, 1, 1]} : vector<18x18x4xf32> to vector<16x16x4xf32>
    %20 = vector.shape_cast %19 : vector<16x16x4xf32> to vector<256x4xf32>
    %21 = tpu.concatenate %4, %6, %8, %10, %12, %14, %16, %18, %20 in 1 : vector<256x4xf32>, vector<256x4xf32>, vector<256x4xf32>, vector<256x4xf32>, vector<256x4xf32>, vector<256x4xf32>, vector<256x4xf32>, vector<256x4xf32>, vector<256x4xf32> -> vector<256x36xf32>
    %cst = arith.constant dense<0.000000e+00> : vector<256x64xf32>
    %22 = tpu.matmul %21, %2, %cst {dimension_numbers = #tpu.dot_dimension_numbers<[1], [0], [0], [1], [0, 0, 1, 1], [], []>} : vector<256x36xf32>, vector<36x64xf32>, vector<256x64xf32> -> vector<256x64xf32>
    %c0_5 = arith.constant 0 : index
    %c0_6 = arith.constant 0 : index
    %c0_7 = arith.constant 0 : index
    %23 = vector.load %arg3[%c0_5, %c0_6, %c0_7] : memref<1x256x64xf32, #tpu.memory_space<vmem>>, vector<1x256x64xf32>
    %24 = vector.shape_cast %23 : vector<1x256x64xf32> to vector<256x64xf32>
    %25 = vector.shape_cast %22 : vector<256x64xf32> to vector<1x256x64xf32>
    tpu.vector_store %arg3[%c0_5, %c0_6, %c0_7], %25 {strides = array<i32>} : memref<1x256x64xf32, #tpu.memory_space<vmem>>, vector<1x256x64xf32>,
    %cst_8 = arith.constant dense<0.000000e+00> : vector<64xf32>
    %26 = vector.multi_reduction <add>, %22, %cst_8 [0] : vector<256x64xf32> to vector<64xf32>
    %27 = vector.shape_cast %26 : vector<64xf32> to vector<1x64xf32>
    %28 = arith.mulf %22, %22 : vector<256x64xf32>
    %cst_9 = arith.constant dense<0.000000e+00> : vector<64xf32>
    %29 = vector.multi_reduction <add>, %28, %cst_9 [0] : vector<256x64xf32> to vector<64xf32>
    %30 = vector.shape_cast %29 : vector<64xf32> to vector<1x64xf32>
    %31 = tpu.concatenate %27, %30 in 0 : vector<1x64xf32>, vector<1x64xf32> -> vector<2x64xf32>
    %c0_10 = arith.constant 0 : index
    %c0_11 = arith.constant 0 : index
    %c0_12 = arith.constant 0 : index
    %32 = vector.load %arg4[%c0_10, %c0_11, %c0_12] : memref<1x2x64xf32, #tpu.memory_space<vmem>>, vector<1x2x64xf32>
    %33 = vector.shape_cast %32 : vector<1x2x64xf32> to vector<2x64xf32>
    %34 = vector.shape_cast %31 : vector<2x64xf32> to vector<1x2x64xf32>
    tpu.vector_store %arg4[%c0_10, %c0_11, %c0_12], %34 {strides = array<i32>} : memref<1x2x64xf32, #tpu.memory_space<vmem>>, vector<1x2x64xf32>,
    return
  }
  func.func @transform_0(%arg0: i32) -> (i32, i32, i32, i32) {
    %c0_i32 = arith.constant 0 : i32
    %c0_i32_0 = arith.constant 0 : i32
    %c0_i32_1 = arith.constant 0 : i32
    %c0_i32_2 = arith.constant 0 : i32
    return %arg0, %c0_i32, %c0_i32_0, %c0_i32_1 : i32, i32, i32, i32
  }
  func.func @transform_1(%arg0: i32) -> (i32, i32) {
    %c0_i32 = arith.constant 0 : i32
    %c0_i32_0 = arith.constant 0 : i32
    %c0_i32_1 = arith.constant 0 : i32
    return %c0_i32, %c0_i32_0 : i32, i32
  }
  func.func @transform_2(%arg0: i32) -> (i32, i32, i32) {
    %c0_i32 = arith.constant 0 : i32
    %c0_i32_0 = arith.constant 0 : i32
    %c0_i32_1 = arith.constant 0 : i32
    return %arg0, %c0_i32, %c0_i32_0 : i32, i32, i32
  }
  func.func @transform_3(%arg0: i32) -> (i32, i32, i32) {
    %c0_i32 = arith.constant 0 : i32
    %c0_i32_0 = arith.constant 0 : i32
    %c0_i32_1 = arith.constant 0 : i32
    return %arg0, %c0_i32, %c0_i32_0 : i32, i32, i32
  }
}

module attributes {stable_mosaic.version = 11 : i64} {
  func.func @conv2_bn_fused_kernel(%arg0: i32, %arg1: memref<1x18x18x64xf32, #tpu.memory_space<vmem>>, %arg2: memref<18x18x1xf32, #tpu.memory_space<vmem>>, %arg3: memref<1x64xf32, #tpu.memory_space<vmem>>, %arg4: memref<1x64xf32, #tpu.memory_space<vmem>>, %arg5: memref<576x4xf32, #tpu.memory_space<vmem>>, %arg6: memref<1x256x4xf32, #tpu.memory_space<vmem>>, %arg7: memref<1x2x4xf32, #tpu.memory_space<vmem>>) attributes {dimension_semantics = [#tpu.dimension_semantics<parallel>], iteration_bounds = array<i64: 2>, scalar_prefetch = 0 : i64, scratch_operands = 0 : i64, tpu.core_type = #tpu.core_type<tc>, window_params = [{transform_indices = @transform_0, window_bounds = array<i64: 1, 18, 18, 64>}, {pipeline_mode = #tpu.pipeline_mode<synchronous>, transform_indices = @transform_1, window_bounds = array<i64: 18, 18, 1>}, {pipeline_mode = #tpu.pipeline_mode<synchronous>, transform_indices = @transform_2, window_bounds = array<i64: 1, 64>}, {pipeline_mode = #tpu.pipeline_mode<synchronous>, transform_indices = @transform_3, window_bounds = array<i64: 1, 64>}, {pipeline_mode = #tpu.pipeline_mode<synchronous>, transform_indices = @transform_4, window_bounds = array<i64: 576, 4>}, {transform_indices = @transform_5, window_bounds = array<i64: 1, 256, 4>}, {transform_indices = @transform_6, window_bounds = array<i64: 1, 2, 4>}]} {
    %c0 = arith.constant 0 : index
    %c0_0 = arith.constant 0 : index
    %c0_1 = arith.constant 0 : index
    %c0_2 = arith.constant 0 : index
    %0 = vector.load %arg1[%c0, %c0_0, %c0_1, %c0_2] : memref<1x18x18x64xf32, #tpu.memory_space<vmem>>, vector<1x18x18x64xf32>
    %1 = vector.shape_cast %0 : vector<1x18x18x64xf32> to vector<18x18x64xf32>
    %c0_3 = arith.constant 0 : index
    %c0_4 = arith.constant 0 : index
    %2 = vector.load %arg3[%c0_3, %c0_4] : memref<1x64xf32, #tpu.memory_space<vmem>>, vector<1x64xf32>
    %3 = vector.shape_cast %2 : vector<1x64xf32> to vector<1x1x64xf32>
    %4 = vector.broadcast %3 : vector<1x1x64xf32> to vector<18x18x64xf32>
    %5 = arith.mulf %1, %4 : vector<18x18x64xf32>
    %c0_5 = arith.constant 0 : index
    %c0_6 = arith.constant 0 : index
    %6 = vector.load %arg4[%c0_5, %c0_6] : memref<1x64xf32, #tpu.memory_space<vmem>>, vector<1x64xf32>
    %7 = vector.shape_cast %6 : vector<1x64xf32> to vector<1x1x64xf32>
    %8 = vector.broadcast %7 : vector<1x1x64xf32> to vector<18x18x64xf32>
    %9 = arith.addf %5, %8 : vector<18x18x64xf32>
    %cst = arith.constant 0.000000e+00 : f32
    %10 = vector.broadcast %cst : f32 to vector<18x18x64xf32>
    %11 = arith.maximumf %9, %10 : vector<18x18x64xf32>
    %c0_7 = arith.constant 0 : index
    %c0_8 = arith.constant 0 : index
    %c0_9 = arith.constant 0 : index
    %12 = vector.load %arg2[%c0_7, %c0_8, %c0_9] : memref<18x18x1xf32, #tpu.memory_space<vmem>>, vector<18x18x1xf32>
    %13 = vector.broadcast %12 : vector<18x18x1xf32> to vector<18x18x64xf32>
    %14 = arith.mulf %11, %13 : vector<18x18x64xf32>
    %c0_10 = arith.constant 0 : index
    %c0_11 = arith.constant 0 : index
    %15 = vector.load %arg5[%c0_10, %c0_11] : memref<576x4xf32, #tpu.memory_space<vmem>>, vector<576x4xf32>
    %16 = vector.extract_strided_slice %14 {offsets = [0, 0, 0], sizes = [16, 16, 64], strides = [1, 1, 1]} : vector<18x18x64xf32> to vector<16x16x64xf32>
    %17 = vector.shape_cast %16 : vector<16x16x64xf32> to vector<256x64xf32>
    %18 = vector.extract_strided_slice %14 {offsets = [0, 1, 0], sizes = [16, 16, 64], strides = [1, 1, 1]} : vector<18x18x64xf32> to vector<16x16x64xf32>
    %19 = vector.shape_cast %18 : vector<16x16x64xf32> to vector<256x64xf32>
    %20 = vector.extract_strided_slice %14 {offsets = [0, 2, 0], sizes = [16, 16, 64], strides = [1, 1, 1]} : vector<18x18x64xf32> to vector<16x16x64xf32>
    %21 = vector.shape_cast %20 : vector<16x16x64xf32> to vector<256x64xf32>
    %22 = vector.extract_strided_slice %14 {offsets = [1, 0, 0], sizes = [16, 16, 64], strides = [1, 1, 1]} : vector<18x18x64xf32> to vector<16x16x64xf32>
    %23 = vector.shape_cast %22 : vector<16x16x64xf32> to vector<256x64xf32>
    %24 = vector.extract_strided_slice %14 {offsets = [1, 1, 0], sizes = [16, 16, 64], strides = [1, 1, 1]} : vector<18x18x64xf32> to vector<16x16x64xf32>
    %25 = vector.shape_cast %24 : vector<16x16x64xf32> to vector<256x64xf32>
    %26 = vector.extract_strided_slice %14 {offsets = [1, 2, 0], sizes = [16, 16, 64], strides = [1, 1, 1]} : vector<18x18x64xf32> to vector<16x16x64xf32>
    %27 = vector.shape_cast %26 : vector<16x16x64xf32> to vector<256x64xf32>
    %28 = vector.extract_strided_slice %14 {offsets = [2, 0, 0], sizes = [16, 16, 64], strides = [1, 1, 1]} : vector<18x18x64xf32> to vector<16x16x64xf32>
    %29 = vector.shape_cast %28 : vector<16x16x64xf32> to vector<256x64xf32>
    %30 = vector.extract_strided_slice %14 {offsets = [2, 1, 0], sizes = [16, 16, 64], strides = [1, 1, 1]} : vector<18x18x64xf32> to vector<16x16x64xf32>
    %31 = vector.shape_cast %30 : vector<16x16x64xf32> to vector<256x64xf32>
    %32 = vector.extract_strided_slice %14 {offsets = [2, 2, 0], sizes = [16, 16, 64], strides = [1, 1, 1]} : vector<18x18x64xf32> to vector<16x16x64xf32>
    %33 = vector.shape_cast %32 : vector<16x16x64xf32> to vector<256x64xf32>
    %34 = tpu.concatenate %17, %19, %21, %23, %25, %27, %29, %31, %33 in 1 : vector<256x64xf32>, vector<256x64xf32>, vector<256x64xf32>, vector<256x64xf32>, vector<256x64xf32>, vector<256x64xf32>, vector<256x64xf32>, vector<256x64xf32>, vector<256x64xf32> -> vector<256x576xf32>
    %cst_12 = arith.constant dense<0.000000e+00> : vector<256x4xf32>
    %35 = tpu.matmul %34, %15, %cst_12 {dimension_numbers = #tpu.dot_dimension_numbers<[1], [0], [0], [1], [0, 0, 1, 1], [], []>} : vector<256x576xf32>, vector<576x4xf32>, vector<256x4xf32> -> vector<256x4xf32>
    %c0_13 = arith.constant 0 : index
    %c0_14 = arith.constant 0 : index
    %c0_15 = arith.constant 0 : index
    %36 = vector.load %arg6[%c0_13, %c0_14, %c0_15] : memref<1x256x4xf32, #tpu.memory_space<vmem>>, vector<1x256x4xf32>
    %37 = vector.shape_cast %36 : vector<1x256x4xf32> to vector<256x4xf32>
    %38 = vector.shape_cast %35 : vector<256x4xf32> to vector<1x256x4xf32>
    tpu.vector_store %arg6[%c0_13, %c0_14, %c0_15], %38 {strides = array<i32>} : memref<1x256x4xf32, #tpu.memory_space<vmem>>, vector<1x256x4xf32>,
    %cst_16 = arith.constant dense<0.000000e+00> : vector<4xf32>
    %39 = vector.multi_reduction <add>, %35, %cst_16 [0] : vector<256x4xf32> to vector<4xf32>
    %40 = vector.shape_cast %39 : vector<4xf32> to vector<1x4xf32>
    %41 = arith.mulf %35, %35 : vector<256x4xf32>
    %cst_17 = arith.constant dense<0.000000e+00> : vector<4xf32>
    %42 = vector.multi_reduction <add>, %41, %cst_17 [0] : vector<256x4xf32> to vector<4xf32>
    %43 = vector.shape_cast %42 : vector<4xf32> to vector<1x4xf32>
    %44 = tpu.concatenate %40, %43 in 0 : vector<1x4xf32>, vector<1x4xf32> -> vector<2x4xf32>
    %c0_18 = arith.constant 0 : index
    %c0_19 = arith.constant 0 : index
    %c0_20 = arith.constant 0 : index
    %45 = vector.load %arg7[%c0_18, %c0_19, %c0_20] : memref<1x2x4xf32, #tpu.memory_space<vmem>>, vector<1x2x4xf32>
    %46 = vector.shape_cast %45 : vector<1x2x4xf32> to vector<2x4xf32>
    %47 = vector.shape_cast %44 : vector<2x4xf32> to vector<1x2x4xf32>
    tpu.vector_store %arg7[%c0_18, %c0_19, %c0_20], %47 {strides = array<i32>} : memref<1x2x4xf32, #tpu.memory_space<vmem>>, vector<1x2x4xf32>,
    return
  }
  func.func @transform_0(%arg0: i32) -> (i32, i32, i32, i32) {
    %c0_i32 = arith.constant 0 : i32
    %c0_i32_0 = arith.constant 0 : i32
    %c0_i32_1 = arith.constant 0 : i32
    %c0_i32_2 = arith.constant 0 : i32
    return %arg0, %c0_i32, %c0_i32_0, %c0_i32_1 : i32, i32, i32, i32
  }
  func.func @transform_1(%arg0: i32) -> (i32, i32, i32) {
    %c0_i32 = arith.constant 0 : i32
    %c0_i32_0 = arith.constant 0 : i32
    %c0_i32_1 = arith.constant 0 : i32
    %c0_i32_2 = arith.constant 0 : i32
    return %c0_i32, %c0_i32_0, %c0_i32_1 : i32, i32, i32
  }
  func.func @transform_2(%arg0: i32) -> (i32, i32) {
    %c0_i32 = arith.constant 0 : i32
    %c0_i32_0 = arith.constant 0 : i32
    %c0_i32_1 = arith.constant 0 : i32
    return %c0_i32, %c0_i32_0 : i32, i32
  }
  func.func @transform_3(%arg0: i32) -> (i32, i32) {
    %c0_i32 = arith.constant 0 : i32
    %c0_i32_0 = arith.constant 0 : i32
    %c0_i32_1 = arith.constant 0 : i32
    return %c0_i32, %c0_i32_0 : i32, i32
  }
  func.func @transform_4(%arg0: i32) -> (i32, i32) {
    %c0_i32 = arith.constant 0 : i32
    %c0_i32_0 = arith.constant 0 : i32
    %c0_i32_1 = arith.constant 0 : i32
    return %c0_i32, %c0_i32_0 : i32, i32
  }
  func.func @transform_5(%arg0: i32) -> (i32, i32, i32) {
    %c0_i32 = arith.constant 0 : i32
    %c0_i32_0 = arith.constant 0 : i32
    %c0_i32_1 = arith.constant 0 : i32
    return %arg0, %c0_i32, %c0_i32_0 : i32, i32, i32
  }
  func.func @transform_6(%arg0: i32) -> (i32, i32, i32) {
    %c0_i32 = arith.constant 0 : i32
    %c0_i32_0 = arith.constant 0 : i32
    %c0_i32_1 = arith.constant 0 : i32
    return %arg0, %c0_i32, %c0_i32_0 : i32, i32, i32
  }
}

module attributes {stable_mosaic.version = 11 : i64} {
  func.func @head_kernel(%arg0: i32, %arg1: memref<1x4x256xf32, #tpu.memory_space<vmem>>, %arg2: memref<1x4x256xf32, #tpu.memory_space<vmem>>, %arg3: memref<4x1xf32, #tpu.memory_space<vmem>>, %arg4: memref<4x1xf32, #tpu.memory_space<vmem>>, %arg5: memref<3x4xf32, #tpu.memory_space<vmem>>, %arg6: memref<3x1xf32, #tpu.memory_space<vmem>>, %arg7: memref<256x1024xf32, #tpu.memory_space<vmem>>, %arg8: memref<1x3x1024xf32, #tpu.memory_space<vmem>>) attributes {dimension_semantics = [#tpu.dimension_semantics<parallel>], iteration_bounds = array<i64: 2>, scalar_prefetch = 0 : i64, scratch_operands = 0 : i64, tpu.core_type = #tpu.core_type<tc>, window_params = [{transform_indices = @transform_0, window_bounds = array<i64: 1, 4, 256>}, {transform_indices = @transform_1, window_bounds = array<i64: 1, 4, 256>}, {pipeline_mode = #tpu.pipeline_mode<synchronous>, transform_indices = @transform_2, window_bounds = array<i64: 4, 1>}, {pipeline_mode = #tpu.pipeline_mode<synchronous>, transform_indices = @transform_3, window_bounds = array<i64: 4, 1>}, {pipeline_mode = #tpu.pipeline_mode<synchronous>, transform_indices = @transform_4, window_bounds = array<i64: 3, 4>}, {pipeline_mode = #tpu.pipeline_mode<synchronous>, transform_indices = @transform_5, window_bounds = array<i64: 3, 1>}, {pipeline_mode = #tpu.pipeline_mode<synchronous>, transform_indices = @transform_6, window_bounds = array<i64: 256, 1024>}, {transform_indices = @transform_7, window_bounds = array<i64: 1, 3, 1024>}]} {
    %c0 = arith.constant 0 : index
    %c0_0 = arith.constant 0 : index
    %c0_1 = arith.constant 0 : index
    %0 = vector.load %arg1[%c0, %c0_0, %c0_1] : memref<1x4x256xf32, #tpu.memory_space<vmem>>, vector<1x4x256xf32>
    %1 = vector.shape_cast %0 : vector<1x4x256xf32> to vector<4x256xf32>
    %c0_2 = arith.constant 0 : index
    %c0_3 = arith.constant 0 : index
    %2 = vector.load %arg3[%c0_2, %c0_3] : memref<4x1xf32, #tpu.memory_space<vmem>>, vector<4x1xf32>
    %3 = vector.broadcast %2 : vector<4x1xf32> to vector<4x256xf32>
    %4 = arith.mulf %1, %3 : vector<4x256xf32>
    %c0_4 = arith.constant 0 : index
    %c0_5 = arith.constant 0 : index
    %5 = vector.load %arg4[%c0_4, %c0_5] : memref<4x1xf32, #tpu.memory_space<vmem>>, vector<4x1xf32>
    %6 = vector.broadcast %5 : vector<4x1xf32> to vector<4x256xf32>
    %7 = arith.addf %4, %6 : vector<4x256xf32>
    %c0_6 = arith.constant 0 : index
    %c0_7 = arith.constant 0 : index
    %c0_8 = arith.constant 0 : index
    %8 = vector.load %arg2[%c0_6, %c0_7, %c0_8] : memref<1x4x256xf32, #tpu.memory_space<vmem>>, vector<1x4x256xf32>
    %9 = vector.shape_cast %8 : vector<1x4x256xf32> to vector<4x256xf32>
    %10 = arith.addf %7, %9 : vector<4x256xf32>
    %cst = arith.constant 0.000000e+00 : f32
    %11 = vector.broadcast %cst : f32 to vector<4x256xf32>
    %12 = arith.maximumf %10, %11 : vector<4x256xf32>
    %c0_9 = arith.constant 0 : index
    %c0_10 = arith.constant 0 : index
    %13 = vector.load %arg5[%c0_9, %c0_10] : memref<3x4xf32, #tpu.memory_space<vmem>>, vector<3x4xf32>
    %cst_11 = arith.constant dense<0.000000e+00> : vector<3x256xf32>
    %14 = tpu.matmul %13, %12, %cst_11 {dimension_numbers = #tpu.dot_dimension_numbers<[1], [0], [0], [1], [0, 0, 1, 1], [], []>} : vector<3x4xf32>, vector<4x256xf32>, vector<3x256xf32> -> vector<3x256xf32>
    %c0_12 = arith.constant 0 : index
    %c0_13 = arith.constant 0 : index
    %15 = vector.load %arg6[%c0_12, %c0_13] : memref<3x1xf32, #tpu.memory_space<vmem>>, vector<3x1xf32>
    %16 = vector.broadcast %15 : vector<3x1xf32> to vector<3x256xf32>
    %17 = arith.addf %14, %16 : vector<3x256xf32>
    %c0_14 = arith.constant 0 : index
    %c0_15 = arith.constant 0 : index
    %18 = vector.load %arg7[%c0_14, %c0_15] : memref<256x1024xf32, #tpu.memory_space<vmem>>, vector<256x1024xf32>
    %cst_16 = arith.constant dense<0.000000e+00> : vector<3x1024xf32>
    %19 = tpu.matmul %17, %18, %cst_16 {dimension_numbers = #tpu.dot_dimension_numbers<[1], [0], [0], [1], [0, 0, 1, 1], [], []>} : vector<3x256xf32>, vector<256x1024xf32>, vector<3x1024xf32> -> vector<3x1024xf32>
    %c0_17 = arith.constant 0 : index
    %c0_18 = arith.constant 0 : index
    %c0_19 = arith.constant 0 : index
    %20 = vector.load %arg8[%c0_17, %c0_18, %c0_19] : memref<1x3x1024xf32, #tpu.memory_space<vmem>>, vector<1x3x1024xf32>
    %21 = vector.shape_cast %20 : vector<1x3x1024xf32> to vector<3x1024xf32>
    %22 = vector.shape_cast %19 : vector<3x1024xf32> to vector<1x3x1024xf32>
    tpu.vector_store %arg8[%c0_17, %c0_18, %c0_19], %22 {strides = array<i32>} : memref<1x3x1024xf32, #tpu.memory_space<vmem>>, vector<1x3x1024xf32>,
    return
  }
  func.func @transform_0(%arg0: i32) -> (i32, i32, i32) {
    %c0_i32 = arith.constant 0 : i32
    %c0_i32_0 = arith.constant 0 : i32
    %c0_i32_1 = arith.constant 0 : i32
    return %arg0, %c0_i32, %c0_i32_0 : i32, i32, i32
  }
  func.func @transform_1(%arg0: i32) -> (i32, i32, i32) {
    %c0_i32 = arith.constant 0 : i32
    %c0_i32_0 = arith.constant 0 : i32
    %c0_i32_1 = arith.constant 0 : i32
    return %arg0, %c0_i32, %c0_i32_0 : i32, i32, i32
  }
  func.func @transform_2(%arg0: i32) -> (i32, i32) {
    %c0_i32 = arith.constant 0 : i32
    %c0_i32_0 = arith.constant 0 : i32
    %c0_i32_1 = arith.constant 0 : i32
    return %c0_i32, %c0_i32_0 : i32, i32
  }
  func.func @transform_3(%arg0: i32) -> (i32, i32) {
    %c0_i32 = arith.constant 0 : i32
    %c0_i32_0 = arith.constant 0 : i32
    %c0_i32_1 = arith.constant 0 : i32
    return %c0_i32, %c0_i32_0 : i32, i32
  }
  func.func @transform_4(%arg0: i32) -> (i32, i32) {
    %c0_i32 = arith.constant 0 : i32
    %c0_i32_0 = arith.constant 0 : i32
    %c0_i32_1 = arith.constant 0 : i32
    return %c0_i32, %c0_i32_0 : i32, i32
  }
  func.func @transform_5(%arg0: i32) -> (i32, i32) {
    %c0_i32 = arith.constant 0 : i32
    %c0_i32_0 = arith.constant 0 : i32
    %c0_i32_1 = arith.constant 0 : i32
    return %c0_i32, %c0_i32_0 : i32, i32
  }
  func.func @transform_6(%arg0: i32) -> (i32, i32) {
    %c0_i32 = arith.constant 0 : i32
    %c0_i32_0 = arith.constant 0 : i32
    %c0_i32_1 = arith.constant 0 : i32
    return %c0_i32, %c0_i32_0 : i32, i32
  }
  func.func @transform_7(%arg0: i32) -> (i32, i32, i32) {
    %c0_i32 = arith.constant 0 : i32
    %c0_i32_0 = arith.constant 0 : i32
    %c0_i32_1 = arith.constant 0 : i32
    return %arg0, %c0_i32, %c0_i32_0 : i32, i32, i32
  }
}

</mosaic_0001>

<llo_original>
// kernel: deep_supervision_block_v2.3
$region0: #{deep_supervision_block_v2.3}
  #allocation0 [shape = 'u32[]', space=smem, size = 0x4, offset = 0x4, fixed_abs, tag = 'smem constant byte address 0x4 - core index']
  #allocation1 [shape = 'u32[144,128]{1,0:T(1,128)}', space=vmem, size = 0x12000, scoped, tag = 'internal scratch']
  %s0 = inlined_call_operand.vmem [shape: f32[2,18,18,4], index: 0, kind: input, shape index: {}]
  %s1 = inlined_call_operand.vmem [shape: f32[36,64], index: 1, kind: input, shape index: {}]
  %s2 = inlined_call_operand.vmem [shape: f32[2,256,64], index: 2, kind: output, shape index: {0}]
  %s3 = inlined_call_operand.vmem [shape: f32[2,2,64], index: 3, kind: output, shape index: {1}]
  %4 = xla_tuple %s2, %s3
  %s5 = sld [smem:[#allocation0]]
  $region49: #{deep_supervision_block_v2.3} parent=0
    _
  %s7 = ssub.s32 1, %s5
  %s8 = scalar_select 0, %s7, %s5
  loop: start=0, step=1, limit=4
  $region2: #{deep_supervision_block_v2.3} parent=0 // loop_pre_header
    _
  $region3: #{deep_supervision_block_v2.3} parent=0 // loop_header
    %s10 = sphi 0, %s14
    %p11 = scmp.ge.s32.totalorder %s10, 4
    %s20 = sphi 0, %s22
    %s23 = sphi 0, %s20
    %s24 = sphi 0, %s23
    %s40 = sphi 0, %s24
    %s44 = sphi 0, %s44
    %s46 = sphi 0, %s44
    %s47 = sphi 0, %s46
    %s61 = sphi 0, %s47
    %s67 = sphi 0, %s69
    %s70 = sphi 0, %s67
    %s71 = sphi 0, %s70
    %s87 = sphi 0, %s71
    %s93 = sphi 0, %s95
    %s96 = sphi 0, %s93
    %s97 = sphi 0, %s96
    %s113 = sphi 0, %s97
  $region4: #{deep_supervision_block_v2.3} parent=0 // loop_header_branch
    %13 = sbr.rel (%p11) target = $region8
  $region5: #{deep_supervision_block_v2.3} parent=0 // loop_body
    %s15 = ssub.s32 %s10, 1
    %s16 = ssub.s32 %s10, 2
    %s17 = sadd.s32 %s10, 1
    %s18 = ssub.s32 %s10, %s17
    %p19 = scmp.eq.s32.totalorder %s18, 0
    %s21 = sadd.s32 %s20, 1
    %s22 = scalar_select %p19, %s20, %s21
    %p25 = pneg %p19
    %p26 = scmp.eq.s32.totalorder %s10, 1
    %p27 = por %p25, %p26
    %p28 = scmp.ne.s32.totalorder %s20, %s23
    %p29 = scmp.eq.s32.totalorder %s10, 0
    %p30 = por %p28, %p29
    %p31 = scmp.ne.s32.totalorder %s20, %s23
    %p32 = scmp.eq.s32.totalorder %s15, 1
    %p33 = por %p31, %p32
    %p34 = scmp.ne.s32.totalorder %s23, %s24
    %p35 = scmp.eq.s32.totalorder %s15, 0
    %p36 = por %p34, %p35
    %p37 = scmp.ne.s32.totalorder %s23, %s24
    %p38 = scmp.eq.s32.totalorder %s16, 1
    %p39 = por %p37, %p38
    %p41 = scmp.ne.s32.totalorder %s24, %s40
    %p42 = scmp.eq.s32.totalorder %s16, 0
    %p43 = por %p41, %p42
    %s45 = sadd.s32 %s44, 1
    %p48 = scmp.eq.s32.totalorder %s10, 1
    %p49 = scmp.ne.s32.totalorder %s44, %s46
    %p50 = scmp.eq.s32.totalorder %s10, 0
    %p51 = por %p49, %p50
    %p52 = scmp.ne.s32.totalorder %s44, %s46
    %p53 = scmp.eq.s32.totalorder %s15, 1
    %p54 = por %p52, %p53
    %p55 = scmp.ne.s32.totalorder %s46, %s47
    %p56 = scmp.eq.s32.totalorder %s15, 0
    %p57 = por %p55, %p56
    %p58 = scmp.ne.s32.totalorder %s46, %s47
    %p59 = scmp.eq.s32.totalorder %s16, 1
    %p60 = por %p58, %p59
    %p62 = scmp.ne.s32.totalorder %s47, %s61
    %p63 = scmp.eq.s32.totalorder %s16, 0
    %p64 = por %p62, %p63
    %s65 = ssub.s32 %s10, %s17
    %p66 = scmp.eq.s32.totalorder %s65, 0
    %s68 = sadd.s32 %s67, 1
    %s69 = scalar_select %p66, %s67, %s68
    %p72 = pneg %p66
    %p73 = scmp.eq.s32.totalorder %s10, 1
    %p74 = por %p72, %p73
    %p75 = scmp.ne.s32.totalorder %s67, %s70
    %p76 = scmp.eq.s32.totalorder %s10, 0
    %p77 = por %p75, %p76
    %p78 = scmp.ne.s32.totalorder %s67, %s70
    %p79 = scmp.eq.s32.totalorder %s15, 1
    %p80 = por %p78, %p79
    %p81 = scmp.ne.s32.totalorder %s70, %s71
    %p82 = scmp.eq.s32.totalorder %s15, 0
    %p83 = por %p81, %p82
    %p84 = scmp.ne.s32.totalorder %s70, %s71
    %p85 = scmp.eq.s32.totalorder %s16, 1
    %p86 = por %p84, %p85
    %p88 = scmp.ne.s32.totalorder %s71, %s87
    %p89 = scmp.eq.s32.totalorder %s16, 0
    %p90 = por %p88, %p89
    %s91 = ssub.s32 %s10, %s17
    %p92 = scmp.eq.s32.totalorder %s91, 0
    %s94 = sadd.s32 %s93, 1
    %s95 = scalar_select %p92, %s93, %s94
    %p98 = pneg %p92
    %p99 = scmp.eq.s32.totalorder %s10, 1
    %p100 = por %p98, %p99
    %p101 = scmp.ne.s32.totalorder %s93, %s96
    %p102 = scmp.eq.s32.totalorder %s10, 0
    %p103 = por %p101, %p102
    %p104 = scmp.ne.s32.totalorder %s93, %s96
    %p105 = scmp.eq.s32.totalorder %s15, 1
    %p106 = por %p104, %p105
    %p107 = scmp.ne.s32.totalorder %s96, %s97
    %p108 = scmp.eq.s32.totalorder %s15, 0
    %p109 = por %p107, %p108
    %p110 = scmp.ne.s32.totalorder %s96, %s97
    %p111 = scmp.eq.s32.totalorder %s16, 1
    %p112 = por %p110, %p111
    %p114 = scmp.ne.s32.totalorder %s97, %s113
    %p115 = scmp.eq.s32.totalorder %s16, 0
    %p116 = por %p114, %p115
    %p117 = scmp.le.s32.totalorder 1, %s10
    %p118 = scmp.lt.s32.totalorder %s10, 3
    %p119 = pnand %p117, %p118
    %p120 = pneg %p119
    // Predicated region
    $region9: #{deep_supervision_block_v2.3} parent=5 // pred_check
      _
    $region10: #{deep_supervision_block_v2.3} parent=5 // pred_check_branch
      %122 = sbr.rel (%p119) target = $region12
    $region11: #{deep_supervision_block_v2.3} parent=5 // pred_region
      %s123 = ssub.s32 %s10, 1
      // Predicated region
      $region13: #{deep_supervision_block_v2.3} parent=11 // pred_check
        %p124 = pneg %p57
      $region14: #{deep_supervision_block_v2.3} parent=11 // pred_check_branch
        %126 = sbr.rel (%p124) target = $region16
      $region15: #{deep_supervision_block_v2.3} parent=11 // pred_region
        _
      $region16: #{deep_supervision_block_v2.3} parent=11 // pred_fallthru
        _
    $region12: #{deep_supervision_block_v2.3} parent=5 // pred_fallthru
      _
    %p127 = scmp.lt.s32.totalorder %s10, 2
    // Predicated region
    $region17: #{deep_supervision_block_v2.3} parent=5 // pred_check
      %p128 = pneg %p127
    $region18: #{deep_supervision_block_v2.3} parent=5 // pred_check_branch
      %130 = sbr.rel (%p128) target = $region20
    $region19: #{deep_supervision_block_v2.3} parent=5 // pred_region
      // Predicated region
      $region21: #{deep_supervision_block_v2.3} parent=19 // pred_check
        %p131 = pneg %p30
      $region22: #{deep_supervision_block_v2.3} parent=19 // pred_check_branch
        %133 = sbr.rel (%p131) target = $region24
      $region23: #{deep_supervision_block_v2.3} parent=19 // pred_region
        %p134 = scmp.lt.s32.totalorder %s10, 1
        %s135 = scalar_select %p134, %s10, 1
        %s136 = smul.addr %s135, 54
        %s137 = smul.addr %s136, 8
        %s138 = scalar_lea.vmem %s0, %s137
      $region24: #{deep_supervision_block_v2.3} parent=19 // pred_fallthru
        _
    $region20: #{deep_supervision_block_v2.3} parent=5 // pred_fallthru
      _
    %p139 = scmp.le.s32.totalorder 1, %s10
    %p140 = scmp.lt.s32.totalorder %s10, 3
    %p141 = pnand %p139, %p140
    %p142 = pneg %p141
    // Predicated region
    $region25: #{deep_supervision_block_v2.3} parent=5 // pred_check
      _
    $region26: #{deep_supervision_block_v2.3} parent=5 // pred_check_branch
      %144 = sbr.rel (%p141) target = $region28
    $region27: #{deep_supervision_block_v2.3} parent=5 // pred_region
      %s145 = ssub.s32 %s10, 1
      %p146 = scmp.lt.s32.totalorder %s15, 1
      %s147 = scalar_select %p146, %s15, 1
      %s148 = smul.addr %s147, 54
      %s149 = smul.addr %s148, 8
      %s150 = scalar_lea.vmem %s0, %s149
      %p151 = pneg %p36
      %p152 = pneg %p33
      %p153 = pneg %p57
      %p154 = pneg %p54
      %p155 = pneg %p83
      %p156 = pneg %p80
      %p157 = scmp.lt.s32.totalorder %s15, 1
      %s158 = scalar_select %p157, %s15, 1
      %s159 = smul.addr %s158, 32
      %s160 = smul.addr %s159, 8
      %s161 = scalar_lea.vmem %s2, %s160
      %p162 = pneg %p109
      %p163 = pneg %p106
      %p164 = scmp.lt.s32.totalorder %s15, 1
      %s165 = scalar_select %p164, %s15, 1
      %s166 = smul.addr %s165, 2
      %s167 = scalar_lea.vmem %s3, %s166
      %p168 = scmp.lt.s32.totalorder %s15, 1
      %s169 = scalar_select %p168, %s15, 1
      %s170 = smul.addr %s169, 54
      %s171 = smul.addr %s170, 8
      %s172 = scalar_lea.vmem %s0, %s171
      %p173 = scmp.lt.s32.totalorder %s15, 1
      %s174 = scalar_select %p173, %s15, 1
      %s175 = smul.addr %s174, 32
      %s176 = smul.addr %s175, 8
      %s177 = scalar_lea.vmem %s2, %s176
      %p178 = scmp.lt.s32.totalorder %s15, 1
      %s179 = scalar_select %p178, %s15, 1
      %s180 = smul.addr %s179, 2
      %s181 = scalar_lea.vmem %s3, %s180
      %v182 = vld [vmem:[%s172] sm:$0xff]
      %v183 = vld [vmem:[%s172 + $0x8] sm:$0xff]
      %v184 = vld [vmem:[%s172 + $0x10] sm:$0x3]
      %v185 = vld [vmem:[%s172 + $0x18] sm:$0xff]
      %v186 = vld [vmem:[%s172 + $0x20] sm:$0xff]
      %v187 = vld [vmem:[%s172 + $0x28] sm:$0x3]
      %v188 = vld [vmem:[%s172 + $0x30] sm:$0xff]
      %v189 = vld [vmem:[%s172 + $0x38] sm:$0xff]
      %v190 = vld [vmem:[%s172 + $0x40] sm:$0x3]
      %v191 = vld [vmem:[%s172 + $0x48] sm:$0xff]
      %v192 = vld [vmem:[%s172 + $0x50] sm:$0xff]
      %v193 = vld [vmem:[%s172 + $0x58] sm:$0x3]
      %v194 = vld [vmem:[%s172 + $0x60] sm:$0xff]
      %v195 = vld [vmem:[%s172 + $0x68] sm:$0xff]
      %v196 = vld [vmem:[%s172 + $0x70] sm:$0x3]
      %v197 = vld [vmem:[%s172 + $0x78] sm:$0xff]
      %v198 = vld [vmem:[%s172 + $0x80] sm:$0xff]
      %v199 = vld [vmem:[%s172 + $0x88] sm:$0x3]
      %v200 = vld [vmem:[%s172 + $0x90] sm:$0xff]
      %v201 = vld [vmem:[%s172 + $0x98] sm:$0xff]
      %v202 = vld [vmem:[%s172 + $0xa0] sm:$0x3]
      %v203 = vld [vmem:[%s172 + $0xa8] sm:$0xff]
      %v204 = vld [vmem:[%s172 + $0xb0] sm:$0xff]
      %v205 = vld [vmem:[%s172 + $0xb8] sm:$0x3]
      %v206 = vld [vmem:[%s172 + $0xc0] sm:$0xff]
      %v207 = vld [vmem:[%s172 + $0xc8] sm:$0xff]
      %v208 = vld [vmem:[%s172 + $0xd0] sm:$0x3]
      %v209 = vld [vmem:[%s172 + $0xd8] sm:$0xff]
      %v210 = vld [vmem:[%s172 + $0xe0] sm:$0xff]
      %v211 = vld [vmem:[%s172 + $0xe8] sm:$0x3]
      %v212 = vld [vmem:[%s172 + $0xf0] sm:$0xff]
      %v213 = vld [vmem:[%s172 + $0xf8] sm:$0xff]
      %v214 = vld [vmem:[%s172 + $0x100] sm:$0x3]
      %v215 = vld [vmem:[%s172 + $0x108] sm:$0xff]
      %v216 = vld [vmem:[%s172 + $0x110] sm:$0xff]
      %v217 = vld [vmem:[%s172 + $0x118] sm:$0x3]
      %v218 = vld [vmem:[%s172 + $0x120] sm:$0xff]
      %v219 = vld [vmem:[%s172 + $0x128] sm:$0xff]
      %v220 = vld [vmem:[%s172 + $0x130] sm:$0x3]
      %v221 = vld [vmem:[%s172 + $0x138] sm:$0xff]
      %v222 = vld [vmem:[%s172 + $0x140] sm:$0xff]
      %v223 = vld [vmem:[%s172 + $0x148] sm:$0x3]
      %v224 = vld [vmem:[%s172 + $0x150] sm:$0xff]
      %v225 = vld [vmem:[%s172 + $0x158] sm:$0xff]
      %v226 = vld [vmem:[%s172 + $0x160] sm:$0x3]
      %v227 = vld [vmem:[%s172 + $0x168] sm:$0xff]
      %v228 = vld [vmem:[%s172 + $0x170] sm:$0xff]
      %v229 = vld [vmem:[%s172 + $0x178] sm:$0x3]
      %v230 = vld [vmem:[%s172 + $0x180] sm:$0xff]
      %v231 = vld [vmem:[%s172 + $0x188] sm:$0xff]
      %v232 = vld [vmem:[%s172 + $0x190] sm:$0x3]
      %v233 = vld [vmem:[%s172 + $0x198] sm:$0xff]
      %v234 = vld [vmem:[%s172 + $0x1a0] sm:$0xff]
      %v235 = vld [vmem:[%s172 + $0x1a8] sm:$0x3]
      %v236 = vld [vmem:[%s1] sm:$0xff]
      %v237 = vld [vmem:[%s1 + $0x8] sm:$0xff]
      %v238 = vld [vmem:[%s1 + $0x10] sm:$0xff]
      %v239 = vld [vmem:[%s1 + $0x18] sm:$0xff]
      %v240 = vld [vmem:[%s1 + $0x20] sm:$0xf]
      %vm289 = vcmask 1046528
      %v290 = vrot.slane %v182, 1
      %v291 = vrot.slane %v183, 1
      %v292 = vsel %vm289, %v290, %v291
      %v293 = vrot.slane %v184, 1
      %v294 = vsel %vm289, %v291, %v293
      %v295 = vrot.slane %v185, 1
      %v296 = vrot.slane %v186, 1
      %v297 = vsel %vm289, %v295, %v296
      %v298 = vrot.slane %v187, 1
      %v299 = vsel %vm289, %v296, %v298
      %v300 = vrot.slane %v188, 1
      %v301 = vrot.slane %v189, 1
      %v302 = vsel %vm289, %v300, %v301
      %v303 = vrot.slane %v190, 1
      %v304 = vsel %vm289, %v301, %v303
      %v305 = vrot.slane %v191, 1
      %v306 = vrot.slane %v192, 1
      %v307 = vsel %vm289, %v305, %v306
      %v308 = vrot.slane %v193, 1
      %v309 = vsel %vm289, %v306, %v308
      %v310 = vrot.slane %v194, 1
      %v311 = vrot.slane %v195, 1
      %v312 = vsel %vm289, %v310, %v311
      %v313 = vrot.slane %v196, 1
      %v314 = vsel %vm289, %v311, %v313
      %v315 = vrot.slane %v197, 1
      %v316 = vrot.slane %v198, 1
      %v317 = vsel %vm289, %v315, %v316
      %v318 = vrot.slane %v199, 1
      %v319 = vsel %vm289, %v316, %v318
      %v320 = vrot.slane %v200, 1
      %v321 = vrot.slane %v201, 1
      %v322 = vsel %vm289, %v320, %v321
      %v323 = vrot.slane %v202, 1
      %v324 = vsel %vm289, %v321, %v323
      %v325 = vrot.slane %v203, 1
      %v326 = vrot.slane %v204, 1
      %v327 = vsel %vm289, %v325, %v326
      %v328 = vrot.slane %v205, 1
      %v329 = vsel %vm289, %v326, %v328
      %v330 = vrot.slane %v206, 1
      %v331 = vrot.slane %v207, 1
      %v332 = vsel %vm289, %v330, %v331
      %v333 = vrot.slane %v208, 1
      %v334 = vsel %vm289, %v331, %v333
      %v335 = vrot.slane %v209, 1
      %v336 = vrot.slane %v210, 1
      %v337 = vsel %vm289, %v335, %v336
      %v338 = vrot.slane %v211, 1
      %v339 = vsel %vm289, %v336, %v338
      %v340 = vrot.slane %v212, 1
      %v341 = vrot.slane %v213, 1
      %v342 = vsel %vm289, %v340, %v341
      %v343 = vrot.slane %v214, 1
      %v344 = vsel %vm289, %v341, %v343
      %v345 = vrot.slane %v215, 1
      %v346 = vrot.slane %v216, 1
      %v347 = vsel %vm289, %v345, %v346
      %v348 = vrot.slane %v217, 1
      %v349 = vsel %vm289, %v346, %v348
      %v350 = vrot.slane %v218, 1
      %v351 = vrot.slane %v219, 1
      %v352 = vsel %vm289, %v350, %v351
      %v353 = vrot.slane %v220, 1
      %v354 = vsel %vm289, %v351, %v353
      %v355 = vrot.slane %v221, 1
      %v356 = vrot.slane %v222, 1
      %v357 = vsel %vm289, %v355, %v356
      %v358 = vrot.slane %v223, 1
      %v359 = vsel %vm289, %v356, %v358
      %v360 = vrot.slane %v224, 1
      %v361 = vrot.slane %v225, 1
      %v362 = vsel %vm289, %v360, %v361
      %v363 = vrot.slane %v226, 1
      %v364 = vsel %vm289, %v361, %v363
      %v365 = vrot.slane %v227, 1
      %v366 = vrot.slane %v228, 1
      %v367 = vsel %vm289, %v365, %v366
      %v368 = vrot.slane %v229, 1
      %v369 = vsel %vm289, %v366, %v368
      %vm370 = vcmask 1045504
      %v371 = vrot.slane %v182, 2
      %v372 = vrot.slane %v183, 2
      %v373 = vsel %vm370, %v371, %v372
      %v374 = vrot.slane %v184, 2
      %v375 = vsel %vm370, %v372, %v374
      %v376 = vrot.slane %v185, 2
      %v377 = vrot.slane %v186, 2
      %v378 = vsel %vm370, %v376, %v377
      %v379 = vrot.slane %v187, 2
      %v380 = vsel %vm370, %v377, %v379
      %v381 = vrot.slane %v188, 2
      %v382 = vrot.slane %v189, 2
      %v383 = vsel %vm370, %v381, %v382
      %v384 = vrot.slane %v190, 2
      %v385 = vsel %vm370, %v382, %v384
      %v386 = vrot.slane %v191, 2
      %v387 = vrot.slane %v192, 2
      %v388 = vsel %vm370, %v386, %v387
      %v389 = vrot.slane %v193, 2
      %v390 = vsel %vm370, %v387, %v389
      %v391 = vrot.slane %v194, 2
      %v392 = vrot.slane %v195, 2
      %v393 = vsel %vm370, %v391, %v392
      %v394 = vrot.slane %v196, 2
      %v395 = vsel %vm370, %v392, %v394
      %v396 = vrot.slane %v197, 2
      %v397 = vrot.slane %v198, 2
      %v398 = vsel %vm370, %v396, %v397
      %v399 = vrot.slane %v199, 2
      %v400 = vsel %vm370, %v397, %v399
      %v401 = vrot.slane %v200, 2
      %v402 = vrot.slane %v201, 2
      %v403 = vsel %vm370, %v401, %v402
      %v404 = vrot.slane %v202, 2
      %v405 = vsel %vm370, %v402, %v404
      %v406 = vrot.slane %v203, 2
      %v407 = vrot.slane %v204, 2
      %v408 = vsel %vm370, %v406, %v407
      %v409 = vrot.slane %v205, 2
      %v410 = vsel %vm370, %v407, %v409
      %v411 = vrot.slane %v206, 2
      %v412 = vrot.slane %v207, 2
      %v413 = vsel %vm370, %v411, %v412
      %v414 = vrot.slane %v208, 2
      %v415 = vsel %vm370, %v412, %v414
      %v416 = vrot.slane %v209, 2
      %v417 = vrot.slane %v210, 2
      %v418 = vsel %vm370, %v416, %v417
      %v419 = vrot.slane %v211, 2
      %v420 = vsel %vm370, %v417, %v419
      %v421 = vrot.slane %v212, 2
      %v422 = vrot.slane %v213, 2
      %v423 = vsel %vm370, %v421, %v422
      %v424 = vrot.slane %v214, 2
      %v425 = vsel %vm370, %v422, %v424
      %v426 = vrot.slane %v215, 2
      %v427 = vrot.slane %v216, 2
      %v428 = vsel %vm370, %v426, %v427
      %v429 = vrot.slane %v217, 2
      %v430 = vsel %vm370, %v427, %v429
      %v431 = vrot.slane %v218, 2
      %v432 = vrot.slane %v219, 2
      %v433 = vsel %vm370, %v431, %v432
      %v434 = vrot.slane %v220, 2
      %v435 = vsel %vm370, %v432, %v434
      %v436 = vrot.slane %v221, 2
      %v437 = vrot.slane %v222, 2
      %v438 = vsel %vm370, %v436, %v437
      %v439 = vrot.slane %v223, 2
      %v440 = vsel %vm370, %v437, %v439
      %v441 = vrot.slane %v224, 2
      %v442 = vrot.slane %v225, 2
      %v443 = vsel %vm370, %v441, %v442
      %v444 = vrot.slane %v226, 2
      %v445 = vsel %vm370, %v442, %v444
      %v446 = vrot.slane %v227, 2
      %v447 = vrot.slane %v228, 2
      %v448 = vsel %vm370, %v446, %v447
      %v449 = vrot.slane %v229, 2
      %v450 = vsel %vm370, %v447, %v449
      %v454 = vrot.slane %v230, 1
      %v455 = vrot.slane %v231, 1
      %v456 = vsel %vm289, %v454, %v455
      %v457 = vrot.slane %v232, 1
      %v458 = vsel %vm289, %v455, %v457
      %v459 = vrot.slane %v230, 2
      %v460 = vrot.slane %v231, 2
      %v461 = vsel %vm370, %v459, %v460
      %v462 = vrot.slane %v232, 2
      %v463 = vsel %vm370, %v460, %v462
      %v467 = vrot.slane %v233, 1
      %v468 = vrot.slane %v234, 1
      %v469 = vsel %vm289, %v467, %v468
      %v470 = vrot.slane %v235, 1
      %v471 = vsel %vm289, %v468, %v470
      %v472 = vrot.slane %v233, 2
      %v473 = vrot.slane %v234, 2
      %v474 = vsel %vm370, %v472, %v473
      %v475 = vrot.slane %v235, 2
      %v476 = vsel %vm370, %v473, %v475
      %477 = vrot.lane.b32.xlu0 %v292, 4
      %v478 = vpop.permute.xlu0 %477
      %479 = vrot.lane.b32.xlu0 %v294, 4
      %v480 = vpop.permute.xlu0 %479
      %481 = vrot.lane.b32.xlu0 %v297, 4
      %v482 = vpop.permute.xlu0 %481
      %483 = vrot.lane.b32.xlu0 %v299, 4
      %v484 = vpop.permute.xlu0 %483
      %485 = vrot.lane.b32.xlu0 %v302, 4
      %v486 = vpop.permute.xlu0 %485
      %487 = vrot.lane.b32.xlu0 %v304, 4
      %v488 = vpop.permute.xlu0 %487
      %489 = vrot.lane.b32.xlu0 %v307, 4
      %v490 = vpop.permute.xlu0 %489
      %491 = vrot.lane.b32.xlu0 %v309, 4
      %v492 = vpop.permute.xlu0 %491
      %493 = vrot.lane.b32.xlu0 %v312, 4
      %v494 = vpop.permute.xlu0 %493
      %495 = vrot.lane.b32.xlu0 %v314, 4
      %v496 = vpop.permute.xlu0 %495
      %497 = vrot.lane.b32.xlu0 %v317, 4
      %v498 = vpop.permute.xlu0 %497
      %499 = vrot.lane.b32.xlu0 %v319, 4
      %v500 = vpop.permute.xlu0 %499
      %501 = vrot.lane.b32.xlu0 %v322, 4
      %v502 = vpop.permute.xlu0 %501
      %503 = vrot.lane.b32.xlu0 %v324, 4
      %v504 = vpop.permute.xlu0 %503
      %505 = vrot.lane.b32.xlu0 %v327, 4
      %v506 = vpop.permute.xlu0 %505
      %507 = vrot.lane.b32.xlu0 %v329, 4
      %v508 = vpop.permute.xlu0 %507
      %509 = vrot.lane.b32.xlu0 %v332, 4
      %v510 = vpop.permute.xlu0 %509
      %511 = vrot.lane.b32.xlu0 %v334, 4
      %v512 = vpop.permute.xlu0 %511
      %513 = vrot.lane.b32.xlu0 %v337, 4
      %v514 = vpop.permute.xlu0 %513
      %515 = vrot.lane.b32.xlu0 %v339, 4
      %v516 = vpop.permute.xlu0 %515
      %517 = vrot.lane.b32.xlu0 %v342, 4
      %v518 = vpop.permute.xlu0 %517
      %519 = vrot.lane.b32.xlu0 %v344, 4
      %v520 = vpop.permute.xlu0 %519
      %521 = vrot.lane.b32.xlu0 %v347, 4
      %v522 = vpop.permute.xlu0 %521
      %523 = vrot.lane.b32.xlu0 %v349, 4
      %v524 = vpop.permute.xlu0 %523
      %525 = vrot.lane.b32.xlu0 %v352, 4
      %v526 = vpop.permute.xlu0 %525
      %527 = vrot.lane.b32.xlu0 %v354, 4
      %v528 = vpop.permute.xlu0 %527
      %529 = vrot.lane.b32.xlu0 %v357, 4
      %v530 = vpop.permute.xlu0 %529
      %531 = vrot.lane.b32.xlu0 %v359, 4
      %v532 = vpop.permute.xlu0 %531
      %533 = vrot.lane.b32.xlu0 %v362, 4
      %v534 = vpop.permute.xlu0 %533
      %535 = vrot.lane.b32.xlu0 %v364, 4
      %v536 = vpop.permute.xlu0 %535
      %537 = vrot.lane.b32.xlu0 %v367, 4
      %v538 = vpop.permute.xlu0 %537
      %539 = vrot.lane.b32.xlu0 %v369, 4
      %v540 = vpop.permute.xlu0 %539
      %573 = vrot.lane.b32.xlu0 %v373, 8
      %v574 = vpop.permute.xlu0 %573
      %575 = vrot.lane.b32.xlu0 %v375, 8
      %v576 = vpop.permute.xlu0 %575
      %577 = vrot.lane.b32.xlu0 %v378, 8
      %v578 = vpop.permute.xlu0 %577
      %579 = vrot.lane.b32.xlu0 %v380, 8
      %v580 = vpop.permute.xlu0 %579
      %581 = vrot.lane.b32.xlu0 %v383, 8
      %v582 = vpop.permute.xlu0 %581
      %583 = vrot.lane.b32.xlu0 %v385, 8
      %v584 = vpop.permute.xlu0 %583
      %585 = vrot.lane.b32.xlu0 %v388, 8
      %v586 = vpop.permute.xlu0 %585
      %587 = vrot.lane.b32.xlu0 %v390, 8
      %v588 = vpop.permute.xlu0 %587
      %589 = vrot.lane.b32.xlu0 %v393, 8
      %v590 = vpop.permute.xlu0 %589
      %591 = vrot.lane.b32.xlu0 %v395, 8
      %v592 = vpop.permute.xlu0 %591
      %593 = vrot.lane.b32.xlu0 %v398, 8
      %v594 = vpop.permute.xlu0 %593
      %595 = vrot.lane.b32.xlu0 %v400, 8
      %v596 = vpop.permute.xlu0 %595
      %597 = vrot.lane.b32.xlu0 %v403, 8
      %v598 = vpop.permute.xlu0 %597
      %599 = vrot.lane.b32.xlu0 %v405, 8
      %v600 = vpop.permute.xlu0 %599
      %601 = vrot.lane.b32.xlu0 %v408, 8
      %v602 = vpop.permute.xlu0 %601
      %603 = vrot.lane.b32.xlu0 %v410, 8
      %v604 = vpop.permute.xlu0 %603
      %605 = vrot.lane.b32.xlu0 %v413, 8
      %v606 = vpop.permute.xlu0 %605
      %607 = vrot.lane.b32.xlu0 %v415, 8
      %v608 = vpop.permute.xlu0 %607
      %609 = vrot.lane.b32.xlu0 %v418, 8
      %v610 = vpop.permute.xlu0 %609
      %611 = vrot.lane.b32.xlu0 %v420, 8
      %v612 = vpop.permute.xlu0 %611
      %613 = vrot.lane.b32.xlu0 %v423, 8
      %v614 = vpop.permute.xlu0 %613
      %615 = vrot.lane.b32.xlu0 %v425, 8
      %v616 = vpop.permute.xlu0 %615
      %617 = vrot.lane.b32.xlu0 %v428, 8
      %v618 = vpop.permute.xlu0 %617
      %619 = vrot.lane.b32.xlu0 %v430, 8
      %v620 = vpop.permute.xlu0 %619
      %621 = vrot.lane.b32.xlu0 %v433, 8
      %v622 = vpop.permute.xlu0 %621
      %623 = vrot.lane.b32.xlu0 %v435, 8
      %v624 = vpop.permute.xlu0 %623
      %625 = vrot.lane.b32.xlu0 %v438, 8
      %v626 = vpop.permute.xlu0 %625
      %627 = vrot.lane.b32.xlu0 %v440, 8
      %v628 = vpop.permute.xlu0 %627
      %629 = vrot.lane.b32.xlu0 %v443, 8
      %v630 = vpop.permute.xlu0 %629
      %631 = vrot.lane.b32.xlu0 %v445, 8
      %v632 = vpop.permute.xlu0 %631
      %633 = vrot.lane.b32.xlu0 %v448, 8
      %v634 = vpop.permute.xlu0 %633
      %635 = vrot.lane.b32.xlu0 %v450, 8
      %v636 = vpop.permute.xlu0 %635
      %669 = vrot.lane.b32.xlu0 %v185, 12
      %v670 = vpop.permute.xlu0 %669
      %671 = vrot.lane.b32.xlu0 %v186, 12
      %v672 = vpop.permute.xlu0 %671
      %673 = vrot.lane.b32.xlu0 %v188, 12
      %v674 = vpop.permute.xlu0 %673
      %675 = vrot.lane.b32.xlu0 %v189, 12
      %v676 = vpop.permute.xlu0 %675
      %677 = vrot.lane.b32.xlu0 %v191, 12
      %v678 = vpop.permute.xlu0 %677
      %679 = vrot.lane.b32.xlu0 %v192, 12
      %v680 = vpop.permute.xlu0 %679
      %681 = vrot.lane.b32.xlu0 %v194, 12
      %v682 = vpop.permute.xlu0 %681
      %683 = vrot.lane.b32.xlu0 %v195, 12
      %v684 = vpop.permute.xlu0 %683
      %685 = vrot.lane.b32.xlu0 %v197, 12
      %v686 = vpop.permute.xlu0 %685
      %687 = vrot.lane.b32.xlu0 %v198, 12
      %v688 = vpop.permute.xlu0 %687
      %689 = vrot.lane.b32.xlu0 %v200, 12
      %v690 = vpop.permute.xlu0 %689
      %691 = vrot.lane.b32.xlu0 %v201, 12
      %v692 = vpop.permute.xlu0 %691
      %693 = vrot.lane.b32.xlu0 %v203, 12
      %v694 = vpop.permute.xlu0 %693
      %695 = vrot.lane.b32.xlu0 %v204, 12
      %v696 = vpop.permute.xlu0 %695
      %697 = vrot.lane.b32.xlu0 %v206, 12
      %v698 = vpop.permute.xlu0 %697
      %699 = vrot.lane.b32.xlu0 %v207, 12
      %v700 = vpop.permute.xlu0 %699
      %701 = vrot.lane.b32.xlu0 %v209, 12
      %v702 = vpop.permute.xlu0 %701
      %703 = vrot.lane.b32.xlu0 %v210, 12
      %v704 = vpop.permute.xlu0 %703
      %705 = vrot.lane.b32.xlu0 %v212, 12
      %v706 = vpop.permute.xlu0 %705
      %707 = vrot.lane.b32.xlu0 %v213, 12
      %v708 = vpop.permute.xlu0 %707
      %709 = vrot.lane.b32.xlu0 %v215, 12
      %v710 = vpop.permute.xlu0 %709
      %711 = vrot.lane.b32.xlu0 %v216, 12
      %v712 = vpop.permute.xlu0 %711
      %713 = vrot.lane.b32.xlu0 %v218, 12
      %v714 = vpop.permute.xlu0 %713
      %715 = vrot.lane.b32.xlu0 %v219, 12
      %v716 = vpop.permute.xlu0 %715
      %717 = vrot.lane.b32.xlu0 %v221, 12
      %v718 = vpop.permute.xlu0 %717
      %719 = vrot.lane.b32.xlu0 %v222, 12
      %v720 = vpop.permute.xlu0 %719
      %721 = vrot.lane.b32.xlu0 %v224, 12
      %v722 = vpop.permute.xlu0 %721
      %723 = vrot.lane.b32.xlu0 %v225, 12
      %v724 = vpop.permute.xlu0 %723
      %725 = vrot.lane.b32.xlu0 %v227, 12
      %v726 = vpop.permute.xlu0 %725
      %727 = vrot.lane.b32.xlu0 %v228, 12
      %v728 = vpop.permute.xlu0 %727
      %729 = vrot.lane.b32.xlu0 %v230, 12
      %v730 = vpop.permute.xlu0 %729
      %731 = vrot.lane.b32.xlu0 %v231, 12
      %v732 = vpop.permute.xlu0 %731
      %765 = vrot.lane.b32.xlu0 %v297, 16
      %v766 = vpop.permute.xlu0 %765
      %767 = vrot.lane.b32.xlu0 %v299, 16
      %v768 = vpop.permute.xlu0 %767
      %769 = vrot.lane.b32.xlu0 %v302, 16
      %v770 = vpop.permute.xlu0 %769
      %771 = vrot.lane.b32.xlu0 %v304, 16
      %v772 = vpop.permute.xlu0 %771
      %773 = vrot.lane.b32.xlu0 %v307, 16
      %v774 = vpop.permute.xlu0 %773
      %775 = vrot.lane.b32.xlu0 %v309, 16
      %v776 = vpop.permute.xlu0 %775
      %777 = vrot.lane.b32.xlu0 %v312, 16
      %v778 = vpop.permute.xlu0 %777
      %779 = vrot.lane.b32.xlu0 %v314, 16
      %v780 = vpop.permute.xlu0 %779
      %781 = vrot.lane.b32.xlu0 %v317, 16
      %v782 = vpop.permute.xlu0 %781
      %783 = vrot.lane.b32.xlu0 %v319, 16
      %v784 = vpop.permute.xlu0 %783
      %785 = vrot.lane.b32.xlu0 %v322, 16
      %v786 = vpop.permute.xlu0 %785
      %787 = vrot.lane.b32.xlu0 %v324, 16
      %v788 = vpop.permute.xlu0 %787
      %789 = vrot.lane.b32.xlu0 %v327, 16
      %v790 = vpop.permute.xlu0 %789
      %791 = vrot.lane.b32.xlu0 %v329, 16
      %v792 = vpop.permute.xlu0 %791
      %793 = vrot.lane.b32.xlu0 %v332, 16
      %v794 = vpop.permute.xlu0 %793
      %795 = vrot.lane.b32.xlu0 %v334, 16
      %v796 = vpop.permute.xlu0 %795
      %797 = vrot.lane.b32.xlu0 %v337, 16
      %v798 = vpop.permute.xlu0 %797
      %799 = vrot.lane.b32.xlu0 %v339, 16
      %v800 = vpop.permute.xlu0 %799
      %801 = vrot.lane.b32.xlu0 %v342, 16
      %v802 = vpop.permute.xlu0 %801
      %803 = vrot.lane.b32.xlu0 %v344, 16
      %v804 = vpop.permute.xlu0 %803
      %805 = vrot.lane.b32.xlu0 %v347, 16
      %v806 = vpop.permute.xlu0 %805
      %807 = vrot.lane.b32.xlu0 %v349, 16
      %v808 = vpop.permute.xlu0 %807
      %809 = vrot.lane.b32.xlu0 %v352, 16
      %v810 = vpop.permute.xlu0 %809
      %811 = vrot.lane.b32.xlu0 %v354, 16
      %v812 = vpop.permute.xlu0 %811
      %813 = vrot.lane.b32.xlu0 %v357, 16
      %v814 = vpop.permute.xlu0 %813
      %815 = vrot.lane.b32.xlu0 %v359, 16
      %v816 = vpop.permute.xlu0 %815
      %817 = vrot.lane.b32.xlu0 %v362, 16
      %v818 = vpop.permute.xlu0 %817
      %819 = vrot.lane.b32.xlu0 %v364, 16
      %v820 = vpop.permute.xlu0 %819
      %821 = vrot.lane.b32.xlu0 %v367, 16
      %v822 = vpop.permute.xlu0 %821
      %823 = vrot.lane.b32.xlu0 %v369, 16
      %v824 = vpop.permute.xlu0 %823
      %825 = vrot.lane.b32.xlu0 %v456, 16
      %v826 = vpop.permute.xlu0 %825
      %827 = vrot.lane.b32.xlu0 %v458, 16
      %v828 = vpop.permute.xlu0 %827
      %861 = vrot.lane.b32.xlu0 %v378, 20
      %v862 = vpop.permute.xlu0 %861
      %863 = vrot.lane.b32.xlu0 %v380, 20
      %v864 = vpop.permute.xlu0 %863
      %865 = vrot.lane.b32.xlu0 %v383, 20
      %v866 = vpop.permute.xlu0 %865
      %867 = vrot.lane.b32.xlu0 %v385, 20
      %v868 = vpop.permute.xlu0 %867
      %869 = vrot.lane.b32.xlu0 %v388, 20
      %v870 = vpop.permute.xlu0 %869
      %871 = vrot.lane.b32.xlu0 %v390, 20
      %v872 = vpop.permute.xlu0 %871
      %873 = vrot.lane.b32.xlu0 %v393, 20
      %v874 = vpop.permute.xlu0 %873
      %875 = vrot.lane.b32.xlu0 %v395, 20
      %v876 = vpop.permute.xlu0 %875
      %877 = vrot.lane.b32.xlu0 %v398, 20
      %v878 = vpop.permute.xlu0 %877
      %879 = vrot.lane.b32.xlu0 %v400, 20
      %v880 = vpop.permute.xlu0 %879
      %881 = vrot.lane.b32.xlu0 %v403, 20
      %v882 = vpop.permute.xlu0 %881
      %883 = vrot.lane.b32.xlu0 %v405, 20
      %v884 = vpop.permute.xlu0 %883
      %885 = vrot.lane.b32.xlu0 %v408, 20
      %v886 = vpop.permute.xlu0 %885
      %887 = vrot.lane.b32.xlu0 %v410, 20
      %v888 = vpop.permute.xlu0 %887
      %889 = vrot.lane.b32.xlu0 %v413, 20
      %v890 = vpop.permute.xlu0 %889
      %891 = vrot.lane.b32.xlu0 %v415, 20
      %v892 = vpop.permute.xlu0 %891
      %893 = vrot.lane.b32.xlu0 %v418, 20
      %v894 = vpop.permute.xlu0 %893
      %895 = vrot.lane.b32.xlu0 %v420, 20
      %v896 = vpop.permute.xlu0 %895
      %897 = vrot.lane.b32.xlu0 %v423, 20
      %v898 = vpop.permute.xlu0 %897
      %899 = vrot.lane.b32.xlu0 %v425, 20
      %v900 = vpop.permute.xlu0 %899
      %901 = vrot.lane.b32.xlu0 %v428, 20
      %v902 = vpop.permute.xlu0 %901
      %903 = vrot.lane.b32.xlu0 %v430, 20
      %v904 = vpop.permute.xlu0 %903
      %905 = vrot.lane.b32.xlu0 %v433, 20
      %v906 = vpop.permute.xlu0 %905
      %907 = vrot.lane.b32.xlu0 %v435, 20
      %v908 = vpop.permute.xlu0 %907
      %909 = vrot.lane.b32.xlu0 %v438, 20
      %v910 = vpop.permute.xlu0 %909
      %911 = vrot.lane.b32.xlu0 %v440, 20
      %v912 = vpop.permute.xlu0 %911
      %913 = vrot.lane.b32.xlu0 %v443, 20
      %v914 = vpop.permute.xlu0 %913
      %915 = vrot.lane.b32.xlu0 %v445, 20
      %v916 = vpop.permute.xlu0 %915
      %917 = vrot.lane.b32.xlu0 %v448, 20
      %v918 = vpop.permute.xlu0 %917
      %919 = vrot.lane.b32.xlu0 %v450, 20
      %v920 = vpop.permute.xlu0 %919
      %921 = vrot.lane.b32.xlu0 %v461, 20
      %v922 = vpop.permute.xlu0 %921
      %923 = vrot.lane.b32.xlu0 %v463, 20
      %v924 = vpop.permute.xlu0 %923
      %957 = vrot.lane.b32.xlu0 %v188, 24
      %v958 = vpop.permute.xlu0 %957
      %959 = vrot.lane.b32.xlu0 %v189, 24
      %v960 = vpop.permute.xlu0 %959
      %961 = vrot.lane.b32.xlu0 %v191, 24
      %v962 = vpop.permute.xlu0 %961
      %963 = vrot.lane.b32.xlu0 %v192, 24
      %v964 = vpop.permute.xlu0 %963
      %965 = vrot.lane.b32.xlu0 %v194, 24
      %v966 = vpop.permute.xlu0 %965
      %967 = vrot.lane.b32.xlu0 %v195, 24
      %v968 = vpop.permute.xlu0 %967
      %969 = vrot.lane.b32.xlu0 %v197, 24
      %v970 = vpop.permute.xlu0 %969
      %971 = vrot.lane.b32.xlu0 %v198, 24
      %v972 = vpop.permute.xlu0 %971
      %973 = vrot.lane.b32.xlu0 %v200, 24
      %v974 = vpop.permute.xlu0 %973
      %975 = vrot.lane.b32.xlu0 %v201, 24
      %v976 = vpop.permute.xlu0 %975
      %977 = vrot.lane.b32.xlu0 %v203, 24
      %v978 = vpop.permute.xlu0 %977
      %979 = vrot.lane.b32.xlu0 %v204, 24
      %v980 = vpop.permute.xlu0 %979
      %981 = vrot.lane.b32.xlu0 %v206, 24
      %v982 = vpop.permute.xlu0 %981
      %983 = vrot.lane.b32.xlu0 %v207, 24
      %v984 = vpop.permute.xlu0 %983
      %985 = vrot.lane.b32.xlu0 %v209, 24
      %v986 = vpop.permute.xlu0 %985
      %987 = vrot.lane.b32.xlu0 %v210, 24
      %v988 = vpop.permute.xlu0 %987
      %989 = vrot.lane.b32.xlu0 %v212, 24
      %v990 = vpop.permute.xlu0 %989
      %991 = vrot.lane.b32.xlu0 %v213, 24
      %v992 = vpop.permute.xlu0 %991
      %993 = vrot.lane.b32.xlu0 %v215, 24
      %v994 = vpop.permute.xlu0 %993
      %995 = vrot.lane.b32.xlu0 %v216, 24
      %v996 = vpop.permute.xlu0 %995
      %997 = vrot.lane.b32.xlu0 %v218, 24
      %v998 = vpop.permute.xlu0 %997
      %999 = vrot.lane.b32.xlu0 %v219, 24
      %v1000 = vpop.permute.xlu0 %999
      %1001 = vrot.lane.b32.xlu0 %v221, 24
      %v1002 = vpop.permute.xlu0 %1001
      %1003 = vrot.lane.b32.xlu0 %v222, 24
      %v1004 = vpop.permute.xlu0 %1003
      %1005 = vrot.lane.b32.xlu0 %v224, 24
      %v1006 = vpop.permute.xlu0 %1005
      %1007 = vrot.lane.b32.xlu0 %v225, 24
      %v1008 = vpop.permute.xlu0 %1007
      %1009 = vrot.lane.b32.xlu0 %v227, 24
      %v1010 = vpop.permute.xlu0 %1009
      %1011 = vrot.lane.b32.xlu0 %v228, 24
      %v1012 = vpop.permute.xlu0 %1011
      %1013 = vrot.lane.b32.xlu0 %v230, 24
      %v1014 = vpop.permute.xlu0 %1013
      %1015 = vrot.lane.b32.xlu0 %v231, 24
      %v1016 = vpop.permute.xlu0 %1015
      %1017 = vrot.lane.b32.xlu0 %v233, 24
      %v1018 = vpop.permute.xlu0 %1017
      %1019 = vrot.lane.b32.xlu0 %v234, 24
      %v1020 = vpop.permute.xlu0 %1019
      %1053 = vrot.lane.b32.xlu0 %v302, 28
      %v1054 = vpop.permute.xlu0 %1053
      %1055 = vrot.lane.b32.xlu0 %v304, 28
      %v1056 = vpop.permute.xlu0 %1055
      %1057 = vrot.lane.b32.xlu0 %v307, 28
      %v1058 = vpop.permute.xlu0 %1057
      %1059 = vrot.lane.b32.xlu0 %v309, 28
      %v1060 = vpop.permute.xlu0 %1059
      %1061 = vrot.lane.b32.xlu0 %v312, 28
      %v1062 = vpop.permute.xlu0 %1061
      %1063 = vrot.lane.b32.xlu0 %v314, 28
      %v1064 = vpop.permute.xlu0 %1063
      %1065 = vrot.lane.b32.xlu0 %v317, 28
      %v1066 = vpop.permute.xlu0 %1065
      %1067 = vrot.lane.b32.xlu0 %v319, 28
      %v1068 = vpop.permute.xlu0 %1067
      %1069 = vrot.lane.b32.xlu0 %v322, 28
      %v1070 = vpop.permute.xlu0 %1069
      %1071 = vrot.lane.b32.xlu0 %v324, 28
      %v1072 = vpop.permute.xlu0 %1071
      %1073 = vrot.lane.b32.xlu0 %v327, 28
      %v1074 = vpop.permute.xlu0 %1073
      %1075 = vrot.lane.b32.xlu0 %v329, 28
      %v1076 = vpop.permute.xlu0 %1075
      %1077 = vrot.lane.b32.xlu0 %v332, 28
      %v1078 = vpop.permute.xlu0 %1077
      %1079 = vrot.lane.b32.xlu0 %v334, 28
      %v1080 = vpop.permute.xlu0 %1079
      %1081 = vrot.lane.b32.xlu0 %v337, 28
      %v1082 = vpop.permute.xlu0 %1081
      %1083 = vrot.lane.b32.xlu0 %v339, 28
      %v1084 = vpop.permute.xlu0 %1083
      %1085 = vrot.lane.b32.xlu0 %v342, 28
      %v1086 = vpop.permute.xlu0 %1085
      %1087 = vrot.lane.b32.xlu0 %v344, 28
      %v1088 = vpop.permute.xlu0 %1087
      %1089 = vrot.lane.b32.xlu0 %v347, 28
      %v1090 = vpop.permute.xlu0 %1089
      %1091 = vrot.lane.b32.xlu0 %v349, 28
      %v1092 = vpop.permute.xlu0 %1091
      %1093 = vrot.lane.b32.xlu0 %v352, 28
      %v1094 = vpop.permute.xlu0 %1093
      %1095 = vrot.lane.b32.xlu0 %v354, 28
      %v1096 = vpop.permute.xlu0 %1095
      %1097 = vrot.lane.b32.xlu0 %v357, 28
      %v1098 = vpop.permute.xlu0 %1097
      %1099 = vrot.lane.b32.xlu0 %v359, 28
      %v1100 = vpop.permute.xlu0 %1099
      %1101 = vrot.lane.b32.xlu0 %v362, 28
      %v1102 = vpop.permute.xlu0 %1101
      %1103 = vrot.lane.b32.xlu0 %v364, 28
      %v1104 = vpop.permute.xlu0 %1103
      %1105 = vrot.lane.b32.xlu0 %v367, 28
      %v1106 = vpop.permute.xlu0 %1105
      %1107 = vrot.lane.b32.xlu0 %v369, 28
      %v1108 = vpop.permute.xlu0 %1107
      %1109 = vrot.lane.b32.xlu0 %v456, 28
      %v1110 = vpop.permute.xlu0 %1109
      %1111 = vrot.lane.b32.xlu0 %v458, 28
      %v1112 = vpop.permute.xlu0 %1111
      %1113 = vrot.lane.b32.xlu0 %v469, 28
      %v1114 = vpop.permute.xlu0 %1113
      %1115 = vrot.lane.b32.xlu0 %v471, 28
      %v1116 = vpop.permute.xlu0 %1115
      %1149 = vrot.lane.b32.xlu0 %v383, 32
      %v1150 = vpop.permute.xlu0 %1149
      %1151 = vrot.lane.b32.xlu0 %v385, 32
      %v1152 = vpop.permute.xlu0 %1151
      %1153 = vrot.lane.b32.xlu0 %v388, 32
      %v1154 = vpop.permute.xlu0 %1153
      %1155 = vrot.lane.b32.xlu0 %v390, 32
      %v1156 = vpop.permute.xlu0 %1155
      %1157 = vrot.lane.b32.xlu0 %v393, 32
      %v1158 = vpop.permute.xlu0 %1157
      %1159 = vrot.lane.b32.xlu0 %v395, 32
      %v1160 = vpop.permute.xlu0 %1159
      %1161 = vrot.lane.b32.xlu0 %v398, 32
      %v1162 = vpop.permute.xlu0 %1161
      %1163 = vrot.lane.b32.xlu0 %v400, 32
      %v1164 = vpop.permute.xlu0 %1163
      %1165 = vrot.lane.b32.xlu0 %v403, 32
      %v1166 = vpop.permute.xlu0 %1165
      %1167 = vrot.lane.b32.xlu0 %v405, 32
      %v1168 = vpop.permute.xlu0 %1167
      %1169 = vrot.lane.b32.xlu0 %v408, 32
      %v1170 = vpop.permute.xlu0 %1169
      %1171 = vrot.lane.b32.xlu0 %v410, 32
      %v1172 = vpop.permute.xlu0 %1171
      %1173 = vrot.lane.b32.xlu0 %v413, 32
      %v1174 = vpop.permute.xlu0 %1173
      %1175 = vrot.lane.b32.xlu0 %v415, 32
      %v1176 = vpop.permute.xlu0 %1175
      %1177 = vrot.lane.b32.xlu0 %v418, 32
      %v1178 = vpop.permute.xlu0 %1177
      %1179 = vrot.lane.b32.xlu0 %v420, 32
      %v1180 = vpop.permute.xlu0 %1179
      %1181 = vrot.lane.b32.xlu0 %v423, 32
      %v1182 = vpop.permute.xlu0 %1181
      %1183 = vrot.lane.b32.xlu0 %v425, 32
      %v1184 = vpop.permute.xlu0 %1183
      %1185 = vrot.lane.b32.xlu0 %v428, 32
      %v1186 = vpop.permute.xlu0 %1185
      %1187 = vrot.lane.b32.xlu0 %v430, 32
      %v1188 = vpop.permute.xlu0 %1187
      %1189 = vrot.lane.b32.xlu0 %v433, 32
      %v1190 = vpop.permute.xlu0 %1189
      %1191 = vrot.lane.b32.xlu0 %v435, 32
      %v1192 = vpop.permute.xlu0 %1191
      %1193 = vrot.lane.b32.xlu0 %v438, 32
      %v1194 = vpop.permute.xlu0 %1193
      %1195 = vrot.lane.b32.xlu0 %v440, 32
      %v1196 = vpop.permute.xlu0 %1195
      %1197 = vrot.lane.b32.xlu0 %v443, 32
      %v1198 = vpop.permute.xlu0 %1197
      %1199 = vrot.lane.b32.xlu0 %v445, 32
      %v1200 = vpop.permute.xlu0 %1199
      %1201 = vrot.lane.b32.xlu0 %v448, 32
      %v1202 = vpop.permute.xlu0 %1201
      %1203 = vrot.lane.b32.xlu0 %v450, 32
      %v1204 = vpop.permute.xlu0 %1203
      %1205 = vrot.lane.b32.xlu0 %v461, 32
      %v1206 = vpop.permute.xlu0 %1205
      %1207 = vrot.lane.b32.xlu0 %v463, 32
      %v1208 = vpop.permute.xlu0 %1207
      %1209 = vrot.lane.b32.xlu0 %v474, 32
      %v1210 = vpop.permute.xlu0 %1209
      %1211 = vrot.lane.b32.xlu0 %v476, 32
      %v1212 = vpop.permute.xlu0 %1211
      %vm1245 = vcmask 31744
      %v1246 = vsel %vm1245, %v182, %v478
      %v1247 = vsel %vm1245, %v183, %v480
      %v1248 = vsel %vm1245, %v185, %v482
      %v1249 = vsel %vm1245, %v186, %v484
      %v1250 = vsel %vm1245, %v188, %v486
      %v1251 = vsel %vm1245, %v189, %v488
      %v1252 = vsel %vm1245, %v191, %v490
      %v1253 = vsel %vm1245, %v192, %v492
      %v1254 = vsel %vm1245, %v194, %v494
      %v1255 = vsel %vm1245, %v195, %v496
      %v1256 = vsel %vm1245, %v197, %v498
      %v1257 = vsel %vm1245, %v198, %v500
      %v1258 = vsel %vm1245, %v200, %v502
      %v1259 = vsel %vm1245, %v201, %v504
      %v1260 = vsel %vm1245, %v203, %v506
      %v1261 = vsel %vm1245, %v204, %v508
      %v1262 = vsel %vm1245, %v206, %v510
      %v1263 = vsel %vm1245, %v207, %v512
      %v1264 = vsel %vm1245, %v209, %v514
      %v1265 = vsel %vm1245, %v210, %v516
      %v1266 = vsel %vm1245, %v212, %v518
      %v1267 = vsel %vm1245, %v213, %v520
      %v1268 = vsel %vm1245, %v215, %v522
      %v1269 = vsel %vm1245, %v216, %v524
      %v1270 = vsel %vm1245, %v218, %v526
      %v1271 = vsel %vm1245, %v219, %v528
      %v1272 = vsel %vm1245, %v221, %v530
      %v1273 = vsel %vm1245, %v222, %v532
      %v1274 = vsel %vm1245, %v224, %v534
      %v1275 = vsel %vm1245, %v225, %v536
      %v1276 = vsel %vm1245, %v227, %v538
      %v1277 = vsel %vm1245, %v228, %v540
      %vm1278 = vcmask 64512
      %v1279 = vsel %vm1278, %v1246, %v574
      %v1280 = vsel %vm1278, %v1247, %v576
      %v1281 = vsel %vm1278, %v1248, %v578
      %v1282 = vsel %vm1278, %v1249, %v580
      %v1283 = vsel %vm1278, %v1250, %v582
      %v1284 = vsel %vm1278, %v1251, %v584
      %v1285 = vsel %vm1278, %v1252, %v586
      %v1286 = vsel %vm1278, %v1253, %v588
      %v1287 = vsel %vm1278, %v1254, %v590
      %v1288 = vsel %vm1278, %v1255, %v592
      %v1289 = vsel %vm1278, %v1256, %v594
      %v1290 = vsel %vm1278, %v1257, %v596
      %v1291 = vsel %vm1278, %v1258, %v598
      %v1292 = vsel %vm1278, %v1259, %v600
      %v1293 = vsel %vm1278, %v1260, %v602
      %v1294 = vsel %vm1278, %v1261, %v604
      %v1295 = vsel %vm1278, %v1262, %v606
      %v1296 = vsel %vm1278, %v1263, %v608
      %v1297 = vsel %vm1278, %v1264, %v610
      %v1298 = vsel %vm1278, %v1265, %v612
      %v1299 = vsel %vm1278, %v1266, %v614
      %v1300 = vsel %vm1278, %v1267, %v616
      %v1301 = vsel %vm1278, %v1268, %v618
      %v1302 = vsel %vm1278, %v1269, %v620
      %v1303 = vsel %vm1278, %v1270, %v622
      %v1304 = vsel %vm1278, %v1271, %v624
      %v1305 = vsel %vm1278, %v1272, %v626
      %v1306 = vsel %vm1278, %v1273, %v628
      %v1307 = vsel %vm1278, %v1274, %v630
      %v1308 = vsel %vm1278, %v1275, %v632
      %v1309 = vsel %vm1278, %v1276, %v634
      %v1310 = vsel %vm1278, %v1277, %v636
      %vm1311 = vcmask 97280
      %v1312 = vsel %vm1311, %v1279, %v670
      %v1313 = vsel %vm1311, %v1280, %v672
      %v1314 = vsel %vm1311, %v1281, %v674
      %v1315 = vsel %vm1311, %v1282, %v676
      %v1316 = vsel %vm1311, %v1283, %v678
      %v1317 = vsel %vm1311, %v1284, %v680
      %v1318 = vsel %vm1311, %v1285, %v682
      %v1319 = vsel %vm1311, %v1286, %v684
      %v1320 = vsel %vm1311, %v1287, %v686
      %v1321 = vsel %vm1311, %v1288, %v688
      %v1322 = vsel %vm1311, %v1289, %v690
      %v1323 = vsel %vm1311, %v1290, %v692
      %v1324 = vsel %vm1311, %v1291, %v694
      %v1325 = vsel %vm1311, %v1292, %v696
      %v1326 = vsel %vm1311, %v1293, %v698
      %v1327 = vsel %vm1311, %v1294, %v700
      %v1328 = vsel %vm1311, %v1295, %v702
      %v1329 = vsel %vm1311, %v1296, %v704
      %v1330 = vsel %vm1311, %v1297, %v706
      %v1331 = vsel %vm1311, %v1298, %v708
      %v1332 = vsel %vm1311, %v1299, %v710
      %v1333 = vsel %vm1311, %v1300, %v712
      %v1334 = vsel %vm1311, %v1301, %v714
      %v1335 = vsel %vm1311, %v1302, %v716
      %v1336 = vsel %vm1311, %v1303, %v718
      %v1337 = vsel %vm1311, %v1304, %v720
      %v1338 = vsel %vm1311, %v1305, %v722
      %v1339 = vsel %vm1311, %v1306, %v724
      %v1340 = vsel %vm1311, %v1307, %v726
      %v1341 = vsel %vm1311, %v1308, %v728
      %v1342 = vsel %vm1311, %v1309, %v730
      %v1343 = vsel %vm1311, %v1310, %v732
      %vm1344 = vcmask 130048
      %v1345 = vsel %vm1344, %v1312, %v766
      %v1346 = vsel %vm1344, %v1313, %v768
      %v1347 = vsel %vm1344, %v1314, %v770
      %v1348 = vsel %vm1344, %v1315, %v772
      %v1349 = vsel %vm1344, %v1316, %v774
      %v1350 = vsel %vm1344, %v1317, %v776
      %v1351 = vsel %vm1344, %v1318, %v778
      %v1352 = vsel %vm1344, %v1319, %v780
      %v1353 = vsel %vm1344, %v1320, %v782
      %v1354 = vsel %vm1344, %v1321, %v784
      %v1355 = vsel %vm1344, %v1322, %v786
      %v1356 = vsel %vm1344, %v1323, %v788
      %v1357 = vsel %vm1344, %v1324, %v790
      %v1358 = vsel %vm1344, %v1325, %v792
      %v1359 = vsel %vm1344, %v1326, %v794
      %v1360 = vsel %vm1344, %v1327, %v796
      %v1361 = vsel %vm1344, %v1328, %v798
      %v1362 = vsel %vm1344, %v1329, %v800
      %v1363 = vsel %vm1344, %v1330, %v802
      %v1364 = vsel %vm1344, %v1331, %v804
      %v1365 = vsel %vm1344, %v1332, %v806
      %v1366 = vsel %vm1344, %v1333, %v808
      %v1367 = vsel %vm1344, %v1334, %v810
      %v1368 = vsel %vm1344, %v1335, %v812
      %v1369 = vsel %vm1344, %v1336, %v814
      %v1370 = vsel %vm1344, %v1337, %v816
      %v1371 = vsel %vm1344, %v1338, %v818
      %v1372 = vsel %vm1344, %v1339, %v820
      %v1373 = vsel %vm1344, %v1340, %v822
      %v1374 = vsel %vm1344, %v1341, %v824
      %v1375 = vsel %vm1344, %v1342, %v826
      %v1376 = vsel %vm1344, %v1343, %v828
      %vm1377 = vcmask 162816
      %v1378 = vsel %vm1377, %v1345, %v862
      %v1379 = vsel %vm1377, %v1346, %v864
      %v1380 = vsel %vm1377, %v1347, %v866
      %v1381 = vsel %vm1377, %v1348, %v868
      %v1382 = vsel %vm1377, %v1349, %v870
      %v1383 = vsel %vm1377, %v1350, %v872
      %v1384 = vsel %vm1377, %v1351, %v874
      %v1385 = vsel %vm1377, %v1352, %v876
      %v1386 = vsel %vm1377, %v1353, %v878
      %v1387 = vsel %vm1377, %v1354, %v880
      %v1388 = vsel %vm1377, %v1355, %v882
      %v1389 = vsel %vm1377, %v1356, %v884
      %v1390 = vsel %vm1377, %v1357, %v886
      %v1391 = vsel %vm1377, %v1358, %v888
      %v1392 = vsel %vm1377, %v1359, %v890
      %v1393 = vsel %vm1377, %v1360, %v892
      %v1394 = vsel %vm1377, %v1361, %v894
      %v1395 = vsel %vm1377, %v1362, %v896
      %v1396 = vsel %vm1377, %v1363, %v898
      %v1397 = vsel %vm1377, %v1364, %v900
      %v1398 = vsel %vm1377, %v1365, %v902
      %v1399 = vsel %vm1377, %v1366, %v904
      %v1400 = vsel %vm1377, %v1367, %v906
      %v1401 = vsel %vm1377, %v1368, %v908
      %v1402 = vsel %vm1377, %v1369, %v910
      %v1403 = vsel %vm1377, %v1370, %v912
      %v1404 = vsel %vm1377, %v1371, %v914
      %v1405 = vsel %vm1377, %v1372, %v916
      %v1406 = vsel %vm1377, %v1373, %v918
      %v1407 = vsel %vm1377, %v1374, %v920
      %v1408 = vsel %vm1377, %v1375, %v922
      %v1409 = vsel %vm1377, %v1376, %v924
      %vm1410 = vcmask 195584
      %v1411 = vsel %vm1410, %v1378, %v958
      %v1412 = vsel %vm1410, %v1379, %v960
      %v1413 = vsel %vm1410, %v1380, %v962
      %v1414 = vsel %vm1410, %v1381, %v964
      %v1415 = vsel %vm1410, %v1382, %v966
      %v1416 = vsel %vm1410, %v1383, %v968
      %v1417 = vsel %vm1410, %v1384, %v970
      %v1418 = vsel %vm1410, %v1385, %v972
      %v1419 = vsel %vm1410, %v1386, %v974
      %v1420 = vsel %vm1410, %v1387, %v976
      %v1421 = vsel %vm1410, %v1388, %v978
      %v1422 = vsel %vm1410, %v1389, %v980
      %v1423 = vsel %vm1410, %v1390, %v982
      %v1424 = vsel %vm1410, %v1391, %v984
      %v1425 = vsel %vm1410, %v1392, %v986
      %v1426 = vsel %vm1410, %v1393, %v988
      %v1427 = vsel %vm1410, %v1394, %v990
      %v1428 = vsel %vm1410, %v1395, %v992
      %v1429 = vsel %vm1410, %v1396, %v994
      %v1430 = vsel %vm1410, %v1397, %v996
      %v1431 = vsel %vm1410, %v1398, %v998
      %v1432 = vsel %vm1410, %v1399, %v1000
      %v1433 = vsel %vm1410, %v1400, %v1002
      %v1434 = vsel %vm1410, %v1401, %v1004
      %v1435 = vsel %vm1410, %v1402, %v1006
      %v1436 = vsel %vm1410, %v1403, %v1008
      %v1437 = vsel %vm1410, %v1404, %v1010
      %v1438 = vsel %vm1410, %v1405, %v1012
      %v1439 = vsel %vm1410, %v1406, %v1014
      %v1440 = vsel %vm1410, %v1407, %v1016
      %v1441 = vsel %vm1410, %v1408, %v1018
      %v1442 = vsel %vm1410, %v1409, %v1020
      %vm1443 = vcmask 228352
      %v1444 = vsel %vm1443, %v1411, %v1054
      %v1445 = vsel %vm1443, %v1412, %v1056
      %v1446 = vsel %vm1443, %v1413, %v1058
      %v1447 = vsel %vm1443, %v1414, %v1060
      %v1448 = vsel %vm1443, %v1415, %v1062
      %v1449 = vsel %vm1443, %v1416, %v1064
      %v1450 = vsel %vm1443, %v1417, %v1066
      %v1451 = vsel %vm1443, %v1418, %v1068
      %v1452 = vsel %vm1443, %v1419, %v1070
      %v1453 = vsel %vm1443, %v1420, %v1072
      %v1454 = vsel %vm1443, %v1421, %v1074
      %v1455 = vsel %vm1443, %v1422, %v1076
      %v1456 = vsel %vm1443, %v1423, %v1078
      %v1457 = vsel %vm1443, %v1424, %v1080
      %v1458 = vsel %vm1443, %v1425, %v1082
      %v1459 = vsel %vm1443, %v1426, %v1084
      %v1460 = vsel %vm1443, %v1427, %v1086
      %v1461 = vsel %vm1443, %v1428, %v1088
      %v1462 = vsel %vm1443, %v1429, %v1090
      %v1463 = vsel %vm1443, %v1430, %v1092
      %v1464 = vsel %vm1443, %v1431, %v1094
      %v1465 = vsel %vm1443, %v1432, %v1096
      %v1466 = vsel %vm1443, %v1433, %v1098
      %v1467 = vsel %vm1443, %v1434, %v1100
      %v1468 = vsel %vm1443, %v1435, %v1102
      %v1469 = vsel %vm1443, %v1436, %v1104
      %v1470 = vsel %vm1443, %v1437, %v1106
      %v1471 = vsel %vm1443, %v1438, %v1108
      %v1472 = vsel %vm1443, %v1439, %v1110
      %v1473 = vsel %vm1443, %v1440, %v1112
      %v1474 = vsel %vm1443, %v1441, %v1114
      %v1475 = vsel %vm1443, %v1442, %v1116
      %vm1476 = vcmask 261120
      %v1477 = vsel %vm1476, %v1444, %v1150
      %v1478 = vsel %vm1476, %v1445, %v1152
      %v1479 = vsel %vm1476, %v1446, %v1154
      %v1480 = vsel %vm1476, %v1447, %v1156
      %v1481 = vsel %vm1476, %v1448, %v1158
      %v1482 = vsel %vm1476, %v1449, %v1160
      %v1483 = vsel %vm1476, %v1450, %v1162
      %v1484 = vsel %vm1476, %v1451, %v1164
      %v1485 = vsel %vm1476, %v1452, %v1166
      %v1486 = vsel %vm1476, %v1453, %v1168
      %v1487 = vsel %vm1476, %v1454, %v1170
      %v1488 = vsel %vm1476, %v1455, %v1172
      %v1489 = vsel %vm1476, %v1456, %v1174
      %v1490 = vsel %vm1476, %v1457, %v1176
      %v1491 = vsel %vm1476, %v1458, %v1178
      %v1492 = vsel %vm1476, %v1459, %v1180
      %v1493 = vsel %vm1476, %v1460, %v1182
      %v1494 = vsel %vm1476, %v1461, %v1184
      %v1495 = vsel %vm1476, %v1462, %v1186
      %v1496 = vsel %vm1476, %v1463, %v1188
      %v1497 = vsel %vm1476, %v1464, %v1190
      %v1498 = vsel %vm1476, %v1465, %v1192
      %v1499 = vsel %vm1476, %v1466, %v1194
      %v1500 = vsel %vm1476, %v1467, %v1196
      %v1501 = vsel %vm1476, %v1468, %v1198
      %v1502 = vsel %vm1476, %v1469, %v1200
      %v1503 = vsel %vm1476, %v1470, %v1202
      %v1504 = vsel %vm1476, %v1471, %v1204
      %v1505 = vsel %vm1476, %v1472, %v1206
      %v1506 = vsel %vm1476, %v1473, %v1208
      %v1507 = vsel %vm1476, %v1474, %v1210
      %v1508 = vsel %vm1476, %v1475, %v1212
      %vm1509 = vcmask 293888
      %v1511 = vsel %vm1509, %v1477, 0
      %v1514 = vsel %vm1509, %v1478, 0
      %v1517 = vsel %vm1509, %v1479, 0
      %v1520 = vsel %vm1509, %v1480, 0
      %v1523 = vsel %vm1509, %v1481, 0
      %v1526 = vsel %vm1509, %v1482, 0
      %v1529 = vsel %vm1509, %v1483, 0
      %v1532 = vsel %vm1509, %v1484, 0
      %v1535 = vsel %vm1509, %v1485, 0
      %v1538 = vsel %vm1509, %v1486, 0
      %v1541 = vsel %vm1509, %v1487, 0
      %v1544 = vsel %vm1509, %v1488, 0
      %v1547 = vsel %vm1509, %v1489, 0
      %v1550 = vsel %vm1509, %v1490, 0
      %v1553 = vsel %vm1509, %v1491, 0
      %v1556 = vsel %vm1509, %v1492, 0
      %v1559 = vsel %vm1509, %v1493, 0
      %v1562 = vsel %vm1509, %v1494, 0
      %v1565 = vsel %vm1509, %v1495, 0
      %v1568 = vsel %vm1509, %v1496, 0
      %v1571 = vsel %vm1509, %v1497, 0
      %v1574 = vsel %vm1509, %v1498, 0
      %v1577 = vsel %vm1509, %v1499, 0
      %v1580 = vsel %vm1509, %v1500, 0
      %v1583 = vsel %vm1509, %v1501, 0
      %v1586 = vsel %vm1509, %v1502, 0
      %v1589 = vsel %vm1509, %v1503, 0
      %v1592 = vsel %vm1509, %v1504, 0
      %v1595 = vsel %vm1509, %v1505, 0
      %v1598 = vsel %vm1509, %v1506, 0
      %v1601 = vsel %vm1509, %v1507, 0
      %v1604 = vsel %vm1509, %v1508, 0
      %vm1606 = vcmask 1043456
      %v1608 = vsel %vm1606, %v240, 0
      %1610 = vmatprep.subr.mxu0 0.0
      %1611 = vmatpush1.msra.mxu0 0.0
      %1612 = vmatprep.subr.mxu0 0.0
      %1613 = vmatpush1.msra.mxu0 0.0
      %1614 = vmatprep.subr.mxu0 0.0
      %1615 = vmatpush1.msra.mxu0 0.0
      %1616 = vmatprep.subr.mxu0 0.0
      %1617 = vmatpush1.msra.mxu0 0.0
      %1618 = vmatprep.subr.mxu0 0.0
      %1619 = vmatpush1.msra.mxu0 0.0
      %1620 = vmatprep.subr.mxu0 0.0
      %1621 = vmatpush1.msra.mxu0 0.0
      %1622 = vmatprep.subr.mxu0 0.0
      %1623 = vmatpush1.msra.mxu0 0.0
      %1624 = vmatprep.subr.mxu0 0.0
      %1625 = vmatpush1.msra.mxu0 0.0
      %1626 = vmatprep.subr.mxu0 0.0
      %1627 = vmatpush1.msra.mxu0 0.0
      %1628 = vmatprep.subr.mxu0 0.0
      %1629 = vmatpush1.msra.mxu0 0.0
      %1630 = vmatprep.subr.mxu0 0.0
      %1631 = vmatpush1.msra.mxu0 0.0
      %1632 = vmatprep.subr.mxu0 0.0
      %1633 = vmatpush1.msra.mxu0 %v1608
      %1634 = vmatprep.subr.mxu0 0.0
      %1635 = vmatpush1.msra.mxu0 %v239
      %1636 = vmatprep.subr.mxu0 0.0
      %1637 = vmatpush1.msra.mxu0 %v238
      %1638 = vmatprep.subr.mxu0 0.0
      %1639 = vmatpush1.msra.mxu0 %v237
      %1640 = vmatprep.subr.mxu0 0.0
      %1641 = vmatpush1.msra.mxu0 %v236
      %1642 = vmatprep.subr.mxu0 0.0
      %1643 = vmatpush2.msra.mxu0 0.0
      %1644 = vmatprep.subr.mxu0 0.0
      %1645 = vmatpush2.msra.mxu0 0.0
      %1646 = vmatprep.subr.mxu0 0.0
      %1647 = vmatpush2.msra.mxu0 0.0
      %1648 = vmatprep.subr.mxu0 0.0
      %1649 = vmatpush2.msra.mxu0 0.0
      %1650 = vmatprep.subr.mxu0 0.0
      %1651 = vmatpush2.msra.mxu0 0.0
      %1652 = vmatprep.subr.mxu0 0.0
      %1653 = vmatpush2.msra.mxu0 0.0
      %1654 = vmatprep.subr.mxu0 0.0
      %1655 = vmatpush2.msra.mxu0 0.0
      %1656 = vmatprep.subr.mxu0 0.0
      %1657 = vmatpush2.msra.mxu0 0.0
      %1658 = vmatprep.subr.mxu0 0.0
      %1659 = vmatpush2.msra.mxu0 0.0
      %1660 = vmatprep.subr.mxu0 0.0
      %1661 = vmatpush2.msra.mxu0 0.0
      %1662 = vmatprep.subr.mxu0 0.0
      %1663 = vmatpush2.msra.mxu0 0.0
      %1664 = vmatprep.subr.mxu0 0.0
      %1665 = vmatpush2.msra.mxu0 0.0
      %1666 = vmatprep.subr.mxu0 0.0
      %1667 = vmatpush2.msra.mxu0 0.0
      %1668 = vmatprep.subr.mxu0 0.0
      %1669 = vmatpush2.msra.mxu0 0.0
      %1670 = vmatprep.subr.mxu0 0.0
      %1671 = vmatpush2.msra.mxu0 0.0
      %1672 = vmatprep.subr.mxu0 0.0
      %1673 = vmatpush2.msra.mxu0 0.0
      %1674 = vmatprep.mubr.f32.mxu0 0.0
      %1675 = vmatmul.mubr.f32.gmra.mxu0 %v1511
      %v1676 = vpop.f32.mrf.mxu0
      %v1677 = vadd.f32 0.0, %v1676
      %v1678 = vpop.f32.mrf.mxu0
      %1679 = vmatprep.mubr.f32.mxu0 0.0
      %1680 = vmatmul.mubr.f32.gmra.mxu0 %v1514
      %v1681 = vpop.f32.mrf.mxu0
      %v1682 = vadd.f32 0.0, %v1681
      %v1683 = vpop.f32.mrf.mxu0
      %1684 = vmatprep.mubr.f32.mxu0 0.0
      %1685 = vmatmul.mubr.f32.gmra.mxu0 %v1517
      %v1686 = vpop.f32.mrf.mxu0
      %v1687 = vadd.f32 0.0, %v1686
      %v1688 = vpop.f32.mrf.mxu0
      %1689 = vmatprep.mubr.f32.mxu0 0.0
      %1690 = vmatmul.mubr.f32.gmra.mxu0 %v1520
      %v1691 = vpop.f32.mrf.mxu0
      %v1692 = vadd.f32 0.0, %v1691
      %v1693 = vpop.f32.mrf.mxu0
      %1694 = vmatprep.mubr.f32.mxu0 0.0
      %1695 = vmatmul.mubr.f32.gmra.mxu0 %v1523
      %v1696 = vpop.f32.mrf.mxu0
      %v1697 = vadd.f32 0.0, %v1696
      %v1698 = vpop.f32.mrf.mxu0
      %1699 = vmatprep.mubr.f32.mxu0 0.0
      %1700 = vmatmul.mubr.f32.gmra.mxu0 %v1526
      %v1701 = vpop.f32.mrf.mxu0
      %v1702 = vadd.f32 0.0, %v1701
      %v1703 = vpop.f32.mrf.mxu0
      %1704 = vmatprep.mubr.f32.mxu0 0.0
      %1705 = vmatmul.mubr.f32.gmra.mxu0 %v1529
      %v1706 = vpop.f32.mrf.mxu0
      %v1707 = vadd.f32 0.0, %v1706
      %v1708 = vpop.f32.mrf.mxu0
      %1709 = vmatprep.mubr.f32.mxu0 0.0
      %1710 = vmatmul.mubr.f32.gmra.mxu0 %v1532
      %v1711 = vpop.f32.mrf.mxu0
      %v1712 = vadd.f32 0.0, %v1711
      %v1713 = vpop.f32.mrf.mxu0
      %1714 = vmatprep.mubr.f32.mxu0 0.0
      %1715 = vmatmul.mubr.f32.gmra.mxu0 %v1535
      %v1716 = vpop.f32.mrf.mxu0
      %v1717 = vadd.f32 0.0, %v1716
      %v1718 = vpop.f32.mrf.mxu0
      %1719 = vmatprep.mubr.f32.mxu0 0.0
      %1720 = vmatmul.mubr.f32.gmra.mxu0 %v1538
      %v1721 = vpop.f32.mrf.mxu0
      %v1722 = vadd.f32 0.0, %v1721
      %v1723 = vpop.f32.mrf.mxu0
      %1724 = vmatprep.mubr.f32.mxu0 0.0
      %1725 = vmatmul.mubr.f32.gmra.mxu0 %v1541
      %v1726 = vpop.f32.mrf.mxu0
      %v1727 = vadd.f32 0.0, %v1726
      %v1728 = vpop.f32.mrf.mxu0
      %1729 = vmatprep.mubr.f32.mxu0 0.0
      %1730 = vmatmul.mubr.f32.gmra.mxu0 %v1544
      %v1731 = vpop.f32.mrf.mxu0
      %v1732 = vadd.f32 0.0, %v1731
      %v1733 = vpop.f32.mrf.mxu0
      %1734 = vmatprep.mubr.f32.mxu0 0.0
      %1735 = vmatmul.mubr.f32.gmra.mxu0 %v1547
      %v1736 = vpop.f32.mrf.mxu0
      %v1737 = vadd.f32 0.0, %v1736
      %v1738 = vpop.f32.mrf.mxu0
      %1739 = vmatprep.mubr.f32.mxu0 0.0
      %1740 = vmatmul.mubr.f32.gmra.mxu0 %v1550
      %v1741 = vpop.f32.mrf.mxu0
      %v1742 = vadd.f32 0.0, %v1741
      %v1743 = vpop.f32.mrf.mxu0
      %1744 = vmatprep.mubr.f32.mxu0 0.0
      %1745 = vmatmul.mubr.f32.gmra.mxu0 %v1553
      %v1746 = vpop.f32.mrf.mxu0
      %v1747 = vadd.f32 0.0, %v1746
      %v1748 = vpop.f32.mrf.mxu0
      %1749 = vmatprep.mubr.f32.mxu0 0.0
      %1750 = vmatmul.mubr.f32.gmra.mxu0 %v1556
      %v1751 = vpop.f32.mrf.mxu0
      %v1752 = vadd.f32 0.0, %v1751
      %v1753 = vpop.f32.mrf.mxu0
      %1754 = vmatprep.mubr.f32.mxu0 0.0
      %1755 = vmatmul.mubr.f32.gmra.mxu0 %v1559
      %v1756 = vpop.f32.mrf.mxu0
      %v1757 = vadd.f32 0.0, %v1756
      %v1758 = vpop.f32.mrf.mxu0
      %1759 = vmatprep.mubr.f32.mxu0 0.0
      %1760 = vmatmul.mubr.f32.gmra.mxu0 %v1562
      %v1761 = vpop.f32.mrf.mxu0
      %v1762 = vadd.f32 0.0, %v1761
      %v1763 = vpop.f32.mrf.mxu0
      %1764 = vmatprep.mubr.f32.mxu0 0.0
      %1765 = vmatmul.mubr.f32.gmra.mxu0 %v1565
      %v1766 = vpop.f32.mrf.mxu0
      %v1767 = vadd.f32 0.0, %v1766
      %v1768 = vpop.f32.mrf.mxu0
      %1769 = vmatprep.mubr.f32.mxu0 0.0
      %1770 = vmatmul.mubr.f32.gmra.mxu0 %v1568
      %v1771 = vpop.f32.mrf.mxu0
      %v1772 = vadd.f32 0.0, %v1771
      %v1773 = vpop.f32.mrf.mxu0
      %1774 = vmatprep.mubr.f32.mxu0 0.0
      %1775 = vmatmul.mubr.f32.gmra.mxu0 %v1571
      %v1776 = vpop.f32.mrf.mxu0
      %v1777 = vadd.f32 0.0, %v1776
      %v1778 = vpop.f32.mrf.mxu0
      %1779 = vmatprep.mubr.f32.mxu0 0.0
      %1780 = vmatmul.mubr.f32.gmra.mxu0 %v1574
      %v1781 = vpop.f32.mrf.mxu0
      %v1782 = vadd.f32 0.0, %v1781
      %v1783 = vpop.f32.mrf.mxu0
      %1784 = vmatprep.mubr.f32.mxu0 0.0
      %1785 = vmatmul.mubr.f32.gmra.mxu0 %v1577
      %v1786 = vpop.f32.mrf.mxu0
      %v1787 = vadd.f32 0.0, %v1786
      %v1788 = vpop.f32.mrf.mxu0
      %1789 = vmatprep.mubr.f32.mxu0 0.0
      %1790 = vmatmul.mubr.f32.gmra.mxu0 %v1580
      %v1791 = vpop.f32.mrf.mxu0
      %v1792 = vadd.f32 0.0, %v1791
      %v1793 = vpop.f32.mrf.mxu0
      %1794 = vmatprep.mubr.f32.mxu0 0.0
      %1795 = vmatmul.mubr.f32.gmra.mxu0 %v1583
      %v1796 = vpop.f32.mrf.mxu0
      %v1797 = vadd.f32 0.0, %v1796
      %v1798 = vpop.f32.mrf.mxu0
      %1799 = vmatprep.mubr.f32.mxu0 0.0
      %1800 = vmatmul.mubr.f32.gmra.mxu0 %v1586
      %v1801 = vpop.f32.mrf.mxu0
      %v1802 = vadd.f32 0.0, %v1801
      %v1803 = vpop.f32.mrf.mxu0
      %1804 = vmatprep.mubr.f32.mxu0 0.0
      %1805 = vmatmul.mubr.f32.gmra.mxu0 %v1589
      %v1806 = vpop.f32.mrf.mxu0
      %v1807 = vadd.f32 0.0, %v1806
      %v1808 = vpop.f32.mrf.mxu0
      %1809 = vmatprep.mubr.f32.mxu0 0.0
      %1810 = vmatmul.mubr.f32.gmra.mxu0 %v1592
      %v1811 = vpop.f32.mrf.mxu0
      %v1812 = vadd.f32 0.0, %v1811
      %v1813 = vpop.f32.mrf.mxu0
      %1814 = vmatprep.mubr.f32.mxu0 0.0
      %1815 = vmatmul.mubr.f32.gmra.mxu0 %v1595
      %v1816 = vpop.f32.mrf.mxu0
      %v1817 = vadd.f32 0.0, %v1816
      %v1818 = vpop.f32.mrf.mxu0
      %1819 = vmatprep.mubr.f32.mxu0 0.0
      %1820 = vmatmul.mubr.f32.gmra.mxu0 %v1598
      %v1821 = vpop.f32.mrf.mxu0
      %v1822 = vadd.f32 0.0, %v1821
      %v1823 = vpop.f32.mrf.mxu0
      %1824 = vmatprep.mubr.f32.mxu0 0.0
      %1825 = vmatmul.mubr.f32.gmra.mxu0 %v1601
      %v1826 = vpop.f32.mrf.mxu0
      %v1827 = vadd.f32 0.0, %v1826
      %v1828 = vpop.f32.mrf.mxu0
      %1829 = vmatprep.mubr.f32.mxu0 0.0
      %1830 = vmatmul.mubr.f32.gmra.mxu0 %v1604
      %v1831 = vpop.f32.mrf.mxu0
      %v1832 = vadd.f32 0.0, %v1831
      %v1833 = vpop.f32.mrf.mxu0
      %1834 = vdwg.mxu0
      %vm1835 = vcmask 523264
      %1836 = vst.msk [vmem:[%s177] sm:$0xff] %vm1835, %v1677
      %1837 = vst.msk [vmem:[%s177 + $0x8] sm:$0xff] %vm1835, %v1682
      %1838 = vst.msk [vmem:[%s177 + $0x10] sm:$0xff] %vm1835, %v1687
      %1839 = vst.msk [vmem:[%s177 + $0x18] sm:$0xff] %vm1835, %v1692
      %1840 = vst.msk [vmem:[%s177 + $0x20] sm:$0xff] %vm1835, %v1697
      %1841 = vst.msk [vmem:[%s177 + $0x28] sm:$0xff] %vm1835, %v1702
      %1842 = vst.msk [vmem:[%s177 + $0x30] sm:$0xff] %vm1835, %v1707
      %1843 = vst.msk [vmem:[%s177 + $0x38] sm:$0xff] %vm1835, %v1712
      %1844 = vst.msk [vmem:[%s177 + $0x40] sm:$0xff] %vm1835, %v1717
      %1845 = vst.msk [vmem:[%s177 + $0x48] sm:$0xff] %vm1835, %v1722
      %1846 = vst.msk [vmem:[%s177 + $0x50] sm:$0xff] %vm1835, %v1727
      %1847 = vst.msk [vmem:[%s177 + $0x58] sm:$0xff] %vm1835, %v1732
      %1848 = vst.msk [vmem:[%s177 + $0x60] sm:$0xff] %vm1835, %v1737
      %1849 = vst.msk [vmem:[%s177 + $0x68] sm:$0xff] %vm1835, %v1742
      %1850 = vst.msk [vmem:[%s177 + $0x70] sm:$0xff] %vm1835, %v1747
      %1851 = vst.msk [vmem:[%s177 + $0x78] sm:$0xff] %vm1835, %v1752
      %1852 = vst.msk [vmem:[%s177 + $0x80] sm:$0xff] %vm1835, %v1757
      %1853 = vst.msk [vmem:[%s177 + $0x88] sm:$0xff] %vm1835, %v1762
      %1854 = vst.msk [vmem:[%s177 + $0x90] sm:$0xff] %vm1835, %v1767
      %1855 = vst.msk [vmem:[%s177 + $0x98] sm:$0xff] %vm1835, %v1772
      %1856 = vst.msk [vmem:[%s177 + $0xa0] sm:$0xff] %vm1835, %v1777
      %1857 = vst.msk [vmem:[%s177 + $0xa8] sm:$0xff] %vm1835, %v1782
      %1858 = vst.msk [vmem:[%s177 + $0xb0] sm:$0xff] %vm1835, %v1787
      %1859 = vst.msk [vmem:[%s177 + $0xb8] sm:$0xff] %vm1835, %v1792
      %1860 = vst.msk [vmem:[%s177 + $0xc0] sm:$0xff] %vm1835, %v1797
      %1861 = vst.msk [vmem:[%s177 + $0xc8] sm:$0xff] %vm1835, %v1802
      %1862 = vst.msk [vmem:[%s177 + $0xd0] sm:$0xff] %vm1835, %v1807
      %1863 = vst.msk [vmem:[%s177 + $0xd8] sm:$0xff] %vm1835, %v1812
      %1864 = vst.msk [vmem:[%s177 + $0xe0] sm:$0xff] %vm1835, %v1817
      %1865 = vst.msk [vmem:[%s177 + $0xe8] sm:$0xff] %vm1835, %v1822
      %1866 = vst.msk [vmem:[%s177 + $0xf0] sm:$0xff] %vm1835, %v1827
      %1867 = vst.msk [vmem:[%s177 + $0xf8] sm:$0xff] %vm1835, %v1832
      %v1868 = vsel %vm1835, %v1677, 0.0
      %v1869 = vsel %vm1835, %v1682, 0.0
      %v1870 = vadd.f32 %v1868, %v1869
      %v1871 = vsel %vm1835, %v1687, 0.0
      %v1872 = vadd.f32 %v1870, %v1871
      %v1873 = vsel %vm1835, %v1692, 0.0
      %v1874 = vadd.f32 %v1872, %v1873
      %v1875 = vsel %vm1835, %v1697, 0.0
      %v1876 = vadd.f32 %v1874, %v1875
      %v1877 = vsel %vm1835, %v1702, 0.0
      %v1878 = vadd.f32 %v1876, %v1877
      %v1879 = vsel %vm1835, %v1707, 0.0
      %v1880 = vadd.f32 %v1878, %v1879
      %v1881 = vsel %vm1835, %v1712, 0.0
      %v1882 = vadd.f32 %v1880, %v1881
      %v1883 = vsel %vm1835, %v1717, 0.0
      %v1884 = vadd.f32 %v1882, %v1883
      %v1885 = vsel %vm1835, %v1722, 0.0
      %v1886 = vadd.f32 %v1884, %v1885
      %v1887 = vsel %vm1835, %v1727, 0.0
      %v1888 = vadd.f32 %v1886, %v1887
      %v1889 = vsel %vm1835, %v1732, 0.0
      %v1890 = vadd.f32 %v1888, %v1889
      %v1891 = vsel %vm1835, %v1737, 0.0
      %v1892 = vadd.f32 %v1890, %v1891
      %v1893 = vsel %vm1835, %v1742, 0.0
      %v1894 = vadd.f32 %v1892, %v1893
      %v1895 = vsel %vm1835, %v1747, 0.0
      %v1896 = vadd.f32 %v1894, %v1895
      %v1897 = vsel %vm1835, %v1752, 0.0
      %v1898 = vadd.f32 %v1896, %v1897
      %v1899 = vsel %vm1835, %v1757, 0.0
      %v1900 = vadd.f32 %v1898, %v1899
      %v1901 = vsel %vm1835, %v1762, 0.0
      %v1902 = vadd.f32 %v1900, %v1901
      %v1903 = vsel %vm1835, %v1767, 0.0
      %v1904 = vadd.f32 %v1902, %v1903
      %v1905 = vsel %vm1835, %v1772, 0.0
      %v1906 = vadd.f32 %v1904, %v1905
      %v1907 = vsel %vm1835, %v1777, 0.0
      %v1908 = vadd.f32 %v1906, %v1907
      %v1909 = vsel %vm1835, %v1782, 0.0
      %v1910 = vadd.f32 %v1908, %v1909
      %v1911 = vsel %vm1835, %v1787, 0.0
      %v1912 = vadd.f32 %v1910, %v1911
      %v1913 = vsel %vm1835, %v1792, 0.0
      %v1914 = vadd.f32 %v1912, %v1913
      %v1915 = vsel %vm1835, %v1797, 0.0
      %v1916 = vadd.f32 %v1914, %v1915
      %v1917 = vsel %vm1835, %v1802, 0.0
      %v1918 = vadd.f32 %v1916, %v1917
      %v1919 = vsel %vm1835, %v1807, 0.0
      %v1920 = vadd.f32 %v1918, %v1919
      %v1921 = vsel %vm1835, %v1812, 0.0
      %v1922 = vadd.f32 %v1920, %v1921
      %v1923 = vsel %vm1835, %v1817, 0.0
      %v1924 = vadd.f32 %v1922, %v1923
      %v1925 = vsel %vm1835, %v1822, 0.0
      %v1926 = vadd.f32 %v1924, %v1925
      %v1927 = vsel %vm1835, %v1827, 0.0
      %v1928 = vadd.f32 %v1926, %v1927
      %v1929 = vsel %vm1835, %v1832, 0.0
      %v1930 = vadd.f32 %v1928, %v1929
      %v1931 = vrot.slane %v1930, 4
      %v1932 = vadd.f32 %v1930, %v1931
      %v1933 = vrot.slane %v1932, 2
      %v1934 = vadd.f32 %v1932, %v1933
      %v1935 = vrot.slane %v1934, 1
      %v1936 = vadd.f32 %v1934, %v1935
      %v1937 = vmul.f32 %v1677, %v1677
      %v1938 = vmul.f32 %v1682, %v1682
      %v1939 = vmul.f32 %v1687, %v1687
      %v1940 = vmul.f32 %v1692, %v1692
      %v1941 = vmul.f32 %v1697, %v1697
      %v1942 = vmul.f32 %v1702, %v1702
      %v1943 = vmul.f32 %v1707, %v1707
      %v1944 = vmul.f32 %v1712, %v1712
      %v1945 = vmul.f32 %v1717, %v1717
      %v1946 = vmul.f32 %v1722, %v1722
      %v1947 = vmul.f32 %v1727, %v1727
      %v1948 = vmul.f32 %v1732, %v1732
      %v1949 = vmul.f32 %v1737, %v1737
      %v1950 = vmul.f32 %v1742, %v1742
      %v1951 = vmul.f32 %v1747, %v1747
      %v1952 = vmul.f32 %v1752, %v1752
      %v1953 = vmul.f32 %v1757, %v1757
      %v1954 = vmul.f32 %v1762, %v1762
      %v1955 = vmul.f32 %v1767, %v1767
      %v1956 = vmul.f32 %v1772, %v1772
      %v1957 = vmul.f32 %v1777, %v1777
      %v1958 = vmul.f32 %v1782, %v1782
      %v1959 = vmul.f32 %v1787, %v1787
      %v1960 = vmul.f32 %v1792, %v1792
      %v1961 = vmul.f32 %v1797, %v1797
      %v1962 = vmul.f32 %v1802, %v1802
      %v1963 = vmul.f32 %v1807, %v1807
      %v1964 = vmul.f32 %v1812, %v1812
      %v1965 = vmul.f32 %v1817, %v1817
      %v1966 = vmul.f32 %v1822, %v1822
      %v1967 = vmul.f32 %v1827, %v1827
      %v1968 = vmul.f32 %v1832, %v1832
      %v1969 = vsel %vm1835, %v1937, 0.0
      %v1970 = vsel %vm1835, %v1938, 0.0
      %v1971 = vadd.f32 %v1969, %v1970
      %v1972 = vsel %vm1835, %v1939, 0.0
      %v1973 = vadd.f32 %v1971, %v1972
      %v1974 = vsel %vm1835, %v1940, 0.0
      %v1975 = vadd.f32 %v1973, %v1974
      %v1976 = vsel %vm1835, %v1941, 0.0
      %v1977 = vadd.f32 %v1975, %v1976
      %v1978 = vsel %vm1835, %v1942, 0.0
      %v1979 = vadd.f32 %v1977, %v1978
      %v1980 = vsel %vm1835, %v1943, 0.0
      %v1981 = vadd.f32 %v1979, %v1980
      %v1982 = vsel %vm1835, %v1944, 0.0
      %v1983 = vadd.f32 %v1981, %v1982
      %v1984 = vsel %vm1835, %v1945, 0.0
      %v1985 = vadd.f32 %v1983, %v1984
      %v1986 = vsel %vm1835, %v1946, 0.0
      %v1987 = vadd.f32 %v1985, %v1986
      %v1988 = vsel %vm1835, %v1947, 0.0
      %v1989 = vadd.f32 %v1987, %v1988
      %v1990 = vsel %vm1835, %v1948, 0.0
      %v1991 = vadd.f32 %v1989, %v1990
      %v1992 = vsel %vm1835, %v1949, 0.0
      %v1993 = vadd.f32 %v1991, %v1992
      %v1994 = vsel %vm1835, %v1950, 0.0
      %v1995 = vadd.f32 %v1993, %v1994
      %v1996 = vsel %vm1835, %v1951, 0.0
      %v1997 = vadd.f32 %v1995, %v1996
      %v1998 = vsel %vm1835, %v1952, 0.0
      %v1999 = vadd.f32 %v1997, %v1998
      %v2000 = vsel %vm1835, %v1953, 0.0
      %v2001 = vadd.f32 %v1999, %v2000
      %v2002 = vsel %vm1835, %v1954, 0.0
      %v2003 = vadd.f32 %v2001, %v2002
      %v2004 = vsel %vm1835, %v1955, 0.0
      %v2005 = vadd.f32 %v2003, %v2004
      %v2006 = vsel %vm1835, %v1956, 0.0
      %v2007 = vadd.f32 %v2005, %v2006
      %v2008 = vsel %vm1835, %v1957, 0.0
      %v2009 = vadd.f32 %v2007, %v2008
      %v2010 = vsel %vm1835, %v1958, 0.0
      %v2011 = vadd.f32 %v2009, %v2010
      %v2012 = vsel %vm1835, %v1959, 0.0
      %v2013 = vadd.f32 %v2011, %v2012
      %v2014 = vsel %vm1835, %v1960, 0.0
      %v2015 = vadd.f32 %v2013, %v2014
      %v2016 = vsel %vm1835, %v1961, 0.0
      %v2017 = vadd.f32 %v2015, %v2016
      %v2018 = vsel %vm1835, %v1962, 0.0
      %v2019 = vadd.f32 %v2017, %v2018
      %v2020 = vsel %vm1835, %v1963, 0.0
      %v2021 = vadd.f32 %v2019, %v2020
      %v2022 = vsel %vm1835, %v1964, 0.0
      %v2023 = vadd.f32 %v2021, %v2022
      %v2024 = vsel %vm1835, %v1965, 0.0
      %v2025 = vadd.f32 %v2023, %v2024
      %v2026 = vsel %vm1835, %v1966, 0.0
      %v2027 = vadd.f32 %v2025, %v2026
      %v2028 = vsel %vm1835, %v1967, 0.0
      %v2029 = vadd.f32 %v2027, %v2028
      %v2030 = vsel %vm1835, %v1968, 0.0
      %v2031 = vadd.f32 %v2029, %v2030
      %v2032 = vrot.slane %v2031, 4
      %v2033 = vadd.f32 %v2031, %v2032
      %v2034 = vrot.slane %v2033, 2
      %v2035 = vadd.f32 %v2033, %v2034
      %v2036 = vrot.slane %v2035, 1
      %v2037 = vadd.f32 %v2035, %v2036
      %vm2038 = vcmask 1040384
      %v2039 = vsel %vm2038, %v1936, %v2037
      %vm2040 = vcmask 517120
      %2041 = vst.msk [vmem:[%s181] sm:$0x3] %vm2040, %v2039
      %p2042 = scmp.lt.s32.totalorder %s15, 1
      %s2043 = scalar_select %p2042, %s15, 1
      %s2044 = smul.addr %s2043, 32
      %s2045 = smul.addr %s2044, 8
      %s2046 = scalar_lea.vmem %s2, %s2045
      %p2047 = scmp.lt.s32.totalorder %s15, 1
      %s2048 = scalar_select %p2047, %s15, 1
      %s2049 = smul.addr %s2048, 2
      %s2050 = scalar_lea.vmem %s3, %s2049
      // Predicated region
      $region29: #{deep_supervision_block_v2.3} parent=27 // pred_check
        %p2051 = pneg %p80
      $region30: #{deep_supervision_block_v2.3} parent=27 // pred_check_branch
        %2053 = sbr.rel (%p2051) target = $region32
      $region31: #{deep_supervision_block_v2.3} parent=27 // pred_region
        _
      $region32: #{deep_supervision_block_v2.3} parent=27 // pred_fallthru
        _
      // Predicated region
      $region33: #{deep_supervision_block_v2.3} parent=27 // pred_check
        %p2054 = pneg %p106
      $region34: #{deep_supervision_block_v2.3} parent=27 // pred_check_branch
        %2056 = sbr.rel (%p2054) target = $region36
      $region35: #{deep_supervision_block_v2.3} parent=27 // pred_region
        _
      $region36: #{deep_supervision_block_v2.3} parent=27 // pred_fallthru
        _
    $region28: #{deep_supervision_block_v2.3} parent=5 // pred_fallthru
      _
    %p2057 = scmp.le.s32.totalorder 2, %s10
    // Predicated region
    $region37: #{deep_supervision_block_v2.3} parent=5 // pred_check
      %p2058 = pneg %p2057
    $region38: #{deep_supervision_block_v2.3} parent=5 // pred_check_branch
      %2060 = sbr.rel (%p2058) target = $region40
    $region39: #{deep_supervision_block_v2.3} parent=5 // pred_region
      %s2061 = ssub.s32 %s10, 2
      // Predicated region
      $region41: #{deep_supervision_block_v2.3} parent=39 // pred_check
        %p2062 = pneg %p86
      $region42: #{deep_supervision_block_v2.3} parent=39 // pred_check_branch
        %2064 = sbr.rel (%p2062) target = $region44
      $region43: #{deep_supervision_block_v2.3} parent=39 // pred_region
        %p2065 = scmp.lt.s32.totalorder %s16, 1
        %s2066 = scalar_select %p2065, %s16, 1
        %s2067 = smul.addr %s2066, 32
        %s2068 = smul.addr %s2067, 8
        %s2069 = scalar_lea.vmem %s2, %s2068
      $region44: #{deep_supervision_block_v2.3} parent=39 // pred_fallthru
        _
      // Predicated region
      $region45: #{deep_supervision_block_v2.3} parent=39 // pred_check
        %p2070 = pneg %p112
      $region46: #{deep_supervision_block_v2.3} parent=39 // pred_check_branch
        %2072 = sbr.rel (%p2070) target = $region48
      $region47: #{deep_supervision_block_v2.3} parent=39 // pred_region
        %p2073 = scmp.lt.s32.totalorder %s16, 1
        %s2074 = scalar_select %p2073, %s16, 1
        %s2075 = smul.addr %s2074, 2
        %s2076 = scalar_lea.vmem %s3, %s2075
      $region48: #{deep_supervision_block_v2.3} parent=39 // pred_fallthru
        _
    $region40: #{deep_supervision_block_v2.3} parent=5 // pred_fallthru
      _
  $region6: #{deep_supervision_block_v2.3} parent=0 // loop_footer
    %s14 = sadd.s32 1, %s10
  $region7: #{deep_supervision_block_v2.3} parent=0 // loop_footer_branch
    %9 = sbr.rel target = $region3
  $region8: #{deep_supervision_block_v2.3} parent=0 // loop_exit
    _

// kernel: deep_supervision_block_v2.4
$region0: #{deep_supervision_block_v2.4}
  #allocation0 [shape = 'u32[]', space=smem, size = 0x4, offset = 0x4, fixed_abs, tag = 'smem constant byte address 0x4 - core index']
  #allocation1 [shape = 'u32[144,128]{1,0:T(1,128)}', space=vmem, size = 0x12000, scoped, tag = 'internal scratch']
  %s0 = inlined_call_operand.vmem [shape: f32[2,18,18,64], index: 0, kind: input, shape index: {}]
  %s1 = inlined_call_operand.vmem [shape: f32[18,18,1], index: 1, kind: input, shape index: {}]
  %s2 = inlined_call_operand.vmem [shape: f32[1,64], index: 2, kind: input, shape index: {}]
  %s3 = inlined_call_operand.vmem [shape: f32[1,64], index: 3, kind: input, shape index: {}]
  %s4 = inlined_call_operand.vmem [shape: f32[576,4], index: 4, kind: input, shape index: {}]
  %s5 = inlined_call_operand.vmem [shape: f32[2,256,4], index: 5, kind: output, shape index: {0}]
  %s6 = inlined_call_operand.vmem [shape: f32[2,2,4], index: 6, kind: output, shape index: {1}]
  %7 = xla_tuple %s5, %s6
  %s8 = sld [smem:[#allocation0]]
  $region61: #{deep_supervision_block_v2.4} parent=0
    _
  %s10 = ssub.s32 1, %s8
  %s11 = scalar_select 0, %s10, %s8
  loop: start=0, step=1, limit=4
  $region2: #{deep_supervision_block_v2.4} parent=0 // loop_pre_header
    _
  $region3: #{deep_supervision_block_v2.4} parent=0 // loop_header
    %s13 = sphi 0, %s17
    %p14 = scmp.ge.s32.totalorder %s13, 4
    %s23 = sphi 0, %s25
    %s26 = sphi 0, %s23
    %s27 = sphi 0, %s26
    %s43 = sphi 0, %s27
    %s47 = sphi 0, %s47
    %s49 = sphi 0, %s47
    %s50 = sphi 0, %s49
    %s64 = sphi 0, %s50
    %s68 = sphi 0, %s68
    %s70 = sphi 0, %s68
    %s71 = sphi 0, %s70
    %s85 = sphi 0, %s71
    %s89 = sphi 0, %s89
    %s91 = sphi 0, %s89
    %s92 = sphi 0, %s91
    %s106 = sphi 0, %s92
    %s110 = sphi 0, %s110
    %s112 = sphi 0, %s110
    %s113 = sphi 0, %s112
    %s127 = sphi 0, %s113
    %s133 = sphi 0, %s135
    %s136 = sphi 0, %s133
    %s137 = sphi 0, %s136
    %s153 = sphi 0, %s137
    %s159 = sphi 0, %s161
    %s162 = sphi 0, %s159
    %s163 = sphi 0, %s162
    %s179 = sphi 0, %s163
  $region4: #{deep_supervision_block_v2.4} parent=0 // loop_header_branch
    %16 = sbr.rel (%p14) target = $region8
  $region5: #{deep_supervision_block_v2.4} parent=0 // loop_body
    %s18 = ssub.s32 %s13, 1
    %s19 = ssub.s32 %s13, 2
    %s20 = sadd.s32 %s13, 1
    %s21 = ssub.s32 %s13, %s20
    %p22 = scmp.eq.s32.totalorder %s21, 0
    %s24 = sadd.s32 %s23, 1
    %s25 = scalar_select %p22, %s23, %s24
    %p28 = pneg %p22
    %p29 = scmp.eq.s32.totalorder %s13, 1
    %p30 = por %p28, %p29
    %p31 = scmp.ne.s32.totalorder %s23, %s26
    %p32 = scmp.eq.s32.totalorder %s13, 0
    %p33 = por %p31, %p32
    %p34 = scmp.ne.s32.totalorder %s23, %s26
    %p35 = scmp.eq.s32.totalorder %s18, 1
    %p36 = por %p34, %p35
    %p37 = scmp.ne.s32.totalorder %s26, %s27
    %p38 = scmp.eq.s32.totalorder %s18, 0
    %p39 = por %p37, %p38
    %p40 = scmp.ne.s32.totalorder %s26, %s27
    %p41 = scmp.eq.s32.totalorder %s19, 1
    %p42 = por %p40, %p41
    %p44 = scmp.ne.s32.totalorder %s27, %s43
    %p45 = scmp.eq.s32.totalorder %s19, 0
    %p46 = por %p44, %p45
    %s48 = sadd.s32 %s47, 1
    %p51 = scmp.eq.s32.totalorder %s13, 1
    %p52 = scmp.ne.s32.totalorder %s47, %s49
    %p53 = scmp.eq.s32.totalorder %s13, 0
    %p54 = por %p52, %p53
    %p55 = scmp.ne.s32.totalorder %s47, %s49
    %p56 = scmp.eq.s32.totalorder %s18, 1
    %p57 = por %p55, %p56
    %p58 = scmp.ne.s32.totalorder %s49, %s50
    %p59 = scmp.eq.s32.totalorder %s18, 0
    %p60 = por %p58, %p59
    %p61 = scmp.ne.s32.totalorder %s49, %s50
    %p62 = scmp.eq.s32.totalorder %s19, 1
    %p63 = por %p61, %p62
    %p65 = scmp.ne.s32.totalorder %s50, %s64
    %p66 = scmp.eq.s32.totalorder %s19, 0
    %p67 = por %p65, %p66
    %s69 = sadd.s32 %s68, 1
    %p72 = scmp.eq.s32.totalorder %s13, 1
    %p73 = scmp.ne.s32.totalorder %s68, %s70
    %p74 = scmp.eq.s32.totalorder %s13, 0
    %p75 = por %p73, %p74
    %p76 = scmp.ne.s32.totalorder %s68, %s70
    %p77 = scmp.eq.s32.totalorder %s18, 1
    %p78 = por %p76, %p77
    %p79 = scmp.ne.s32.totalorder %s70, %s71
    %p80 = scmp.eq.s32.totalorder %s18, 0
    %p81 = por %p79, %p80
    %p82 = scmp.ne.s32.totalorder %s70, %s71
    %p83 = scmp.eq.s32.totalorder %s19, 1
    %p84 = por %p82, %p83
    %p86 = scmp.ne.s32.totalorder %s71, %s85
    %p87 = scmp.eq.s32.totalorder %s19, 0
    %p88 = por %p86, %p87
    %s90 = sadd.s32 %s89, 1
    %p93 = scmp.eq.s32.totalorder %s13, 1
    %p94 = scmp.ne.s32.totalorder %s89, %s91
    %p95 = scmp.eq.s32.totalorder %s13, 0
    %p96 = por %p94, %p95
    %p97 = scmp.ne.s32.totalorder %s89, %s91
    %p98 = scmp.eq.s32.totalorder %s18, 1
    %p99 = por %p97, %p98
    %p100 = scmp.ne.s32.totalorder %s91, %s92
    %p101 = scmp.eq.s32.totalorder %s18, 0
    %p102 = por %p100, %p101
    %p103 = scmp.ne.s32.totalorder %s91, %s92
    %p104 = scmp.eq.s32.totalorder %s19, 1
    %p105 = por %p103, %p104
    %p107 = scmp.ne.s32.totalorder %s92, %s106
    %p108 = scmp.eq.s32.totalorder %s19, 0
    %p109 = por %p107, %p108
    %s111 = sadd.s32 %s110, 1
    %p114 = scmp.eq.s32.totalorder %s13, 1
    %p115 = scmp.ne.s32.totalorder %s110, %s112
    %p116 = scmp.eq.s32.totalorder %s13, 0
    %p117 = por %p115, %p116
    %p118 = scmp.ne.s32.totalorder %s110, %s112
    %p119 = scmp.eq.s32.totalorder %s18, 1
    %p120 = por %p118, %p119
    %p121 = scmp.ne.s32.totalorder %s112, %s113
    %p122 = scmp.eq.s32.totalorder %s18, 0
    %p123 = por %p121, %p122
    %p124 = scmp.ne.s32.totalorder %s112, %s113
    %p125 = scmp.eq.s32.totalorder %s19, 1
    %p126 = por %p124, %p125
    %p128 = scmp.ne.s32.totalorder %s113, %s127
    %p129 = scmp.eq.s32.totalorder %s19, 0
    %p130 = por %p128, %p129
    %s131 = ssub.s32 %s13, %s20
    %p132 = scmp.eq.s32.totalorder %s131, 0
    %s134 = sadd.s32 %s133, 1
    %s135 = scalar_select %p132, %s133, %s134
    %p138 = pneg %p132
    %p139 = scmp.eq.s32.totalorder %s13, 1
    %p140 = por %p138, %p139
    %p141 = scmp.ne.s32.totalorder %s133, %s136
    %p142 = scmp.eq.s32.totalorder %s13, 0
    %p143 = por %p141, %p142
    %p144 = scmp.ne.s32.totalorder %s133, %s136
    %p145 = scmp.eq.s32.totalorder %s18, 1
    %p146 = por %p144, %p145
    %p147 = scmp.ne.s32.totalorder %s136, %s137
    %p148 = scmp.eq.s32.totalorder %s18, 0
    %p149 = por %p147, %p148
    %p150 = scmp.ne.s32.totalorder %s136, %s137
    %p151 = scmp.eq.s32.totalorder %s19, 1
    %p152 = por %p150, %p151
    %p154 = scmp.ne.s32.totalorder %s137, %s153
    %p155 = scmp.eq.s32.totalorder %s19, 0
    %p156 = por %p154, %p155
    %s157 = ssub.s32 %s13, %s20
    %p158 = scmp.eq.s32.totalorder %s157, 0
    %s160 = sadd.s32 %s159, 1
    %s161 = scalar_select %p158, %s159, %s160
    %p164 = pneg %p158
    %p165 = scmp.eq.s32.totalorder %s13, 1
    %p166 = por %p164, %p165
    %p167 = scmp.ne.s32.totalorder %s159, %s162
    %p168 = scmp.eq.s32.totalorder %s13, 0
    %p169 = por %p167, %p168
    %p170 = scmp.ne.s32.totalorder %s159, %s162
    %p171 = scmp.eq.s32.totalorder %s18, 1
    %p172 = por %p170, %p171
    %p173 = scmp.ne.s32.totalorder %s162, %s163
    %p174 = scmp.eq.s32.totalorder %s18, 0
    %p175 = por %p173, %p174
    %p176 = scmp.ne.s32.totalorder %s162, %s163
    %p177 = scmp.eq.s32.totalorder %s19, 1
    %p178 = por %p176, %p177
    %p180 = scmp.ne.s32.totalorder %s163, %s179
    %p181 = scmp.eq.s32.totalorder %s19, 0
    %p182 = por %p180, %p181
    %p183 = scmp.le.s32.totalorder 1, %s13
    %p184 = scmp.lt.s32.totalorder %s13, 3
    %p185 = pnand %p183, %p184
    %p186 = pneg %p185
    // Predicated region
    $region9: #{deep_supervision_block_v2.4} parent=5 // pred_check
      _
    $region10: #{deep_supervision_block_v2.4} parent=5 // pred_check_branch
      %188 = sbr.rel (%p185) target = $region12
    $region11: #{deep_supervision_block_v2.4} parent=5 // pred_region
      %s189 = ssub.s32 %s13, 1
      // Predicated region
      $region13: #{deep_supervision_block_v2.4} parent=11 // pred_check
        %p190 = pneg %p60
      $region14: #{deep_supervision_block_v2.4} parent=11 // pred_check_branch
        %192 = sbr.rel (%p190) target = $region16
      $region15: #{deep_supervision_block_v2.4} parent=11 // pred_region
        _
      $region16: #{deep_supervision_block_v2.4} parent=11 // pred_fallthru
        _
      // Predicated region
      $region17: #{deep_supervision_block_v2.4} parent=11 // pred_check
        %p193 = pneg %p81
      $region18: #{deep_supervision_block_v2.4} parent=11 // pred_check_branch
        %195 = sbr.rel (%p193) target = $region20
      $region19: #{deep_supervision_block_v2.4} parent=11 // pred_region
        _
      $region20: #{deep_supervision_block_v2.4} parent=11 // pred_fallthru
        _
      // Predicated region
      $region21: #{deep_supervision_block_v2.4} parent=11 // pred_check
        %p196 = pneg %p102
      $region22: #{deep_supervision_block_v2.4} parent=11 // pred_check_branch
        %198 = sbr.rel (%p196) target = $region24
      $region23: #{deep_supervision_block_v2.4} parent=11 // pred_region
        _
      $region24: #{deep_supervision_block_v2.4} parent=11 // pred_fallthru
        _
      // Predicated region
      $region25: #{deep_supervision_block_v2.4} parent=11 // pred_check
        %p199 = pneg %p123
      $region26: #{deep_supervision_block_v2.4} parent=11 // pred_check_branch
        %201 = sbr.rel (%p199) target = $region28
      $region27: #{deep_supervision_block_v2.4} parent=11 // pred_region
        _
      $region28: #{deep_supervision_block_v2.4} parent=11 // pred_fallthru
        _
    $region12: #{deep_supervision_block_v2.4} parent=5 // pred_fallthru
      _
    %p202 = scmp.lt.s32.totalorder %s13, 2
    // Predicated region
    $region29: #{deep_supervision_block_v2.4} parent=5 // pred_check
      %p203 = pneg %p202
    $region30: #{deep_supervision_block_v2.4} parent=5 // pred_check_branch
      %205 = sbr.rel (%p203) target = $region32
    $region31: #{deep_supervision_block_v2.4} parent=5 // pred_region
      // Predicated region
      $region33: #{deep_supervision_block_v2.4} parent=31 // pred_check
        %p206 = pneg %p33
      $region34: #{deep_supervision_block_v2.4} parent=31 // pred_check_branch
        %208 = sbr.rel (%p206) target = $region36
      $region35: #{deep_supervision_block_v2.4} parent=31 // pred_region
        %p209 = scmp.lt.s32.totalorder %s13, 1
        %s210 = scalar_select %p209, %s13, 1
        %s211 = smul.addr %s210, 54
        %s212 = smul.addr %s211, 8
        %s213 = scalar_lea.vmem %s0, %s212
      $region36: #{deep_supervision_block_v2.4} parent=31 // pred_fallthru
        _
    $region32: #{deep_supervision_block_v2.4} parent=5 // pred_fallthru
      _
    %p214 = scmp.le.s32.totalorder 1, %s13
    %p215 = scmp.lt.s32.totalorder %s13, 3
    %p216 = pnand %p214, %p215
    %p217 = pneg %p216
    // Predicated region
    $region37: #{deep_supervision_block_v2.4} parent=5 // pred_check
      _
    $region38: #{deep_supervision_block_v2.4} parent=5 // pred_check_branch
      %219 = sbr.rel (%p216) target = $region40
    $region39: #{deep_supervision_block_v2.4} parent=5 // pred_region
      %s220 = ssub.s32 %s13, 1
      %p221 = scmp.lt.s32.totalorder %s18, 1
      %s222 = scalar_select %p221, %s18, 1
      %s223 = smul.addr %s222, 54
      %s224 = smul.addr %s223, 8
      %s225 = scalar_lea.vmem %s0, %s224
      %p226 = pneg %p39
      %p227 = pneg %p36
      %p228 = pneg %p60
      %p229 = pneg %p57
      %p230 = pneg %p81
      %p231 = pneg %p78
      %p232 = pneg %p102
      %p233 = pneg %p99
      %p234 = pneg %p123
      %p235 = pneg %p120
      %p236 = pneg %p149
      %p237 = pneg %p146
      %p238 = scmp.lt.s32.totalorder %s18, 1
      %s239 = scalar_select %p238, %s18, 1
      %s240 = smul.addr %s239, 32
      %s241 = smul.addr %s240, 8
      %s242 = scalar_lea.vmem %s5, %s241
      %p243 = pneg %p175
      %p244 = pneg %p172
      %p245 = scmp.lt.s32.totalorder %s18, 1
      %s246 = scalar_select %p245, %s18, 1
      %s247 = smul.addr %s246, 2
      %s248 = scalar_lea.vmem %s6, %s247
      %p249 = scmp.lt.s32.totalorder %s18, 1
      %s250 = scalar_select %p249, %s18, 1
      %s251 = smul.addr %s250, 54
      %s252 = smul.addr %s251, 8
      %s253 = scalar_lea.vmem %s0, %s252
      %p254 = scmp.lt.s32.totalorder %s18, 1
      %s255 = scalar_select %p254, %s18, 1
      %s256 = smul.addr %s255, 32
      %s257 = smul.addr %s256, 8
      %s258 = scalar_lea.vmem %s5, %s257
      %p259 = scmp.lt.s32.totalorder %s18, 1
      %s260 = scalar_select %p259, %s18, 1
      %s261 = smul.addr %s260, 2
      %s262 = scalar_lea.vmem %s6, %s261
      %v263 = vld [vmem:[%s253] sm:$0xff]
      %v264 = vld [vmem:[%s253 + $0x8] sm:$0xff]
      %v265 = vld [vmem:[%s253 + $0x10] sm:$0x3]
      %v266 = vld [vmem:[%s253 + $0x18] sm:$0xff]
      %v267 = vld [vmem:[%s253 + $0x20] sm:$0xff]
      %v268 = vld [vmem:[%s253 + $0x28] sm:$0x3]
      %v269 = vld [vmem:[%s253 + $0x30] sm:$0xff]
      %v270 = vld [vmem:[%s253 + $0x38] sm:$0xff]
      %v271 = vld [vmem:[%s253 + $0x40] sm:$0x3]
      %v272 = vld [vmem:[%s253 + $0x48] sm:$0xff]
      %v273 = vld [vmem:[%s253 + $0x50] sm:$0xff]
      %v274 = vld [vmem:[%s253 + $0x58] sm:$0x3]
      %v275 = vld [vmem:[%s253 + $0x60] sm:$0xff]
      %v276 = vld [vmem:[%s253 + $0x68] sm:$0xff]
      %v277 = vld [vmem:[%s253 + $0x70] sm:$0x3]
      %v278 = vld [vmem:[%s253 + $0x78] sm:$0xff]
      %v279 = vld [vmem:[%s253 + $0x80] sm:$0xff]
      %v280 = vld [vmem:[%s253 + $0x88] sm:$0x3]
      %v281 = vld [vmem:[%s253 + $0x90] sm:$0xff]
      %v282 = vld [vmem:[%s253 + $0x98] sm:$0xff]
      %v283 = vld [vmem:[%s253 + $0xa0] sm:$0x3]
      %v284 = vld [vmem:[%s253 + $0xa8] sm:$0xff]
      %v285 = vld [vmem:[%s253 + $0xb0] sm:$0xff]
      %v286 = vld [vmem:[%s253 + $0xb8] sm:$0x3]
      %v287 = vld [vmem:[%s253 + $0xc0] sm:$0xff]
      %v288 = vld [vmem:[%s253 + $0xc8] sm:$0xff]
      %v289 = vld [vmem:[%s253 + $0xd0] sm:$0x3]
      %v290 = vld [vmem:[%s253 + $0xd8] sm:$0xff]
      %v291 = vld [vmem:[%s253 + $0xe0] sm:$0xff]
      %v292 = vld [vmem:[%s253 + $0xe8] sm:$0x3]
      %v293 = vld [vmem:[%s253 + $0xf0] sm:$0xff]
      %v294 = vld [vmem:[%s253 + $0xf8] sm:$0xff]
      %v295 = vld [vmem:[%s253 + $0x100] sm:$0x3]
      %v296 = vld [vmem:[%s253 + $0x108] sm:$0xff]
      %v297 = vld [vmem:[%s253 + $0x110] sm:$0xff]
      %v298 = vld [vmem:[%s253 + $0x118] sm:$0x3]
      %v299 = vld [vmem:[%s253 + $0x120] sm:$0xff]
      %v300 = vld [vmem:[%s253 + $0x128] sm:$0xff]
      %v301 = vld [vmem:[%s253 + $0x130] sm:$0x3]
      %v302 = vld [vmem:[%s253 + $0x138] sm:$0xff]
      %v303 = vld [vmem:[%s253 + $0x140] sm:$0xff]
      %v304 = vld [vmem:[%s253 + $0x148] sm:$0x3]
      %v305 = vld [vmem:[%s253 + $0x150] sm:$0xff]
      %v306 = vld [vmem:[%s253 + $0x158] sm:$0xff]
      %v307 = vld [vmem:[%s253 + $0x160] sm:$0x3]
      %v308 = vld [vmem:[%s253 + $0x168] sm:$0xff]
      %v309 = vld [vmem:[%s253 + $0x170] sm:$0xff]
      %v310 = vld [vmem:[%s253 + $0x178] sm:$0x3]
      %v311 = vld [vmem:[%s253 + $0x180] sm:$0xff]
      %v312 = vld [vmem:[%s253 + $0x188] sm:$0xff]
      %v313 = vld [vmem:[%s253 + $0x190] sm:$0x3]
      %v314 = vld [vmem:[%s253 + $0x198] sm:$0xff]
      %v315 = vld [vmem:[%s253 + $0x1a0] sm:$0xff]
      %v316 = vld [vmem:[%s253 + $0x1a8] sm:$0x3]
      %v317 = vld [vmem:[%s2] sm:$0x1]
      %v319 = vlaneseq
      %v320 = vshrl.u32 %v319, 7
      %v321 = vsub.s32 0, %v320
      %v322 = vrot.slane %v317, %v321
      %v324 = vmul.f32 %v263, %v322
      %v325 = vmul.f32 %v264, %v322
      %v326 = vmul.f32 %v265, %v322
      %v327 = vmul.f32 %v266, %v322
      %v328 = vmul.f32 %v267, %v322
      %v329 = vmul.f32 %v268, %v322
      %v330 = vmul.f32 %v269, %v322
      %v331 = vmul.f32 %v270, %v322
      %v332 = vmul.f32 %v271, %v322
      %v333 = vmul.f32 %v272, %v322
      %v334 = vmul.f32 %v273, %v322
      %v335 = vmul.f32 %v274, %v322
      %v336 = vmul.f32 %v275, %v322
      %v337 = vmul.f32 %v276, %v322
      %v338 = vmul.f32 %v277, %v322
      %v339 = vmul.f32 %v278, %v322
      %v340 = vmul.f32 %v279, %v322
      %v341 = vmul.f32 %v280, %v322
      %v342 = vmul.f32 %v281, %v322
      %v343 = vmul.f32 %v282, %v322
      %v344 = vmul.f32 %v283, %v322
      %v345 = vmul.f32 %v284, %v322
      %v346 = vmul.f32 %v285, %v322
      %v347 = vmul.f32 %v286, %v322
      %v348 = vmul.f32 %v287, %v322
      %v349 = vmul.f32 %v288, %v322
      %v350 = vmul.f32 %v289, %v322
      %v351 = vmul.f32 %v290, %v322
      %v352 = vmul.f32 %v291, %v322
      %v353 = vmul.f32 %v292, %v322
      %v354 = vmul.f32 %v293, %v322
      %v355 = vmul.f32 %v294, %v322
      %v356 = vmul.f32 %v295, %v322
      %v357 = vmul.f32 %v296, %v322
      %v358 = vmul.f32 %v297, %v322
      %v359 = vmul.f32 %v298, %v322
      %v360 = vmul.f32 %v299, %v322
      %v361 = vmul.f32 %v300, %v322
      %v362 = vmul.f32 %v301, %v322
      %v363 = vmul.f32 %v302, %v322
      %v364 = vmul.f32 %v303, %v322
      %v365 = vmul.f32 %v304, %v322
      %v366 = vmul.f32 %v305, %v322
      %v367 = vmul.f32 %v306, %v322
      %v368 = vmul.f32 %v307, %v322
      %v369 = vmul.f32 %v308, %v322
      %v370 = vmul.f32 %v309, %v322
      %v371 = vmul.f32 %v310, %v322
      %v372 = vmul.f32 %v311, %v322
      %v373 = vmul.f32 %v312, %v322
      %v374 = vmul.f32 %v313, %v322
      %v375 = vmul.f32 %v314, %v322
      %v376 = vmul.f32 %v315, %v322
      %v377 = vmul.f32 %v316, %v322
      %v378 = vld [vmem:[%s3] sm:$0x1]
      %v380 = vlaneseq
      %v381 = vshrl.u32 %v380, 7
      %v382 = vsub.s32 0, %v381
      %v383 = vrot.slane %v378, %v382
      %v385 = vadd.f32 %v324, %v383
      %v386 = vadd.f32 %v325, %v383
      %v387 = vadd.f32 %v326, %v383
      %v388 = vadd.f32 %v327, %v383
      %v389 = vadd.f32 %v328, %v383
      %v390 = vadd.f32 %v329, %v383
      %v391 = vadd.f32 %v330, %v383
      %v392 = vadd.f32 %v331, %v383
      %v393 = vadd.f32 %v332, %v383
      %v394 = vadd.f32 %v333, %v383
      %v395 = vadd.f32 %v334, %v383
      %v396 = vadd.f32 %v335, %v383
      %v397 = vadd.f32 %v336, %v383
      %v398 = vadd.f32 %v337, %v383
      %v399 = vadd.f32 %v338, %v383
      %v400 = vadd.f32 %v339, %v383
      %v401 = vadd.f32 %v340, %v383
      %v402 = vadd.f32 %v341, %v383
      %v403 = vadd.f32 %v342, %v383
      %v404 = vadd.f32 %v343, %v383
      %v405 = vadd.f32 %v344, %v383
      %v406 = vadd.f32 %v345, %v383
      %v407 = vadd.f32 %v346, %v383
      %v408 = vadd.f32 %v347, %v383
      %v409 = vadd.f32 %v348, %v383
      %v410 = vadd.f32 %v349, %v383
      %v411 = vadd.f32 %v350, %v383
      %v412 = vadd.f32 %v351, %v383
      %v413 = vadd.f32 %v352, %v383
      %v414 = vadd.f32 %v353, %v383
      %v415 = vadd.f32 %v354, %v383
      %v416 = vadd.f32 %v355, %v383
      %v417 = vadd.f32 %v356, %v383
      %v418 = vadd.f32 %v357, %v383
      %v419 = vadd.f32 %v358, %v383
      %v420 = vadd.f32 %v359, %v383
      %v421 = vadd.f32 %v360, %v383
      %v422 = vadd.f32 %v361, %v383
      %v423 = vadd.f32 %v362, %v383
      %v424 = vadd.f32 %v363, %v383
      %v425 = vadd.f32 %v364, %v383
      %v426 = vadd.f32 %v365, %v383
      %v427 = vadd.f32 %v366, %v383
      %v428 = vadd.f32 %v367, %v383
      %v429 = vadd.f32 %v368, %v383
      %v430 = vadd.f32 %v369, %v383
      %v431 = vadd.f32 %v370, %v383
      %v432 = vadd.f32 %v371, %v383
      %v433 = vadd.f32 %v372, %v383
      %v434 = vadd.f32 %v373, %v383
      %v435 = vadd.f32 %v374, %v383
      %v436 = vadd.f32 %v375, %v383
      %v437 = vadd.f32 %v376, %v383
      %v438 = vadd.f32 %v377, %v383
      %v439 = vmax.f32 %v385, 0.0
      %v440 = vmax.f32 %v386, 0.0
      %v441 = vmax.f32 %v387, 0.0
      %v442 = vmax.f32 %v388, 0.0
      %v443 = vmax.f32 %v389, 0.0
      %v444 = vmax.f32 %v390, 0.0
      %v445 = vmax.f32 %v391, 0.0
      %v446 = vmax.f32 %v392, 0.0
      %v447 = vmax.f32 %v393, 0.0
      %v448 = vmax.f32 %v394, 0.0
      %v449 = vmax.f32 %v395, 0.0
      %v450 = vmax.f32 %v396, 0.0
      %v451 = vmax.f32 %v397, 0.0
      %v452 = vmax.f32 %v398, 0.0
      %v453 = vmax.f32 %v399, 0.0
      %v454 = vmax.f32 %v400, 0.0
      %v455 = vmax.f32 %v401, 0.0
      %v456 = vmax.f32 %v402, 0.0
      %v457 = vmax.f32 %v403, 0.0
      %v458 = vmax.f32 %v404, 0.0
      %v459 = vmax.f32 %v405, 0.0
      %v460 = vmax.f32 %v406, 0.0
      %v461 = vmax.f32 %v407, 0.0
      %v462 = vmax.f32 %v408, 0.0
      %v463 = vmax.f32 %v409, 0.0
      %v464 = vmax.f32 %v410, 0.0
      %v465 = vmax.f32 %v411, 0.0
      %v466 = vmax.f32 %v412, 0.0
      %v467 = vmax.f32 %v413, 0.0
      %v468 = vmax.f32 %v414, 0.0
      %v469 = vmax.f32 %v415, 0.0
      %v470 = vmax.f32 %v416, 0.0
      %v471 = vmax.f32 %v417, 0.0
      %v472 = vmax.f32 %v418, 0.0
      %v473 = vmax.f32 %v419, 0.0
      %v474 = vmax.f32 %v420, 0.0
      %v475 = vmax.f32 %v421, 0.0
      %v476 = vmax.f32 %v422, 0.0
      %v477 = vmax.f32 %v423, 0.0
      %v478 = vmax.f32 %v424, 0.0
      %v479 = vmax.f32 %v425, 0.0
      %v480 = vmax.f32 %v426, 0.0
      %v481 = vmax.f32 %v427, 0.0
      %v482 = vmax.f32 %v428, 0.0
      %v483 = vmax.f32 %v429, 0.0
      %v484 = vmax.f32 %v430, 0.0
      %v485 = vmax.f32 %v431, 0.0
      %v486 = vmax.f32 %v432, 0.0
      %v487 = vmax.f32 %v433, 0.0
      %v488 = vmax.f32 %v434, 0.0
      %v489 = vmax.f32 %v435, 0.0
      %v490 = vmax.f32 %v436, 0.0
      %v491 = vmax.f32 %v437, 0.0
      %v492 = vmax.f32 %v438, 0.0
      %v493 = vld [vmem:[%s1] sm:$0xff]
      %v494 = vld [vmem:[%s1 + $0x8] sm:$0xff]
      %v495 = vld [vmem:[%s1 + $0x10] sm:$0x3]
      %v496 = vld [vmem:[%s1 + $0x18] sm:$0xff]
      %v497 = vld [vmem:[%s1 + $0x20] sm:$0xff]
      %v498 = vld [vmem:[%s1 + $0x28] sm:$0x3]
      %v499 = vld [vmem:[%s1 + $0x30] sm:$0xff]
      %v500 = vld [vmem:[%s1 + $0x38] sm:$0xff]
      %v501 = vld [vmem:[%s1 + $0x40] sm:$0x3]
      %v502 = vld [vmem:[%s1 + $0x48] sm:$0xff]
      %v503 = vld [vmem:[%s1 + $0x50] sm:$0xff]
      %v504 = vld [vmem:[%s1 + $0x58] sm:$0x3]
      %v505 = vld [vmem:[%s1 + $0x60] sm:$0xff]
      %v506 = vld [vmem:[%s1 + $0x68] sm:$0xff]
      %v507 = vld [vmem:[%s1 + $0x70] sm:$0x3]
      %v508 = vld [vmem:[%s1 + $0x78] sm:$0xff]
      %v509 = vld [vmem:[%s1 + $0x80] sm:$0xff]
      %v510 = vld [vmem:[%s1 + $0x88] sm:$0x3]
      %v511 = vld [vmem:[%s1 + $0x90] sm:$0xff]
      %v512 = vld [vmem:[%s1 + $0x98] sm:$0xff]
      %v513 = vld [vmem:[%s1 + $0xa0] sm:$0x3]
      %v514 = vld [vmem:[%s1 + $0xa8] sm:$0xff]
      %v515 = vld [vmem:[%s1 + $0xb0] sm:$0xff]
      %v516 = vld [vmem:[%s1 + $0xb8] sm:$0x3]
      %v517 = vld [vmem:[%s1 + $0xc0] sm:$0xff]
      %v518 = vld [vmem:[%s1 + $0xc8] sm:$0xff]
      %v519 = vld [vmem:[%s1 + $0xd0] sm:$0x3]
      %v520 = vld [vmem:[%s1 + $0xd8] sm:$0xff]
      %v521 = vld [vmem:[%s1 + $0xe0] sm:$0xff]
      %v522 = vld [vmem:[%s1 + $0xe8] sm:$0x3]
      %v523 = vld [vmem:[%s1 + $0xf0] sm:$0xff]
      %v524 = vld [vmem:[%s1 + $0xf8] sm:$0xff]
      %v525 = vld [vmem:[%s1 + $0x100] sm:$0x3]
      %v526 = vld [vmem:[%s1 + $0x108] sm:$0xff]
      %v527 = vld [vmem:[%s1 + $0x110] sm:$0xff]
      %v528 = vld [vmem:[%s1 + $0x118] sm:$0x3]
      %v529 = vld [vmem:[%s1 + $0x120] sm:$0xff]
      %v530 = vld [vmem:[%s1 + $0x128] sm:$0xff]
      %v531 = vld [vmem:[%s1 + $0x130] sm:$0x3]
      %v532 = vld [vmem:[%s1 + $0x138] sm:$0xff]
      %v533 = vld [vmem:[%s1 + $0x140] sm:$0xff]
      %v534 = vld [vmem:[%s1 + $0x148] sm:$0x3]
      %v535 = vld [vmem:[%s1 + $0x150] sm:$0xff]
      %v536 = vld [vmem:[%s1 + $0x158] sm:$0xff]
      %v537 = vld [vmem:[%s1 + $0x160] sm:$0x3]
      %v538 = vld [vmem:[%s1 + $0x168] sm:$0xff]
      %v539 = vld [vmem:[%s1 + $0x170] sm:$0xff]
      %v540 = vld [vmem:[%s1 + $0x178] sm:$0x3]
      %v541 = vld [vmem:[%s1 + $0x180] sm:$0xff]
      %v542 = vld [vmem:[%s1 + $0x188] sm:$0xff]
      %v543 = vld [vmem:[%s1 + $0x190] sm:$0x3]
      %v544 = vld [vmem:[%s1 + $0x198] sm:$0xff]
      %v545 = vld [vmem:[%s1 + $0x1a0] sm:$0xff]
      %v546 = vld [vmem:[%s1 + $0x1a8] sm:$0x3]
      %548 = vset.pattern.permute.xlu0 0
      %549 = vperm.xlu0 %548, %v493
      %v550 = vpop.permute.xlu0 %549
      %553 = vset.pattern.permute.xlu0 0
      %554 = vperm.xlu0 %553, %v494
      %v555 = vpop.permute.xlu0 %554
      %558 = vset.pattern.permute.xlu0 0
      %559 = vperm.xlu0 %558, %v495
      %v560 = vpop.permute.xlu0 %559
      %563 = vset.pattern.permute.xlu0 0
      %564 = vperm.xlu0 %563, %v496
      %v565 = vpop.permute.xlu0 %564
      %568 = vset.pattern.permute.xlu0 0
      %569 = vperm.xlu0 %568, %v497
      %v570 = vpop.permute.xlu0 %569
      %573 = vset.pattern.permute.xlu0 0
      %574 = vperm.xlu0 %573, %v498
      %v575 = vpop.permute.xlu0 %574
      %578 = vset.pattern.permute.xlu0 0
      %579 = vperm.xlu0 %578, %v499
      %v580 = vpop.permute.xlu0 %579
      %583 = vset.pattern.permute.xlu0 0
      %584 = vperm.xlu0 %583, %v500
      %v585 = vpop.permute.xlu0 %584
      %588 = vset.pattern.permute.xlu0 0
      %589 = vperm.xlu0 %588, %v501
      %v590 = vpop.permute.xlu0 %589
      %593 = vset.pattern.permute.xlu0 0
      %594 = vperm.xlu0 %593, %v502
      %v595 = vpop.permute.xlu0 %594
      %598 = vset.pattern.permute.xlu0 0
      %599 = vperm.xlu0 %598, %v503
      %v600 = vpop.permute.xlu0 %599
      %603 = vset.pattern.permute.xlu0 0
      %604 = vperm.xlu0 %603, %v504
      %v605 = vpop.permute.xlu0 %604
      %608 = vset.pattern.permute.xlu0 0
      %609 = vperm.xlu0 %608, %v505
      %v610 = vpop.permute.xlu0 %609
      %613 = vset.pattern.permute.xlu0 0
      %614 = vperm.xlu0 %613, %v506
      %v615 = vpop.permute.xlu0 %614
      %618 = vset.pattern.permute.xlu0 0
      %619 = vperm.xlu0 %618, %v507
      %v620 = vpop.permute.xlu0 %619
      %623 = vset.pattern.permute.xlu0 0
      %624 = vperm.xlu0 %623, %v508
      %v625 = vpop.permute.xlu0 %624
      %628 = vset.pattern.permute.xlu0 0
      %629 = vperm.xlu0 %628, %v509
      %v630 = vpop.permute.xlu0 %629
      %633 = vset.pattern.permute.xlu0 0
      %634 = vperm.xlu0 %633, %v510
      %v635 = vpop.permute.xlu0 %634
      %638 = vset.pattern.permute.xlu0 0
      %639 = vperm.xlu0 %638, %v511
      %v640 = vpop.permute.xlu0 %639
      %643 = vset.pattern.permute.xlu0 0
      %644 = vperm.xlu0 %643, %v512
      %v645 = vpop.permute.xlu0 %644
      %648 = vset.pattern.permute.xlu0 0
      %649 = vperm.xlu0 %648, %v513
      %v650 = vpop.permute.xlu0 %649
      %653 = vset.pattern.permute.xlu0 0
      %654 = vperm.xlu0 %653, %v514
      %v655 = vpop.permute.xlu0 %654
      %658 = vset.pattern.permute.xlu0 0
      %659 = vperm.xlu0 %658, %v515
      %v660 = vpop.permute.xlu0 %659
      %663 = vset.pattern.permute.xlu0 0
      %664 = vperm.xlu0 %663, %v516
      %v665 = vpop.permute.xlu0 %664
      %668 = vset.pattern.permute.xlu0 0
      %669 = vperm.xlu0 %668, %v517
      %v670 = vpop.permute.xlu0 %669
      %673 = vset.pattern.permute.xlu0 0
      %674 = vperm.xlu0 %673, %v518
      %v675 = vpop.permute.xlu0 %674
      %678 = vset.pattern.permute.xlu0 0
      %679 = vperm.xlu0 %678, %v519
      %v680 = vpop.permute.xlu0 %679
      %683 = vset.pattern.permute.xlu0 0
      %684 = vperm.xlu0 %683, %v520
      %v685 = vpop.permute.xlu0 %684
      %688 = vset.pattern.permute.xlu0 0
      %689 = vperm.xlu0 %688, %v521
      %v690 = vpop.permute.xlu0 %689
      %693 = vset.pattern.permute.xlu0 0
      %694 = vperm.xlu0 %693, %v522
      %v695 = vpop.permute.xlu0 %694
      %698 = vset.pattern.permute.xlu0 0
      %699 = vperm.xlu0 %698, %v523
      %v700 = vpop.permute.xlu0 %699
      %703 = vset.pattern.permute.xlu0 0
      %704 = vperm.xlu0 %703, %v524
      %v705 = vpop.permute.xlu0 %704
      %708 = vset.pattern.permute.xlu0 0
      %709 = vperm.xlu0 %708, %v525
      %v710 = vpop.permute.xlu0 %709
      %713 = vset.pattern.permute.xlu0 0
      %714 = vperm.xlu0 %713, %v526
      %v715 = vpop.permute.xlu0 %714
      %718 = vset.pattern.permute.xlu0 0
      %719 = vperm.xlu0 %718, %v527
      %v720 = vpop.permute.xlu0 %719
      %723 = vset.pattern.permute.xlu0 0
      %724 = vperm.xlu0 %723, %v528
      %v725 = vpop.permute.xlu0 %724
      %728 = vset.pattern.permute.xlu0 0
      %729 = vperm.xlu0 %728, %v529
      %v730 = vpop.permute.xlu0 %729
      %733 = vset.pattern.permute.xlu0 0
      %734 = vperm.xlu0 %733, %v530
      %v735 = vpop.permute.xlu0 %734
      %738 = vset.pattern.permute.xlu0 0
      %739 = vperm.xlu0 %738, %v531
      %v740 = vpop.permute.xlu0 %739
      %743 = vset.pattern.permute.xlu0 0
      %744 = vperm.xlu0 %743, %v532
      %v745 = vpop.permute.xlu0 %744
      %748 = vset.pattern.permute.xlu0 0
      %749 = vperm.xlu0 %748, %v533
      %v750 = vpop.permute.xlu0 %749
      %753 = vset.pattern.permute.xlu0 0
      %754 = vperm.xlu0 %753, %v534
      %v755 = vpop.permute.xlu0 %754
      %758 = vset.pattern.permute.xlu0 0
      %759 = vperm.xlu0 %758, %v535
      %v760 = vpop.permute.xlu0 %759
      %763 = vset.pattern.permute.xlu0 0
      %764 = vperm.xlu0 %763, %v536
      %v765 = vpop.permute.xlu0 %764
      %768 = vset.pattern.permute.xlu0 0
      %769 = vperm.xlu0 %768, %v537
      %v770 = vpop.permute.xlu0 %769
      %773 = vset.pattern.permute.xlu0 0
      %774 = vperm.xlu0 %773, %v538
      %v775 = vpop.permute.xlu0 %774
      %778 = vset.pattern.permute.xlu0 0
      %779 = vperm.xlu0 %778, %v539
      %v780 = vpop.permute.xlu0 %779
      %783 = vset.pattern.permute.xlu0 0
      %784 = vperm.xlu0 %783, %v540
      %v785 = vpop.permute.xlu0 %784
      %788 = vset.pattern.permute.xlu0 0
      %789 = vperm.xlu0 %788, %v541
      %v790 = vpop.permute.xlu0 %789
      %793 = vset.pattern.permute.xlu0 0
      %794 = vperm.xlu0 %793, %v542
      %v795 = vpop.permute.xlu0 %794
      %798 = vset.pattern.permute.xlu0 0
      %799 = vperm.xlu0 %798, %v543
      %v800 = vpop.permute.xlu0 %799
      %803 = vset.pattern.permute.xlu0 0
      %804 = vperm.xlu0 %803, %v544
      %v805 = vpop.permute.xlu0 %804
      %808 = vset.pattern.permute.xlu0 0
      %809 = vperm.xlu0 %808, %v545
      %v810 = vpop.permute.xlu0 %809
      %813 = vset.pattern.permute.xlu0 0
      %814 = vperm.xlu0 %813, %v546
      %v815 = vpop.permute.xlu0 %814
      %v817 = vmul.f32 %v439, %v550
      %v818 = vmul.f32 %v440, %v555
      %v819 = vmul.f32 %v441, %v560
      %v820 = vmul.f32 %v442, %v565
      %v821 = vmul.f32 %v443, %v570
      %v822 = vmul.f32 %v444, %v575
      %v823 = vmul.f32 %v445, %v580
      %v824 = vmul.f32 %v446, %v585
      %v825 = vmul.f32 %v447, %v590
      %v826 = vmul.f32 %v448, %v595
      %v827 = vmul.f32 %v449, %v600
      %v828 = vmul.f32 %v450, %v605
      %v829 = vmul.f32 %v451, %v610
      %v830 = vmul.f32 %v452, %v615
      %v831 = vmul.f32 %v453, %v620
      %v832 = vmul.f32 %v454, %v625
      %v833 = vmul.f32 %v455, %v630
      %v834 = vmul.f32 %v456, %v635
      %v835 = vmul.f32 %v457, %v640
      %v836 = vmul.f32 %v458, %v645
      %v837 = vmul.f32 %v459, %v650
      %v838 = vmul.f32 %v460, %v655
      %v839 = vmul.f32 %v461, %v660
      %v840 = vmul.f32 %v462, %v665
      %v841 = vmul.f32 %v463, %v670
      %v842 = vmul.f32 %v464, %v675
      %v843 = vmul.f32 %v465, %v680
      %v844 = vmul.f32 %v466, %v685
      %v845 = vmul.f32 %v467, %v690
      %v846 = vmul.f32 %v468, %v695
      %v847 = vmul.f32 %v469, %v700
      %v848 = vmul.f32 %v470, %v705
      %v849 = vmul.f32 %v471, %v710
      %v850 = vmul.f32 %v472, %v715
      %v851 = vmul.f32 %v473, %v720
      %v852 = vmul.f32 %v474, %v725
      %v853 = vmul.f32 %v475, %v730
      %v854 = vmul.f32 %v476, %v735
      %v855 = vmul.f32 %v477, %v740
      %v856 = vmul.f32 %v478, %v745
      %v857 = vmul.f32 %v479, %v750
      %v858 = vmul.f32 %v480, %v755
      %v859 = vmul.f32 %v481, %v760
      %v860 = vmul.f32 %v482, %v765
      %v861 = vmul.f32 %v483, %v770
      %v862 = vmul.f32 %v484, %v775
      %v863 = vmul.f32 %v485, %v780
      %v864 = vmul.f32 %v486, %v785
      %v865 = vmul.f32 %v487, %v790
      %v866 = vmul.f32 %v488, %v795
      %v867 = vmul.f32 %v489, %v800
      %v868 = vmul.f32 %v490, %v805
      %v869 = vmul.f32 %v491, %v810
      %v870 = vmul.f32 %v492, %v815
      %v871 = vld [vmem:[%s4] sm:$0xff]
      %v872 = vld [vmem:[%s4 + $0x8] sm:$0xff]
      %v873 = vld [vmem:[%s4 + $0x10] sm:$0xff]
      %v874 = vld [vmem:[%s4 + $0x18] sm:$0xff]
      %v875 = vld [vmem:[%s4 + $0x20] sm:$0xff]
      %v876 = vld [vmem:[%s4 + $0x28] sm:$0xff]
      %v877 = vld [vmem:[%s4 + $0x30] sm:$0xff]
      %v878 = vld [vmem:[%s4 + $0x38] sm:$0xff]
      %v879 = vld [vmem:[%s4 + $0x40] sm:$0xff]
      %v880 = vld [vmem:[%s4 + $0x48] sm:$0xff]
      %v881 = vld [vmem:[%s4 + $0x50] sm:$0xff]
      %v882 = vld [vmem:[%s4 + $0x58] sm:$0xff]
      %v883 = vld [vmem:[%s4 + $0x60] sm:$0xff]
      %v884 = vld [vmem:[%s4 + $0x68] sm:$0xff]
      %v885 = vld [vmem:[%s4 + $0x70] sm:$0xff]
      %v886 = vld [vmem:[%s4 + $0x78] sm:$0xff]
      %v887 = vld [vmem:[%s4 + $0x80] sm:$0xff]
      %v888 = vld [vmem:[%s4 + $0x88] sm:$0xff]
      %v889 = vld [vmem:[%s4 + $0x90] sm:$0xff]
      %v890 = vld [vmem:[%s4 + $0x98] sm:$0xff]
      %v891 = vld [vmem:[%s4 + $0xa0] sm:$0xff]
      %v892 = vld [vmem:[%s4 + $0xa8] sm:$0xff]
      %v893 = vld [vmem:[%s4 + $0xb0] sm:$0xff]
      %v894 = vld [vmem:[%s4 + $0xb8] sm:$0xff]
      %v895 = vld [vmem:[%s4 + $0xc0] sm:$0xff]
      %v896 = vld [vmem:[%s4 + $0xc8] sm:$0xff]
      %v897 = vld [vmem:[%s4 + $0xd0] sm:$0xff]
      %v898 = vld [vmem:[%s4 + $0xd8] sm:$0xff]
      %v899 = vld [vmem:[%s4 + $0xe0] sm:$0xff]
      %v900 = vld [vmem:[%s4 + $0xe8] sm:$0xff]
      %v901 = vld [vmem:[%s4 + $0xf0] sm:$0xff]
      %v902 = vld [vmem:[%s4 + $0xf8] sm:$0xff]
      %v903 = vld [vmem:[%s4 + $0x100] sm:$0xff]
      %v904 = vld [vmem:[%s4 + $0x108] sm:$0xff]
      %v905 = vld [vmem:[%s4 + $0x110] sm:$0xff]
      %v906 = vld [vmem:[%s4 + $0x118] sm:$0xff]
      %v907 = vld [vmem:[%s4 + $0x120] sm:$0xff]
      %v908 = vld [vmem:[%s4 + $0x128] sm:$0xff]
      %v909 = vld [vmem:[%s4 + $0x130] sm:$0xff]
      %v910 = vld [vmem:[%s4 + $0x138] sm:$0xff]
      %v911 = vld [vmem:[%s4 + $0x140] sm:$0xff]
      %v912 = vld [vmem:[%s4 + $0x148] sm:$0xff]
      %v913 = vld [vmem:[%s4 + $0x150] sm:$0xff]
      %v914 = vld [vmem:[%s4 + $0x158] sm:$0xff]
      %v915 = vld [vmem:[%s4 + $0x160] sm:$0xff]
      %v916 = vld [vmem:[%s4 + $0x168] sm:$0xff]
      %v917 = vld [vmem:[%s4 + $0x170] sm:$0xff]
      %v918 = vld [vmem:[%s4 + $0x178] sm:$0xff]
      %v919 = vld [vmem:[%s4 + $0x180] sm:$0xff]
      %v920 = vld [vmem:[%s4 + $0x188] sm:$0xff]
      %v921 = vld [vmem:[%s4 + $0x190] sm:$0xff]
      %v922 = vld [vmem:[%s4 + $0x198] sm:$0xff]
      %v923 = vld [vmem:[%s4 + $0x1a0] sm:$0xff]
      %v924 = vld [vmem:[%s4 + $0x1a8] sm:$0xff]
      %v925 = vld [vmem:[%s4 + $0x1b0] sm:$0xff]
      %v926 = vld [vmem:[%s4 + $0x1b8] sm:$0xff]
      %v927 = vld [vmem:[%s4 + $0x1c0] sm:$0xff]
      %v928 = vld [vmem:[%s4 + $0x1c8] sm:$0xff]
      %v929 = vld [vmem:[%s4 + $0x1d0] sm:$0xff]
      %v930 = vld [vmem:[%s4 + $0x1d8] sm:$0xff]
      %v931 = vld [vmem:[%s4 + $0x1e0] sm:$0xff]
      %v932 = vld [vmem:[%s4 + $0x1e8] sm:$0xff]
      %v933 = vld [vmem:[%s4 + $0x1f0] sm:$0xff]
      %v934 = vld [vmem:[%s4 + $0x1f8] sm:$0xff]
      %v935 = vld [vmem:[%s4 + $0x200] sm:$0xff]
      %v936 = vld [vmem:[%s4 + $0x208] sm:$0xff]
      %v937 = vld [vmem:[%s4 + $0x210] sm:$0xff]
      %v938 = vld [vmem:[%s4 + $0x218] sm:$0xff]
      %v939 = vld [vmem:[%s4 + $0x220] sm:$0xff]
      %v940 = vld [vmem:[%s4 + $0x228] sm:$0xff]
      %v941 = vld [vmem:[%s4 + $0x230] sm:$0xff]
      %v942 = vld [vmem:[%s4 + $0x238] sm:$0xff]
      %vm991 = vcmask 1046528
      %v992 = vrot.slane %v817, 1
      %v993 = vrot.slane %v818, 1
      %v994 = vsel %vm991, %v992, %v993
      %v995 = vrot.slane %v819, 1
      %v996 = vsel %vm991, %v993, %v995
      %v997 = vrot.slane %v820, 1
      %v998 = vrot.slane %v821, 1
      %v999 = vsel %vm991, %v997, %v998
      %v1000 = vrot.slane %v822, 1
      %v1001 = vsel %vm991, %v998, %v1000
      %v1002 = vrot.slane %v823, 1
      %v1003 = vrot.slane %v824, 1
      %v1004 = vsel %vm991, %v1002, %v1003
      %v1005 = vrot.slane %v825, 1
      %v1006 = vsel %vm991, %v1003, %v1005
      %v1007 = vrot.slane %v826, 1
      %v1008 = vrot.slane %v827, 1
      %v1009 = vsel %vm991, %v1007, %v1008
      %v1010 = vrot.slane %v828, 1
      %v1011 = vsel %vm991, %v1008, %v1010
      %v1012 = vrot.slane %v829, 1
      %v1013 = vrot.slane %v830, 1
      %v1014 = vsel %vm991, %v1012, %v1013
      %v1015 = vrot.slane %v831, 1
      %v1016 = vsel %vm991, %v1013, %v1015
      %v1017 = vrot.slane %v832, 1
      %v1018 = vrot.slane %v833, 1
      %v1019 = vsel %vm991, %v1017, %v1018
      %v1020 = vrot.slane %v834, 1
      %v1021 = vsel %vm991, %v1018, %v1020
      %v1022 = vrot.slane %v835, 1
      %v1023 = vrot.slane %v836, 1
      %v1024 = vsel %vm991, %v1022, %v1023
      %v1025 = vrot.slane %v837, 1
      %v1026 = vsel %vm991, %v1023, %v1025
      %v1027 = vrot.slane %v838, 1
      %v1028 = vrot.slane %v839, 1
      %v1029 = vsel %vm991, %v1027, %v1028
      %v1030 = vrot.slane %v840, 1
      %v1031 = vsel %vm991, %v1028, %v1030
      %v1032 = vrot.slane %v841, 1
      %v1033 = vrot.slane %v842, 1
      %v1034 = vsel %vm991, %v1032, %v1033
      %v1035 = vrot.slane %v843, 1
      %v1036 = vsel %vm991, %v1033, %v1035
      %v1037 = vrot.slane %v844, 1
      %v1038 = vrot.slane %v845, 1
      %v1039 = vsel %vm991, %v1037, %v1038
      %v1040 = vrot.slane %v846, 1
      %v1041 = vsel %vm991, %v1038, %v1040
      %v1042 = vrot.slane %v847, 1
      %v1043 = vrot.slane %v848, 1
      %v1044 = vsel %vm991, %v1042, %v1043
      %v1045 = vrot.slane %v849, 1
      %v1046 = vsel %vm991, %v1043, %v1045
      %v1047 = vrot.slane %v850, 1
      %v1048 = vrot.slane %v851, 1
      %v1049 = vsel %vm991, %v1047, %v1048
      %v1050 = vrot.slane %v852, 1
      %v1051 = vsel %vm991, %v1048, %v1050
      %v1052 = vrot.slane %v853, 1
      %v1053 = vrot.slane %v854, 1
      %v1054 = vsel %vm991, %v1052, %v1053
      %v1055 = vrot.slane %v855, 1
      %v1056 = vsel %vm991, %v1053, %v1055
      %v1057 = vrot.slane %v856, 1
      %v1058 = vrot.slane %v857, 1
      %v1059 = vsel %vm991, %v1057, %v1058
      %v1060 = vrot.slane %v858, 1
      %v1061 = vsel %vm991, %v1058, %v1060
      %v1062 = vrot.slane %v859, 1
      %v1063 = vrot.slane %v860, 1
      %v1064 = vsel %vm991, %v1062, %v1063
      %v1065 = vrot.slane %v861, 1
      %v1066 = vsel %vm991, %v1063, %v1065
      %v1067 = vrot.slane %v862, 1
      %v1068 = vrot.slane %v863, 1
      %v1069 = vsel %vm991, %v1067, %v1068
      %v1070 = vrot.slane %v864, 1
      %v1071 = vsel %vm991, %v1068, %v1070
      %vm1072 = vcmask 1045504
      %v1073 = vrot.slane %v817, 2
      %v1074 = vrot.slane %v818, 2
      %v1075 = vsel %vm1072, %v1073, %v1074
      %v1076 = vrot.slane %v819, 2
      %v1077 = vsel %vm1072, %v1074, %v1076
      %v1078 = vrot.slane %v820, 2
      %v1079 = vrot.slane %v821, 2
      %v1080 = vsel %vm1072, %v1078, %v1079
      %v1081 = vrot.slane %v822, 2
      %v1082 = vsel %vm1072, %v1079, %v1081
      %v1083 = vrot.slane %v823, 2
      %v1084 = vrot.slane %v824, 2
      %v1085 = vsel %vm1072, %v1083, %v1084
      %v1086 = vrot.slane %v825, 2
      %v1087 = vsel %vm1072, %v1084, %v1086
      %v1088 = vrot.slane %v826, 2
      %v1089 = vrot.slane %v827, 2
      %v1090 = vsel %vm1072, %v1088, %v1089
      %v1091 = vrot.slane %v828, 2
      %v1092 = vsel %vm1072, %v1089, %v1091
      %v1093 = vrot.slane %v829, 2
      %v1094 = vrot.slane %v830, 2
      %v1095 = vsel %vm1072, %v1093, %v1094
      %v1096 = vrot.slane %v831, 2
      %v1097 = vsel %vm1072, %v1094, %v1096
      %v1098 = vrot.slane %v832, 2
      %v1099 = vrot.slane %v833, 2
      %v1100 = vsel %vm1072, %v1098, %v1099
      %v1101 = vrot.slane %v834, 2
      %v1102 = vsel %vm1072, %v1099, %v1101
      %v1103 = vrot.slane %v835, 2
      %v1104 = vrot.slane %v836, 2
      %v1105 = vsel %vm1072, %v1103, %v1104
      %v1106 = vrot.slane %v837, 2
      %v1107 = vsel %vm1072, %v1104, %v1106
      %v1108 = vrot.slane %v838, 2
      %v1109 = vrot.slane %v839, 2
      %v1110 = vsel %vm1072, %v1108, %v1109
      %v1111 = vrot.slane %v840, 2
      %v1112 = vsel %vm1072, %v1109, %v1111
      %v1113 = vrot.slane %v841, 2
      %v1114 = vrot.slane %v842, 2
      %v1115 = vsel %vm1072, %v1113, %v1114
      %v1116 = vrot.slane %v843, 2
      %v1117 = vsel %vm1072, %v1114, %v1116
      %v1118 = vrot.slane %v844, 2
      %v1119 = vrot.slane %v845, 2
      %v1120 = vsel %vm1072, %v1118, %v1119
      %v1121 = vrot.slane %v846, 2
      %v1122 = vsel %vm1072, %v1119, %v1121
      %v1123 = vrot.slane %v847, 2
      %v1124 = vrot.slane %v848, 2
      %v1125 = vsel %vm1072, %v1123, %v1124
      %v1126 = vrot.slane %v849, 2
      %v1127 = vsel %vm1072, %v1124, %v1126
      %v1128 = vrot.slane %v850, 2
      %v1129 = vrot.slane %v851, 2
      %v1130 = vsel %vm1072, %v1128, %v1129
      %v1131 = vrot.slane %v852, 2
      %v1132 = vsel %vm1072, %v1129, %v1131
      %v1133 = vrot.slane %v853, 2
      %v1134 = vrot.slane %v854, 2
      %v1135 = vsel %vm1072, %v1133, %v1134
      %v1136 = vrot.slane %v855, 2
      %v1137 = vsel %vm1072, %v1134, %v1136
      %v1138 = vrot.slane %v856, 2
      %v1139 = vrot.slane %v857, 2
      %v1140 = vsel %vm1072, %v1138, %v1139
      %v1141 = vrot.slane %v858, 2
      %v1142 = vsel %vm1072, %v1139, %v1141
      %v1143 = vrot.slane %v859, 2
      %v1144 = vrot.slane %v860, 2
      %v1145 = vsel %vm1072, %v1143, %v1144
      %v1146 = vrot.slane %v861, 2
      %v1147 = vsel %vm1072, %v1144, %v1146
      %v1148 = vrot.slane %v862, 2
      %v1149 = vrot.slane %v863, 2
      %v1150 = vsel %vm1072, %v1148, %v1149
      %v1151 = vrot.slane %v864, 2
      %v1152 = vsel %vm1072, %v1149, %v1151
      %v1188 = vrot.slane %v865, 1
      %v1189 = vrot.slane %v866, 1
      %v1190 = vsel %vm991, %v1188, %v1189
      %v1191 = vrot.slane %v867, 1
      %v1192 = vsel %vm991, %v1189, %v1191
      %v1225 = vrot.slane %v865, 2
      %v1226 = vrot.slane %v866, 2
      %v1227 = vsel %vm1072, %v1225, %v1226
      %v1228 = vrot.slane %v867, 2
      %v1229 = vsel %vm1072, %v1226, %v1228
      %v1233 = vrot.slane %v868, 1
      %v1234 = vrot.slane %v869, 1
      %v1235 = vsel %vm991, %v1233, %v1234
      %v1236 = vrot.slane %v870, 1
      %v1237 = vsel %vm991, %v1234, %v1236
      %v1238 = vrot.slane %v868, 2
      %v1239 = vrot.slane %v869, 2
      %v1240 = vsel %vm1072, %v1238, %v1239
      %v1241 = vrot.slane %v870, 2
      %v1242 = vsel %vm1072, %v1239, %v1241
      %1243 = vrot.lane.b32.xlu0 %v994, 64
      %v1244 = vpop.permute.xlu0 %1243
      %1245 = vrot.lane.b32.xlu0 %v996, 64
      %v1246 = vpop.permute.xlu0 %1245
      %1247 = vrot.lane.b32.xlu0 %v999, 64
      %v1248 = vpop.permute.xlu0 %1247
      %1249 = vrot.lane.b32.xlu0 %v1001, 64
      %v1250 = vpop.permute.xlu0 %1249
      %1251 = vrot.lane.b32.xlu0 %v1004, 64
      %v1252 = vpop.permute.xlu0 %1251
      %1253 = vrot.lane.b32.xlu0 %v1006, 64
      %v1254 = vpop.permute.xlu0 %1253
      %1255 = vrot.lane.b32.xlu0 %v1009, 64
      %v1256 = vpop.permute.xlu0 %1255
      %1257 = vrot.lane.b32.xlu0 %v1011, 64
      %v1258 = vpop.permute.xlu0 %1257
      %1259 = vrot.lane.b32.xlu0 %v1014, 64
      %v1260 = vpop.permute.xlu0 %1259
      %1261 = vrot.lane.b32.xlu0 %v1016, 64
      %v1262 = vpop.permute.xlu0 %1261
      %1263 = vrot.lane.b32.xlu0 %v1019, 64
      %v1264 = vpop.permute.xlu0 %1263
      %1265 = vrot.lane.b32.xlu0 %v1021, 64
      %v1266 = vpop.permute.xlu0 %1265
      %1267 = vrot.lane.b32.xlu0 %v1024, 64
      %v1268 = vpop.permute.xlu0 %1267
      %1269 = vrot.lane.b32.xlu0 %v1026, 64
      %v1270 = vpop.permute.xlu0 %1269
      %1271 = vrot.lane.b32.xlu0 %v1029, 64
      %v1272 = vpop.permute.xlu0 %1271
      %1273 = vrot.lane.b32.xlu0 %v1031, 64
      %v1274 = vpop.permute.xlu0 %1273
      %1275 = vrot.lane.b32.xlu0 %v1034, 64
      %v1276 = vpop.permute.xlu0 %1275
      %1277 = vrot.lane.b32.xlu0 %v1036, 64
      %v1278 = vpop.permute.xlu0 %1277
      %1279 = vrot.lane.b32.xlu0 %v1039, 64
      %v1280 = vpop.permute.xlu0 %1279
      %1281 = vrot.lane.b32.xlu0 %v1041, 64
      %v1282 = vpop.permute.xlu0 %1281
      %1283 = vrot.lane.b32.xlu0 %v1044, 64
      %v1284 = vpop.permute.xlu0 %1283
      %1285 = vrot.lane.b32.xlu0 %v1046, 64
      %v1286 = vpop.permute.xlu0 %1285
      %1287 = vrot.lane.b32.xlu0 %v1049, 64
      %v1288 = vpop.permute.xlu0 %1287
      %1289 = vrot.lane.b32.xlu0 %v1051, 64
      %v1290 = vpop.permute.xlu0 %1289
      %1291 = vrot.lane.b32.xlu0 %v1054, 64
      %v1292 = vpop.permute.xlu0 %1291
      %1293 = vrot.lane.b32.xlu0 %v1056, 64
      %v1294 = vpop.permute.xlu0 %1293
      %1295 = vrot.lane.b32.xlu0 %v1059, 64
      %v1296 = vpop.permute.xlu0 %1295
      %1297 = vrot.lane.b32.xlu0 %v1061, 64
      %v1298 = vpop.permute.xlu0 %1297
      %1299 = vrot.lane.b32.xlu0 %v1064, 64
      %v1300 = vpop.permute.xlu0 %1299
      %1301 = vrot.lane.b32.xlu0 %v1066, 64
      %v1302 = vpop.permute.xlu0 %1301
      %1303 = vrot.lane.b32.xlu0 %v1069, 64
      %v1304 = vpop.permute.xlu0 %1303
      %1305 = vrot.lane.b32.xlu0 %v1071, 64
      %v1306 = vpop.permute.xlu0 %1305
      %1339 = vrot.lane.b32.xlu0 %v820, 64
      %v1340 = vpop.permute.xlu0 %1339
      %1341 = vrot.lane.b32.xlu0 %v821, 64
      %v1342 = vpop.permute.xlu0 %1341
      %1343 = vrot.lane.b32.xlu0 %v823, 64
      %v1344 = vpop.permute.xlu0 %1343
      %1345 = vrot.lane.b32.xlu0 %v824, 64
      %v1346 = vpop.permute.xlu0 %1345
      %1347 = vrot.lane.b32.xlu0 %v826, 64
      %v1348 = vpop.permute.xlu0 %1347
      %1349 = vrot.lane.b32.xlu0 %v827, 64
      %v1350 = vpop.permute.xlu0 %1349
      %1351 = vrot.lane.b32.xlu0 %v829, 64
      %v1352 = vpop.permute.xlu0 %1351
      %1353 = vrot.lane.b32.xlu0 %v830, 64
      %v1354 = vpop.permute.xlu0 %1353
      %1355 = vrot.lane.b32.xlu0 %v832, 64
      %v1356 = vpop.permute.xlu0 %1355
      %1357 = vrot.lane.b32.xlu0 %v833, 64
      %v1358 = vpop.permute.xlu0 %1357
      %1359 = vrot.lane.b32.xlu0 %v835, 64
      %v1360 = vpop.permute.xlu0 %1359
      %1361 = vrot.lane.b32.xlu0 %v836, 64
      %v1362 = vpop.permute.xlu0 %1361
      %1363 = vrot.lane.b32.xlu0 %v838, 64
      %v1364 = vpop.permute.xlu0 %1363
      %1365 = vrot.lane.b32.xlu0 %v839, 64
      %v1366 = vpop.permute.xlu0 %1365
      %1367 = vrot.lane.b32.xlu0 %v841, 64
      %v1368 = vpop.permute.xlu0 %1367
      %1369 = vrot.lane.b32.xlu0 %v842, 64
      %v1370 = vpop.permute.xlu0 %1369
      %1371 = vrot.lane.b32.xlu0 %v844, 64
      %v1372 = vpop.permute.xlu0 %1371
      %1373 = vrot.lane.b32.xlu0 %v845, 64
      %v1374 = vpop.permute.xlu0 %1373
      %1375 = vrot.lane.b32.xlu0 %v847, 64
      %v1376 = vpop.permute.xlu0 %1375
      %1377 = vrot.lane.b32.xlu0 %v848, 64
      %v1378 = vpop.permute.xlu0 %1377
      %1379 = vrot.lane.b32.xlu0 %v850, 64
      %v1380 = vpop.permute.xlu0 %1379
      %1381 = vrot.lane.b32.xlu0 %v851, 64
      %v1382 = vpop.permute.xlu0 %1381
      %1383 = vrot.lane.b32.xlu0 %v853, 64
      %v1384 = vpop.permute.xlu0 %1383
      %1385 = vrot.lane.b32.xlu0 %v854, 64
      %v1386 = vpop.permute.xlu0 %1385
      %1387 = vrot.lane.b32.xlu0 %v856, 64
      %v1388 = vpop.permute.xlu0 %1387
      %1389 = vrot.lane.b32.xlu0 %v857, 64
      %v1390 = vpop.permute.xlu0 %1389
      %1391 = vrot.lane.b32.xlu0 %v859, 64
      %v1392 = vpop.permute.xlu0 %1391
      %1393 = vrot.lane.b32.xlu0 %v860, 64
      %v1394 = vpop.permute.xlu0 %1393
      %1395 = vrot.lane.b32.xlu0 %v862, 64
      %v1396 = vpop.permute.xlu0 %1395
      %1397 = vrot.lane.b32.xlu0 %v863, 64
      %v1398 = vpop.permute.xlu0 %1397
      %1399 = vrot.lane.b32.xlu0 %v865, 64
      %v1400 = vpop.permute.xlu0 %1399
      %1401 = vrot.lane.b32.xlu0 %v866, 64
      %v1402 = vpop.permute.xlu0 %1401
      %1435 = vrot.lane.b32.xlu0 %v1080, 64
      %v1436 = vpop.permute.xlu0 %1435
      %1437 = vrot.lane.b32.xlu0 %v1082, 64
      %v1438 = vpop.permute.xlu0 %1437
      %1439 = vrot.lane.b32.xlu0 %v1085, 64
      %v1440 = vpop.permute.xlu0 %1439
      %1441 = vrot.lane.b32.xlu0 %v1087, 64
      %v1442 = vpop.permute.xlu0 %1441
      %1443 = vrot.lane.b32.xlu0 %v1090, 64
      %v1444 = vpop.permute.xlu0 %1443
      %1445 = vrot.lane.b32.xlu0 %v1092, 64
      %v1446 = vpop.permute.xlu0 %1445
      %1447 = vrot.lane.b32.xlu0 %v1095, 64
      %v1448 = vpop.permute.xlu0 %1447
      %1449 = vrot.lane.b32.xlu0 %v1097, 64
      %v1450 = vpop.permute.xlu0 %1449
      %1451 = vrot.lane.b32.xlu0 %v1100, 64
      %v1452 = vpop.permute.xlu0 %1451
      %1453 = vrot.lane.b32.xlu0 %v1102, 64
      %v1454 = vpop.permute.xlu0 %1453
      %1455 = vrot.lane.b32.xlu0 %v1105, 64
      %v1456 = vpop.permute.xlu0 %1455
      %1457 = vrot.lane.b32.xlu0 %v1107, 64
      %v1458 = vpop.permute.xlu0 %1457
      %1459 = vrot.lane.b32.xlu0 %v1110, 64
      %v1460 = vpop.permute.xlu0 %1459
      %1461 = vrot.lane.b32.xlu0 %v1112, 64
      %v1462 = vpop.permute.xlu0 %1461
      %1463 = vrot.lane.b32.xlu0 %v1115, 64
      %v1464 = vpop.permute.xlu0 %1463
      %1465 = vrot.lane.b32.xlu0 %v1117, 64
      %v1466 = vpop.permute.xlu0 %1465
      %1467 = vrot.lane.b32.xlu0 %v1120, 64
      %v1468 = vpop.permute.xlu0 %1467
      %1469 = vrot.lane.b32.xlu0 %v1122, 64
      %v1470 = vpop.permute.xlu0 %1469
      %1471 = vrot.lane.b32.xlu0 %v1125, 64
      %v1472 = vpop.permute.xlu0 %1471
      %1473 = vrot.lane.b32.xlu0 %v1127, 64
      %v1474 = vpop.permute.xlu0 %1473
      %1475 = vrot.lane.b32.xlu0 %v1130, 64
      %v1476 = vpop.permute.xlu0 %1475
      %1477 = vrot.lane.b32.xlu0 %v1132, 64
      %v1478 = vpop.permute.xlu0 %1477
      %1479 = vrot.lane.b32.xlu0 %v1135, 64
      %v1480 = vpop.permute.xlu0 %1479
      %1481 = vrot.lane.b32.xlu0 %v1137, 64
      %v1482 = vpop.permute.xlu0 %1481
      %1483 = vrot.lane.b32.xlu0 %v1140, 64
      %v1484 = vpop.permute.xlu0 %1483
      %1485 = vrot.lane.b32.xlu0 %v1142, 64
      %v1486 = vpop.permute.xlu0 %1485
      %1487 = vrot.lane.b32.xlu0 %v1145, 64
      %v1488 = vpop.permute.xlu0 %1487
      %1489 = vrot.lane.b32.xlu0 %v1147, 64
      %v1490 = vpop.permute.xlu0 %1489
      %1491 = vrot.lane.b32.xlu0 %v1150, 64
      %v1492 = vpop.permute.xlu0 %1491
      %1493 = vrot.lane.b32.xlu0 %v1152, 64
      %v1494 = vpop.permute.xlu0 %1493
      %1495 = vrot.lane.b32.xlu0 %v1227, 64
      %v1496 = vpop.permute.xlu0 %1495
      %1497 = vrot.lane.b32.xlu0 %v1229, 64
      %v1498 = vpop.permute.xlu0 %1497
      %1531 = vrot.lane.b32.xlu0 %v1190, 64
      %v1532 = vpop.permute.xlu0 %1531
      %1533 = vrot.lane.b32.xlu0 %v1192, 64
      %v1534 = vpop.permute.xlu0 %1533
      %1535 = vrot.lane.b32.xlu0 %v1235, 64
      %v1536 = vpop.permute.xlu0 %1535
      %1537 = vrot.lane.b32.xlu0 %v1237, 64
      %v1538 = vpop.permute.xlu0 %1537
      %vm1543 = vcmask 523264
      %v1544 = vsel %vm1543, %v817, %v1244
      %v1545 = vsel %vm1543, %v818, %v1246
      %v1546 = vsel %vm1543, %v820, %v1248
      %v1547 = vsel %vm1543, %v821, %v1250
      %v1548 = vsel %vm1543, %v823, %v1252
      %v1549 = vsel %vm1543, %v824, %v1254
      %v1550 = vsel %vm1543, %v826, %v1256
      %v1551 = vsel %vm1543, %v827, %v1258
      %v1552 = vsel %vm1543, %v829, %v1260
      %v1553 = vsel %vm1543, %v830, %v1262
      %v1554 = vsel %vm1543, %v832, %v1264
      %v1555 = vsel %vm1543, %v833, %v1266
      %v1556 = vsel %vm1543, %v835, %v1268
      %v1557 = vsel %vm1543, %v836, %v1270
      %v1558 = vsel %vm1543, %v838, %v1272
      %v1559 = vsel %vm1543, %v839, %v1274
      %v1560 = vsel %vm1543, %v841, %v1276
      %v1561 = vsel %vm1543, %v842, %v1278
      %v1562 = vsel %vm1543, %v844, %v1280
      %v1563 = vsel %vm1543, %v845, %v1282
      %v1564 = vsel %vm1543, %v847, %v1284
      %v1565 = vsel %vm1543, %v848, %v1286
      %v1566 = vsel %vm1543, %v850, %v1288
      %v1567 = vsel %vm1543, %v851, %v1290
      %v1568 = vsel %vm1543, %v853, %v1292
      %v1569 = vsel %vm1543, %v854, %v1294
      %v1570 = vsel %vm1543, %v856, %v1296
      %v1571 = vsel %vm1543, %v857, %v1298
      %v1572 = vsel %vm1543, %v859, %v1300
      %v1573 = vsel %vm1543, %v860, %v1302
      %v1574 = vsel %vm1543, %v862, %v1304
      %v1575 = vsel %vm1543, %v863, %v1306
      %v1576 = vsel %vm1543, %v1075, %v1340
      %v1577 = vsel %vm1543, %v1077, %v1342
      %v1578 = vsel %vm1543, %v1080, %v1344
      %v1579 = vsel %vm1543, %v1082, %v1346
      %v1580 = vsel %vm1543, %v1085, %v1348
      %v1581 = vsel %vm1543, %v1087, %v1350
      %v1582 = vsel %vm1543, %v1090, %v1352
      %v1583 = vsel %vm1543, %v1092, %v1354
      %v1584 = vsel %vm1543, %v1095, %v1356
      %v1585 = vsel %vm1543, %v1097, %v1358
      %v1586 = vsel %vm1543, %v1100, %v1360
      %v1587 = vsel %vm1543, %v1102, %v1362
      %v1588 = vsel %vm1543, %v1105, %v1364
      %v1589 = vsel %vm1543, %v1107, %v1366
      %v1590 = vsel %vm1543, %v1110, %v1368
      %v1591 = vsel %vm1543, %v1112, %v1370
      %v1592 = vsel %vm1543, %v1115, %v1372
      %v1593 = vsel %vm1543, %v1117, %v1374
      %v1594 = vsel %vm1543, %v1120, %v1376
      %v1595 = vsel %vm1543, %v1122, %v1378
      %v1596 = vsel %vm1543, %v1125, %v1380
      %v1597 = vsel %vm1543, %v1127, %v1382
      %v1598 = vsel %vm1543, %v1130, %v1384
      %v1599 = vsel %vm1543, %v1132, %v1386
      %v1600 = vsel %vm1543, %v1135, %v1388
      %v1601 = vsel %vm1543, %v1137, %v1390
      %v1602 = vsel %vm1543, %v1140, %v1392
      %v1603 = vsel %vm1543, %v1142, %v1394
      %v1604 = vsel %vm1543, %v1145, %v1396
      %v1605 = vsel %vm1543, %v1147, %v1398
      %v1606 = vsel %vm1543, %v1150, %v1400
      %v1607 = vsel %vm1543, %v1152, %v1402
      %v1608 = vsel %vm1543, %v999, %v1436
      %v1609 = vsel %vm1543, %v1001, %v1438
      %v1610 = vsel %vm1543, %v1004, %v1440
      %v1611 = vsel %vm1543, %v1006, %v1442
      %v1612 = vsel %vm1543, %v1009, %v1444
      %v1613 = vsel %vm1543, %v1011, %v1446
      %v1614 = vsel %vm1543, %v1014, %v1448
      %v1615 = vsel %vm1543, %v1016, %v1450
      %v1616 = vsel %vm1543, %v1019, %v1452
      %v1617 = vsel %vm1543, %v1021, %v1454
      %v1618 = vsel %vm1543, %v1024, %v1456
      %v1619 = vsel %vm1543, %v1026, %v1458
      %v1620 = vsel %vm1543, %v1029, %v1460
      %v1621 = vsel %vm1543, %v1031, %v1462
      %v1622 = vsel %vm1543, %v1034, %v1464
      %v1623 = vsel %vm1543, %v1036, %v1466
      %v1624 = vsel %vm1543, %v1039, %v1468
      %v1625 = vsel %vm1543, %v1041, %v1470
      %v1626 = vsel %vm1543, %v1044, %v1472
      %v1627 = vsel %vm1543, %v1046, %v1474
      %v1628 = vsel %vm1543, %v1049, %v1476
      %v1629 = vsel %vm1543, %v1051, %v1478
      %v1630 = vsel %vm1543, %v1054, %v1480
      %v1631 = vsel %vm1543, %v1056, %v1482
      %v1632 = vsel %vm1543, %v1059, %v1484
      %v1633 = vsel %vm1543, %v1061, %v1486
      %v1634 = vsel %vm1543, %v1064, %v1488
      %v1635 = vsel %vm1543, %v1066, %v1490
      %v1636 = vsel %vm1543, %v1069, %v1492
      %v1637 = vsel %vm1543, %v1071, %v1494
      %v1638 = vsel %vm1543, %v1190, %v1496
      %v1639 = vsel %vm1543, %v1192, %v1498
      %v1640 = vsel %vm1543, %v865, %v1532
      %v1641 = vsel %vm1543, %v866, %v1534
      %v1642 = vsel %vm1543, %v868, %v1536
      %v1643 = vsel %vm1543, %v869, %v1538
      %v1644 = vsel %vm1543, %v1085, 0
      %v1646 = vsel %vm1543, %v1087, 0
      %v1648 = vsel %vm1543, %v1090, 0
      %v1650 = vsel %vm1543, %v1092, 0
      %v1652 = vsel %vm1543, %v1095, 0
      %v1654 = vsel %vm1543, %v1097, 0
      %v1656 = vsel %vm1543, %v1100, 0
      %v1658 = vsel %vm1543, %v1102, 0
      %v1660 = vsel %vm1543, %v1105, 0
      %v1662 = vsel %vm1543, %v1107, 0
      %v1664 = vsel %vm1543, %v1110, 0
      %v1666 = vsel %vm1543, %v1112, 0
      %v1668 = vsel %vm1543, %v1115, 0
      %v1670 = vsel %vm1543, %v1117, 0
      %v1672 = vsel %vm1543, %v1120, 0
      %v1674 = vsel %vm1543, %v1122, 0
      %v1676 = vsel %vm1543, %v1125, 0
      %v1678 = vsel %vm1543, %v1127, 0
      %v1680 = vsel %vm1543, %v1130, 0
      %v1682 = vsel %vm1543, %v1132, 0
      %v1684 = vsel %vm1543, %v1135, 0
      %v1686 = vsel %vm1543, %v1137, 0
      %v1688 = vsel %vm1543, %v1140, 0
      %v1690 = vsel %vm1543, %v1142, 0
      %v1692 = vsel %vm1543, %v1145, 0
      %v1694 = vsel %vm1543, %v1147, 0
      %v1696 = vsel %vm1543, %v1150, 0
      %v1698 = vsel %vm1543, %v1152, 0
      %v1700 = vsel %vm1543, %v1227, 0
      %v1702 = vsel %vm1543, %v1229, 0
      %v1704 = vsel %vm1543, %v1240, 0
      %v1706 = vsel %vm1543, %v1242, 0
      %1708 = vmatprep.subr.mxu0 0.0
      %1709 = vmatpush1.msra.mxu0 %v886
      %1710 = vmatprep.subr.mxu0 0.0
      %1711 = vmatpush1.msra.mxu0 %v885
      %1712 = vmatprep.subr.mxu0 0.0
      %1713 = vmatpush1.msra.mxu0 %v884
      %1714 = vmatprep.subr.mxu0 0.0
      %1715 = vmatpush1.msra.mxu0 %v883
      %1716 = vmatprep.subr.mxu0 0.0
      %1717 = vmatpush1.msra.mxu0 %v882
      %1718 = vmatprep.subr.mxu0 0.0
      %1719 = vmatpush1.msra.mxu0 %v881
      %1720 = vmatprep.subr.mxu0 0.0
      %1721 = vmatpush1.msra.mxu0 %v880
      %1722 = vmatprep.subr.mxu0 0.0
      %1723 = vmatpush1.msra.mxu0 %v879
      %1724 = vmatprep.subr.mxu0 0.0
      %1725 = vmatpush1.msra.mxu0 %v878
      %1726 = vmatprep.subr.mxu0 0.0
      %1727 = vmatpush1.msra.mxu0 %v877
      %1728 = vmatprep.subr.mxu0 0.0
      %1729 = vmatpush1.msra.mxu0 %v876
      %1730 = vmatprep.subr.mxu0 0.0
      %1731 = vmatpush1.msra.mxu0 %v875
      %1732 = vmatprep.subr.mxu0 0.0
      %1733 = vmatpush1.msra.mxu0 %v874
      %1734 = vmatprep.subr.mxu0 0.0
      %1735 = vmatpush1.msra.mxu0 %v873
      %1736 = vmatprep.subr.mxu0 0.0
      %1737 = vmatpush1.msra.mxu0 %v872
      %1738 = vmatprep.subr.mxu0 0.0
      %1739 = vmatpush1.msra.mxu0 %v871
      %1740 = vmatprep.subr.mxu0 0.0
      %1741 = vmatpush2.msra.mxu0 %v902
      %1742 = vmatprep.subr.mxu0 0.0
      %1743 = vmatpush2.msra.mxu0 %v901
      %1744 = vmatprep.subr.mxu0 0.0
      %1745 = vmatpush2.msra.mxu0 %v900
      %1746 = vmatprep.subr.mxu0 0.0
      %1747 = vmatpush2.msra.mxu0 %v899
      %1748 = vmatprep.subr.mxu0 0.0
      %1749 = vmatpush2.msra.mxu0 %v898
      %1750 = vmatprep.subr.mxu0 0.0
      %1751 = vmatpush2.msra.mxu0 %v897
      %1752 = vmatprep.subr.mxu0 0.0
      %1753 = vmatpush2.msra.mxu0 %v896
      %1754 = vmatprep.subr.mxu0 0.0
      %1755 = vmatpush2.msra.mxu0 %v895
      %1756 = vmatprep.subr.mxu0 0.0
      %1757 = vmatpush2.msra.mxu0 %v894
      %1758 = vmatprep.subr.mxu0 0.0
      %1759 = vmatpush2.msra.mxu0 %v893
      %1760 = vmatprep.subr.mxu0 0.0
      %1761 = vmatpush2.msra.mxu0 %v892
      %1762 = vmatprep.subr.mxu0 0.0
      %1763 = vmatpush2.msra.mxu0 %v891
      %1764 = vmatprep.subr.mxu0 0.0
      %1765 = vmatpush2.msra.mxu0 %v890
      %1766 = vmatprep.subr.mxu0 0.0
      %1767 = vmatpush2.msra.mxu0 %v889
      %1768 = vmatprep.subr.mxu0 0.0
      %1769 = vmatpush2.msra.mxu0 %v888
      %1770 = vmatprep.subr.mxu0 0.0
      %1771 = vmatpush2.msra.mxu0 %v887
      %1772 = vmatprep.mubr.f32.mxu0 %v1576
      %1773 = vmatmul.mubr.f32.gmra.mxu0 %v1544
      %v1774 = vpop.f32.mrf.mxu0
      %v1775 = vadd.f32 0.0, %v1774
      %v1776 = vpop.f32.mrf.mxu0
      %1777 = vmatprep.mubr.f32.mxu0 %v1577
      %1778 = vmatmul.mubr.f32.gmra.mxu0 %v1545
      %v1779 = vpop.f32.mrf.mxu0
      %v1780 = vadd.f32 0.0, %v1779
      %v1781 = vpop.f32.mrf.mxu0
      %1782 = vmatprep.mubr.f32.mxu0 %v1578
      %1783 = vmatmul.mubr.f32.gmra.mxu0 %v1546
      %v1784 = vpop.f32.mrf.mxu0
      %v1785 = vadd.f32 0.0, %v1784
      %v1786 = vpop.f32.mrf.mxu0
      %1787 = vmatprep.mubr.f32.mxu0 %v1579
      %1788 = vmatmul.mubr.f32.gmra.mxu0 %v1547
      %v1789 = vpop.f32.mrf.mxu0
      %v1790 = vadd.f32 0.0, %v1789
      %v1791 = vpop.f32.mrf.mxu0
      %1792 = vmatprep.mubr.f32.mxu0 %v1580
      %1793 = vmatmul.mubr.f32.gmra.mxu0 %v1548
      %v1794 = vpop.f32.mrf.mxu0
      %v1795 = vadd.f32 0.0, %v1794
      %v1796 = vpop.f32.mrf.mxu0
      %1797 = vmatprep.mubr.f32.mxu0 %v1581
      %1798 = vmatmul.mubr.f32.gmra.mxu0 %v1549
      %v1799 = vpop.f32.mrf.mxu0
      %v1800 = vadd.f32 0.0, %v1799
      %v1801 = vpop.f32.mrf.mxu0
      %1802 = vmatprep.mubr.f32.mxu0 %v1582
      %1803 = vmatmul.mubr.f32.gmra.mxu0 %v1550
      %v1804 = vpop.f32.mrf.mxu0
      %v1805 = vadd.f32 0.0, %v1804
      %v1806 = vpop.f32.mrf.mxu0
      %1807 = vmatprep.mubr.f32.mxu0 %v1583
      %1808 = vmatmul.mubr.f32.gmra.mxu0 %v1551
      %v1809 = vpop.f32.mrf.mxu0
      %v1810 = vadd.f32 0.0, %v1809
      %v1811 = vpop.f32.mrf.mxu0
      %1812 = vmatprep.mubr.f32.mxu0 %v1584
      %1813 = vmatmul.mubr.f32.gmra.mxu0 %v1552
      %v1814 = vpop.f32.mrf.mxu0
      %v1815 = vadd.f32 0.0, %v1814
      %v1816 = vpop.f32.mrf.mxu0
      %1817 = vmatprep.mubr.f32.mxu0 %v1585
      %1818 = vmatmul.mubr.f32.gmra.mxu0 %v1553
      %v1819 = vpop.f32.mrf.mxu0
      %v1820 = vadd.f32 0.0, %v1819
      %v1821 = vpop.f32.mrf.mxu0
      %1822 = vmatprep.mubr.f32.mxu0 %v1586
      %1823 = vmatmul.mubr.f32.gmra.mxu0 %v1554
      %v1824 = vpop.f32.mrf.mxu0
      %v1825 = vadd.f32 0.0, %v1824
      %v1826 = vpop.f32.mrf.mxu0
      %1827 = vmatprep.mubr.f32.mxu0 %v1587
      %1828 = vmatmul.mubr.f32.gmra.mxu0 %v1555
      %v1829 = vpop.f32.mrf.mxu0
      %v1830 = vadd.f32 0.0, %v1829
      %v1831 = vpop.f32.mrf.mxu0
      %1832 = vmatprep.mubr.f32.mxu0 %v1588
      %1833 = vmatmul.mubr.f32.gmra.mxu0 %v1556
      %v1834 = vpop.f32.mrf.mxu0
      %v1835 = vadd.f32 0.0, %v1834
      %v1836 = vpop.f32.mrf.mxu0
      %1837 = vmatprep.mubr.f32.mxu0 %v1589
      %1838 = vmatmul.mubr.f32.gmra.mxu0 %v1557
      %v1839 = vpop.f32.mrf.mxu0
      %v1840 = vadd.f32 0.0, %v1839
      %v1841 = vpop.f32.mrf.mxu0
      %1842 = vmatprep.mubr.f32.mxu0 %v1590
      %1843 = vmatmul.mubr.f32.gmra.mxu0 %v1558
      %v1844 = vpop.f32.mrf.mxu0
      %v1845 = vadd.f32 0.0, %v1844
      %v1846 = vpop.f32.mrf.mxu0
      %1847 = vmatprep.mubr.f32.mxu0 %v1591
      %1848 = vmatmul.mubr.f32.gmra.mxu0 %v1559
      %v1849 = vpop.f32.mrf.mxu0
      %v1850 = vadd.f32 0.0, %v1849
      %v1851 = vpop.f32.mrf.mxu0
      %1852 = vmatprep.mubr.f32.mxu0 %v1592
      %1853 = vmatmul.mubr.f32.gmra.mxu0 %v1560
      %v1854 = vpop.f32.mrf.mxu0
      %v1855 = vadd.f32 0.0, %v1854
      %v1856 = vpop.f32.mrf.mxu0
      %1857 = vmatprep.mubr.f32.mxu0 %v1593
      %1858 = vmatmul.mubr.f32.gmra.mxu0 %v1561
      %v1859 = vpop.f32.mrf.mxu0
      %v1860 = vadd.f32 0.0, %v1859
      %v1861 = vpop.f32.mrf.mxu0
      %1862 = vmatprep.mubr.f32.mxu0 %v1594
      %1863 = vmatmul.mubr.f32.gmra.mxu0 %v1562
      %v1864 = vpop.f32.mrf.mxu0
      %v1865 = vadd.f32 0.0, %v1864
      %v1866 = vpop.f32.mrf.mxu0
      %1867 = vmatprep.mubr.f32.mxu0 %v1595
      %1868 = vmatmul.mubr.f32.gmra.mxu0 %v1563
      %v1869 = vpop.f32.mrf.mxu0
      %v1870 = vadd.f32 0.0, %v1869
      %v1871 = vpop.f32.mrf.mxu0
      %1872 = vmatprep.mubr.f32.mxu0 %v1596
      %1873 = vmatmul.mubr.f32.gmra.mxu0 %v1564
      %v1874 = vpop.f32.mrf.mxu0
      %v1875 = vadd.f32 0.0, %v1874
      %v1876 = vpop.f32.mrf.mxu0
      %1877 = vmatprep.mubr.f32.mxu0 %v1597
      %1878 = vmatmul.mubr.f32.gmra.mxu0 %v1565
      %v1879 = vpop.f32.mrf.mxu0
      %v1880 = vadd.f32 0.0, %v1879
      %v1881 = vpop.f32.mrf.mxu0
      %1882 = vmatprep.mubr.f32.mxu0 %v1598
      %1883 = vmatmul.mubr.f32.gmra.mxu0 %v1566
      %v1884 = vpop.f32.mrf.mxu0
      %v1885 = vadd.f32 0.0, %v1884
      %v1886 = vpop.f32.mrf.mxu0
      %1887 = vmatprep.mubr.f32.mxu0 %v1599
      %1888 = vmatmul.mubr.f32.gmra.mxu0 %v1567
      %v1889 = vpop.f32.mrf.mxu0
      %v1890 = vadd.f32 0.0, %v1889
      %v1891 = vpop.f32.mrf.mxu0
      %1892 = vmatprep.mubr.f32.mxu0 %v1600
      %1893 = vmatmul.mubr.f32.gmra.mxu0 %v1568
      %v1894 = vpop.f32.mrf.mxu0
      %v1895 = vadd.f32 0.0, %v1894
      %v1896 = vpop.f32.mrf.mxu0
      %1897 = vmatprep.mubr.f32.mxu0 %v1601
      %1898 = vmatmul.mubr.f32.gmra.mxu0 %v1569
      %v1899 = vpop.f32.mrf.mxu0
      %v1900 = vadd.f32 0.0, %v1899
      %v1901 = vpop.f32.mrf.mxu0
      %1902 = vmatprep.mubr.f32.mxu0 %v1602
      %1903 = vmatmul.mubr.f32.gmra.mxu0 %v1570
      %v1904 = vpop.f32.mrf.mxu0
      %v1905 = vadd.f32 0.0, %v1904
      %v1906 = vpop.f32.mrf.mxu0
      %1907 = vmatprep.mubr.f32.mxu0 %v1603
      %1908 = vmatmul.mubr.f32.gmra.mxu0 %v1571
      %v1909 = vpop.f32.mrf.mxu0
      %v1910 = vadd.f32 0.0, %v1909
      %v1911 = vpop.f32.mrf.mxu0
      %1912 = vmatprep.mubr.f32.mxu0 %v1604
      %1913 = vmatmul.mubr.f32.gmra.mxu0 %v1572
      %v1914 = vpop.f32.mrf.mxu0
      %v1915 = vadd.f32 0.0, %v1914
      %v1916 = vpop.f32.mrf.mxu0
      %1917 = vmatprep.mubr.f32.mxu0 %v1605
      %1918 = vmatmul.mubr.f32.gmra.mxu0 %v1573
      %v1919 = vpop.f32.mrf.mxu0
      %v1920 = vadd.f32 0.0, %v1919
      %v1921 = vpop.f32.mrf.mxu0
      %1922 = vmatprep.mubr.f32.mxu0 %v1606
      %1923 = vmatmul.mubr.f32.gmra.mxu0 %v1574
      %v1924 = vpop.f32.mrf.mxu0
      %v1925 = vadd.f32 0.0, %v1924
      %v1926 = vpop.f32.mrf.mxu0
      %1927 = vmatprep.mubr.f32.mxu0 %v1607
      %1928 = vmatmul.mubr.f32.gmra.mxu0 %v1575
      %v1929 = vpop.f32.mrf.mxu0
      %v1930 = vadd.f32 0.0, %v1929
      %v1931 = vpop.f32.mrf.mxu0
      %1932 = vdwg.mxu0
      %1933 = vmatprep.subr.mxu0 0.0
      %1934 = vmatpush1.msra.mxu0 %v918
      %1935 = vmatprep.subr.mxu0 0.0
      %1936 = vmatpush1.msra.mxu0 %v917
      %1937 = vmatprep.subr.mxu0 0.0
      %1938 = vmatpush1.msra.mxu0 %v916
      %1939 = vmatprep.subr.mxu0 0.0
      %1940 = vmatpush1.msra.mxu0 %v915
      %1941 = vmatprep.subr.mxu0 0.0
      %1942 = vmatpush1.msra.mxu0 %v914
      %1943 = vmatprep.subr.mxu0 0.0
      %1944 = vmatpush1.msra.mxu0 %v913
      %1945 = vmatprep.subr.mxu0 0.0
      %1946 = vmatpush1.msra.mxu0 %v912
      %1947 = vmatprep.subr.mxu0 0.0
      %1948 = vmatpush1.msra.mxu0 %v911
      %1949 = vmatprep.subr.mxu0 0.0
      %1950 = vmatpush1.msra.mxu0 %v910
      %1951 = vmatprep.subr.mxu0 0.0
      %1952 = vmatpush1.msra.mxu0 %v909
      %1953 = vmatprep.subr.mxu0 0.0
      %1954 = vmatpush1.msra.mxu0 %v908
      %1955 = vmatprep.subr.mxu0 0.0
      %1956 = vmatpush1.msra.mxu0 %v907
      %1957 = vmatprep.subr.mxu0 0.0
      %1958 = vmatpush1.msra.mxu0 %v906
      %1959 = vmatprep.subr.mxu0 0.0
      %1960 = vmatpush1.msra.mxu0 %v905
      %1961 = vmatprep.subr.mxu0 0.0
      %1962 = vmatpush1.msra.mxu0 %v904
      %1963 = vmatprep.subr.mxu0 0.0
      %1964 = vmatpush1.msra.mxu0 %v903
      %1965 = vmatprep.subr.mxu0 0.0
      %1966 = vmatpush2.msra.mxu0 %v934
      %1967 = vmatprep.subr.mxu0 0.0
      %1968 = vmatpush2.msra.mxu0 %v933
      %1969 = vmatprep.subr.mxu0 0.0
      %1970 = vmatpush2.msra.mxu0 %v932
      %1971 = vmatprep.subr.mxu0 0.0
      %1972 = vmatpush2.msra.mxu0 %v931
      %1973 = vmatprep.subr.mxu0 0.0
      %1974 = vmatpush2.msra.mxu0 %v930
      %1975 = vmatprep.subr.mxu0 0.0
      %1976 = vmatpush2.msra.mxu0 %v929
      %1977 = vmatprep.subr.mxu0 0.0
      %1978 = vmatpush2.msra.mxu0 %v928
      %1979 = vmatprep.subr.mxu0 0.0
      %1980 = vmatpush2.msra.mxu0 %v927
      %1981 = vmatprep.subr.mxu0 0.0
      %1982 = vmatpush2.msra.mxu0 %v926
      %1983 = vmatprep.subr.mxu0 0.0
      %1984 = vmatpush2.msra.mxu0 %v925
      %1985 = vmatprep.subr.mxu0 0.0
      %1986 = vmatpush2.msra.mxu0 %v924
      %1987 = vmatprep.subr.mxu0 0.0
      %1988 = vmatpush2.msra.mxu0 %v923
      %1989 = vmatprep.subr.mxu0 0.0
      %1990 = vmatpush2.msra.mxu0 %v922
      %1991 = vmatprep.subr.mxu0 0.0
      %1992 = vmatpush2.msra.mxu0 %v921
      %1993 = vmatprep.subr.mxu0 0.0
      %1994 = vmatpush2.msra.mxu0 %v920
      %1995 = vmatprep.subr.mxu0 0.0
      %1996 = vmatpush2.msra.mxu0 %v919
      %1997 = vmatprep.mubr.f32.mxu0 %v1548
      %1998 = vmatmul.mubr.f32.gmra.mxu0 %v1608
      %v1999 = vpop.f32.mrf.mxu0
      %v2000 = vadd.f32 %v1775, %v1999
      %v2001 = vpop.f32.mrf.mxu0
      %2002 = vmatprep.mubr.f32.mxu0 %v1549
      %2003 = vmatmul.mubr.f32.gmra.mxu0 %v1609
      %v2004 = vpop.f32.mrf.mxu0
      %v2005 = vadd.f32 %v1780, %v2004
      %v2006 = vpop.f32.mrf.mxu0
      %2007 = vmatprep.mubr.f32.mxu0 %v1550
      %2008 = vmatmul.mubr.f32.gmra.mxu0 %v1610
      %v2009 = vpop.f32.mrf.mxu0
      %v2010 = vadd.f32 %v1785, %v2009
      %v2011 = vpop.f32.mrf.mxu0
      %2012 = vmatprep.mubr.f32.mxu0 %v1551
      %2013 = vmatmul.mubr.f32.gmra.mxu0 %v1611
      %v2014 = vpop.f32.mrf.mxu0
      %v2015 = vadd.f32 %v1790, %v2014
      %v2016 = vpop.f32.mrf.mxu0
      %2017 = vmatprep.mubr.f32.mxu0 %v1552
      %2018 = vmatmul.mubr.f32.gmra.mxu0 %v1612
      %v2019 = vpop.f32.mrf.mxu0
      %v2020 = vadd.f32 %v1795, %v2019
      %v2021 = vpop.f32.mrf.mxu0
      %2022 = vmatprep.mubr.f32.mxu0 %v1553
      %2023 = vmatmul.mubr.f32.gmra.mxu0 %v1613
      %v2024 = vpop.f32.mrf.mxu0
      %v2025 = vadd.f32 %v1800, %v2024
      %v2026 = vpop.f32.mrf.mxu0
      %2027 = vmatprep.mubr.f32.mxu0 %v1554
      %2028 = vmatmul.mubr.f32.gmra.mxu0 %v1614
      %v2029 = vpop.f32.mrf.mxu0
      %v2030 = vadd.f32 %v1805, %v2029
      %v2031 = vpop.f32.mrf.mxu0
      %2032 = vmatprep.mubr.f32.mxu0 %v1555
      %2033 = vmatmul.mubr.f32.gmra.mxu0 %v1615
      %v2034 = vpop.f32.mrf.mxu0
      %v2035 = vadd.f32 %v1810, %v2034
      %v2036 = vpop.f32.mrf.mxu0
      %2037 = vmatprep.mubr.f32.mxu0 %v1556
      %2038 = vmatmul.mubr.f32.gmra.mxu0 %v1616
      %v2039 = vpop.f32.mrf.mxu0
      %v2040 = vadd.f32 %v1815, %v2039
      %v2041 = vpop.f32.mrf.mxu0
      %2042 = vmatprep.mubr.f32.mxu0 %v1557
      %2043 = vmatmul.mubr.f32.gmra.mxu0 %v1617
      %v2044 = vpop.f32.mrf.mxu0
      %v2045 = vadd.f32 %v1820, %v2044
      %v2046 = vpop.f32.mrf.mxu0
      %2047 = vmatprep.mubr.f32.mxu0 %v1558
      %2048 = vmatmul.mubr.f32.gmra.mxu0 %v1618
      %v2049 = vpop.f32.mrf.mxu0
      %v2050 = vadd.f32 %v1825, %v2049
      %v2051 = vpop.f32.mrf.mxu0
      %2052 = vmatprep.mubr.f32.mxu0 %v1559
      %2053 = vmatmul.mubr.f32.gmra.mxu0 %v1619
      %v2054 = vpop.f32.mrf.mxu0
      %v2055 = vadd.f32 %v1830, %v2054
      %v2056 = vpop.f32.mrf.mxu0
      %2057 = vmatprep.mubr.f32.mxu0 %v1560
      %2058 = vmatmul.mubr.f32.gmra.mxu0 %v1620
      %v2059 = vpop.f32.mrf.mxu0
      %v2060 = vadd.f32 %v1835, %v2059
      %v2061 = vpop.f32.mrf.mxu0
      %2062 = vmatprep.mubr.f32.mxu0 %v1561
      %2063 = vmatmul.mubr.f32.gmra.mxu0 %v1621
      %v2064 = vpop.f32.mrf.mxu0
      %v2065 = vadd.f32 %v1840, %v2064
      %v2066 = vpop.f32.mrf.mxu0
      %2067 = vmatprep.mubr.f32.mxu0 %v1562
      %2068 = vmatmul.mubr.f32.gmra.mxu0 %v1622
      %v2069 = vpop.f32.mrf.mxu0
      %v2070 = vadd.f32 %v1845, %v2069
      %v2071 = vpop.f32.mrf.mxu0
      %2072 = vmatprep.mubr.f32.mxu0 %v1563
      %2073 = vmatmul.mubr.f32.gmra.mxu0 %v1623
      %v2074 = vpop.f32.mrf.mxu0
      %v2075 = vadd.f32 %v1850, %v2074
      %v2076 = vpop.f32.mrf.mxu0
      %2077 = vmatprep.mubr.f32.mxu0 %v1564
      %2078 = vmatmul.mubr.f32.gmra.mxu0 %v1624
      %v2079 = vpop.f32.mrf.mxu0
      %v2080 = vadd.f32 %v1855, %v2079
      %v2081 = vpop.f32.mrf.mxu0
      %2082 = vmatprep.mubr.f32.mxu0 %v1565
      %2083 = vmatmul.mubr.f32.gmra.mxu0 %v1625
      %v2084 = vpop.f32.mrf.mxu0
      %v2085 = vadd.f32 %v1860, %v2084
      %v2086 = vpop.f32.mrf.mxu0
      %2087 = vmatprep.mubr.f32.mxu0 %v1566
      %2088 = vmatmul.mubr.f32.gmra.mxu0 %v1626
      %v2089 = vpop.f32.mrf.mxu0
      %v2090 = vadd.f32 %v1865, %v2089
      %v2091 = vpop.f32.mrf.mxu0
      %2092 = vmatprep.mubr.f32.mxu0 %v1567
      %2093 = vmatmul.mubr.f32.gmra.mxu0 %v1627
      %v2094 = vpop.f32.mrf.mxu0
      %v2095 = vadd.f32 %v1870, %v2094
      %v2096 = vpop.f32.mrf.mxu0
      %2097 = vmatprep.mubr.f32.mxu0 %v1568
      %2098 = vmatmul.mubr.f32.gmra.mxu0 %v1628
      %v2099 = vpop.f32.mrf.mxu0
      %v2100 = vadd.f32 %v1875, %v2099
      %v2101 = vpop.f32.mrf.mxu0
      %2102 = vmatprep.mubr.f32.mxu0 %v1569
      %2103 = vmatmul.mubr.f32.gmra.mxu0 %v1629
      %v2104 = vpop.f32.mrf.mxu0
      %v2105 = vadd.f32 %v1880, %v2104
      %v2106 = vpop.f32.mrf.mxu0
      %2107 = vmatprep.mubr.f32.mxu0 %v1570
      %2108 = vmatmul.mubr.f32.gmra.mxu0 %v1630
      %v2109 = vpop.f32.mrf.mxu0
      %v2110 = vadd.f32 %v1885, %v2109
      %v2111 = vpop.f32.mrf.mxu0
      %2112 = vmatprep.mubr.f32.mxu0 %v1571
      %2113 = vmatmul.mubr.f32.gmra.mxu0 %v1631
      %v2114 = vpop.f32.mrf.mxu0
      %v2115 = vadd.f32 %v1890, %v2114
      %v2116 = vpop.f32.mrf.mxu0
      %2117 = vmatprep.mubr.f32.mxu0 %v1572
      %2118 = vmatmul.mubr.f32.gmra.mxu0 %v1632
      %v2119 = vpop.f32.mrf.mxu0
      %v2120 = vadd.f32 %v1895, %v2119
      %v2121 = vpop.f32.mrf.mxu0
      %2122 = vmatprep.mubr.f32.mxu0 %v1573
      %2123 = vmatmul.mubr.f32.gmra.mxu0 %v1633
      %v2124 = vpop.f32.mrf.mxu0
      %v2125 = vadd.f32 %v1900, %v2124
      %v2126 = vpop.f32.mrf.mxu0
      %2127 = vmatprep.mubr.f32.mxu0 %v1574
      %2128 = vmatmul.mubr.f32.gmra.mxu0 %v1634
      %v2129 = vpop.f32.mrf.mxu0
      %v2130 = vadd.f32 %v1905, %v2129
      %v2131 = vpop.f32.mrf.mxu0
      %2132 = vmatprep.mubr.f32.mxu0 %v1575
      %2133 = vmatmul.mubr.f32.gmra.mxu0 %v1635
      %v2134 = vpop.f32.mrf.mxu0
      %v2135 = vadd.f32 %v1910, %v2134
      %v2136 = vpop.f32.mrf.mxu0
      %2137 = vmatprep.mubr.f32.mxu0 %v1640
      %2138 = vmatmul.mubr.f32.gmra.mxu0 %v1636
      %v2139 = vpop.f32.mrf.mxu0
      %v2140 = vadd.f32 %v1915, %v2139
      %v2141 = vpop.f32.mrf.mxu0
      %2142 = vmatprep.mubr.f32.mxu0 %v1641
      %2143 = vmatmul.mubr.f32.gmra.mxu0 %v1637
      %v2144 = vpop.f32.mrf.mxu0
      %v2145 = vadd.f32 %v1920, %v2144
      %v2146 = vpop.f32.mrf.mxu0
      %2147 = vmatprep.mubr.f32.mxu0 %v1642
      %2148 = vmatmul.mubr.f32.gmra.mxu0 %v1638
      %v2149 = vpop.f32.mrf.mxu0
      %v2150 = vadd.f32 %v1925, %v2149
      %v2151 = vpop.f32.mrf.mxu0
      %2152 = vmatprep.mubr.f32.mxu0 %v1643
      %2153 = vmatmul.mubr.f32.gmra.mxu0 %v1639
      %v2154 = vpop.f32.mrf.mxu0
      %v2155 = vadd.f32 %v1930, %v2154
      %v2156 = vpop.f32.mrf.mxu0
      %2157 = vdwg.mxu0
      %2158 = vmatprep.subr.mxu0 0.0
      %2159 = vmatpush1.msra.mxu0 0.0
      %2160 = vmatprep.subr.mxu0 0.0
      %2161 = vmatpush1.msra.mxu0 0.0
      %2162 = vmatprep.subr.mxu0 0.0
      %2163 = vmatpush1.msra.mxu0 0.0
      %2164 = vmatprep.subr.mxu0 0.0
      %2165 = vmatpush1.msra.mxu0 0.0
      %2166 = vmatprep.subr.mxu0 0.0
      %2167 = vmatpush1.msra.mxu0 0.0
      %2168 = vmatprep.subr.mxu0 0.0
      %2169 = vmatpush1.msra.mxu0 0.0
      %2170 = vmatprep.subr.mxu0 0.0
      %2171 = vmatpush1.msra.mxu0 0.0
      %2172 = vmatprep.subr.mxu0 0.0
      %2173 = vmatpush1.msra.mxu0 0.0
      %2174 = vmatprep.subr.mxu0 0.0
      %2175 = vmatpush1.msra.mxu0 %v942
      %2176 = vmatprep.subr.mxu0 0.0
      %2177 = vmatpush1.msra.mxu0 %v941
      %2178 = vmatprep.subr.mxu0 0.0
      %2179 = vmatpush1.msra.mxu0 %v940
      %2180 = vmatprep.subr.mxu0 0.0
      %2181 = vmatpush1.msra.mxu0 %v939
      %2182 = vmatprep.subr.mxu0 0.0
      %2183 = vmatpush1.msra.mxu0 %v938
      %2184 = vmatprep.subr.mxu0 0.0
      %2185 = vmatpush1.msra.mxu0 %v937
      %2186 = vmatprep.subr.mxu0 0.0
      %2187 = vmatpush1.msra.mxu0 %v936
      %2188 = vmatprep.subr.mxu0 0.0
      %2189 = vmatpush1.msra.mxu0 %v935
      %2190 = vmatprep.subr.mxu0 0.0
      %2191 = vmatpush2.msra.mxu0 0.0
      %2192 = vmatprep.subr.mxu0 0.0
      %2193 = vmatpush2.msra.mxu0 0.0
      %2194 = vmatprep.subr.mxu0 0.0
      %2195 = vmatpush2.msra.mxu0 0.0
      %2196 = vmatprep.subr.mxu0 0.0
      %2197 = vmatpush2.msra.mxu0 0.0
      %2198 = vmatprep.subr.mxu0 0.0
      %2199 = vmatpush2.msra.mxu0 0.0
      %2200 = vmatprep.subr.mxu0 0.0
      %2201 = vmatpush2.msra.mxu0 0.0
      %2202 = vmatprep.subr.mxu0 0.0
      %2203 = vmatpush2.msra.mxu0 0.0
      %2204 = vmatprep.subr.mxu0 0.0
      %2205 = vmatpush2.msra.mxu0 0.0
      %2206 = vmatprep.subr.mxu0 0.0
      %2207 = vmatpush2.msra.mxu0 0.0
      %2208 = vmatprep.subr.mxu0 0.0
      %2209 = vmatpush2.msra.mxu0 0.0
      %2210 = vmatprep.subr.mxu0 0.0
      %2211 = vmatpush2.msra.mxu0 0.0
      %2212 = vmatprep.subr.mxu0 0.0
      %2213 = vmatpush2.msra.mxu0 0.0
      %2214 = vmatprep.subr.mxu0 0.0
      %2215 = vmatpush2.msra.mxu0 0.0
      %2216 = vmatprep.subr.mxu0 0.0
      %2217 = vmatpush2.msra.mxu0 0.0
      %2218 = vmatprep.subr.mxu0 0.0
      %2219 = vmatpush2.msra.mxu0 0.0
      %2220 = vmatprep.subr.mxu0 0.0
      %2221 = vmatpush2.msra.mxu0 0.0
      %2222 = vmatprep.mubr.f32.mxu0 0.0
      %2223 = vmatmul.mubr.f32.gmra.mxu0 %v1644
      %v2224 = vpop.f32.mrf.mxu0
      %v2225 = vadd.f32 %v2000, %v2224
      %v2226 = vpop.f32.mrf.mxu0
      %2227 = vmatprep.mubr.f32.mxu0 0.0
      %2228 = vmatmul.mubr.f32.gmra.mxu0 %v1646
      %v2229 = vpop.f32.mrf.mxu0
      %v2230 = vadd.f32 %v2005, %v2229
      %v2231 = vpop.f32.mrf.mxu0
      %2232 = vmatprep.mubr.f32.mxu0 0.0
      %2233 = vmatmul.mubr.f32.gmra.mxu0 %v1648
      %v2234 = vpop.f32.mrf.mxu0
      %v2235 = vadd.f32 %v2010, %v2234
      %v2236 = vpop.f32.mrf.mxu0
      %2237 = vmatprep.mubr.f32.mxu0 0.0
      %2238 = vmatmul.mubr.f32.gmra.mxu0 %v1650
      %v2239 = vpop.f32.mrf.mxu0
      %v2240 = vadd.f32 %v2015, %v2239
      %v2241 = vpop.f32.mrf.mxu0
      %2242 = vmatprep.mubr.f32.mxu0 0.0
      %2243 = vmatmul.mubr.f32.gmra.mxu0 %v1652
      %v2244 = vpop.f32.mrf.mxu0
      %v2245 = vadd.f32 %v2020, %v2244
      %v2246 = vpop.f32.mrf.mxu0
      %2247 = vmatprep.mubr.f32.mxu0 0.0
      %2248 = vmatmul.mubr.f32.gmra.mxu0 %v1654
      %v2249 = vpop.f32.mrf.mxu0
      %v2250 = vadd.f32 %v2025, %v2249
      %v2251 = vpop.f32.mrf.mxu0
      %2252 = vmatprep.mubr.f32.mxu0 0.0
      %2253 = vmatmul.mubr.f32.gmra.mxu0 %v1656
      %v2254 = vpop.f32.mrf.mxu0
      %v2255 = vadd.f32 %v2030, %v2254
      %v2256 = vpop.f32.mrf.mxu0
      %2257 = vmatprep.mubr.f32.mxu0 0.0
      %2258 = vmatmul.mubr.f32.gmra.mxu0 %v1658
      %v2259 = vpop.f32.mrf.mxu0
      %v2260 = vadd.f32 %v2035, %v2259
      %v2261 = vpop.f32.mrf.mxu0
      %2262 = vmatprep.mubr.f32.mxu0 0.0
      %2263 = vmatmul.mubr.f32.gmra.mxu0 %v1660
      %v2264 = vpop.f32.mrf.mxu0
      %v2265 = vadd.f32 %v2040, %v2264
      %v2266 = vpop.f32.mrf.mxu0
      %2267 = vmatprep.mubr.f32.mxu0 0.0
      %2268 = vmatmul.mubr.f32.gmra.mxu0 %v1662
      %v2269 = vpop.f32.mrf.mxu0
      %v2270 = vadd.f32 %v2045, %v2269
      %v2271 = vpop.f32.mrf.mxu0
      %2272 = vmatprep.mubr.f32.mxu0 0.0
      %2273 = vmatmul.mubr.f32.gmra.mxu0 %v1664
      %v2274 = vpop.f32.mrf.mxu0
      %v2275 = vadd.f32 %v2050, %v2274
      %v2276 = vpop.f32.mrf.mxu0
      %2277 = vmatprep.mubr.f32.mxu0 0.0
      %2278 = vmatmul.mubr.f32.gmra.mxu0 %v1666
      %v2279 = vpop.f32.mrf.mxu0
      %v2280 = vadd.f32 %v2055, %v2279
      %v2281 = vpop.f32.mrf.mxu0
      %2282 = vmatprep.mubr.f32.mxu0 0.0
      %2283 = vmatmul.mubr.f32.gmra.mxu0 %v1668
      %v2284 = vpop.f32.mrf.mxu0
      %v2285 = vadd.f32 %v2060, %v2284
      %v2286 = vpop.f32.mrf.mxu0
      %2287 = vmatprep.mubr.f32.mxu0 0.0
      %2288 = vmatmul.mubr.f32.gmra.mxu0 %v1670
      %v2289 = vpop.f32.mrf.mxu0
      %v2290 = vadd.f32 %v2065, %v2289
      %v2291 = vpop.f32.mrf.mxu0
      %2292 = vmatprep.mubr.f32.mxu0 0.0
      %2293 = vmatmul.mubr.f32.gmra.mxu0 %v1672
      %v2294 = vpop.f32.mrf.mxu0
      %v2295 = vadd.f32 %v2070, %v2294
      %v2296 = vpop.f32.mrf.mxu0
      %2297 = vmatprep.mubr.f32.mxu0 0.0
      %2298 = vmatmul.mubr.f32.gmra.mxu0 %v1674
      %v2299 = vpop.f32.mrf.mxu0
      %v2300 = vadd.f32 %v2075, %v2299
      %v2301 = vpop.f32.mrf.mxu0
      %2302 = vmatprep.mubr.f32.mxu0 0.0
      %2303 = vmatmul.mubr.f32.gmra.mxu0 %v1676
      %v2304 = vpop.f32.mrf.mxu0
      %v2305 = vadd.f32 %v2080, %v2304
      %v2306 = vpop.f32.mrf.mxu0
      %2307 = vmatprep.mubr.f32.mxu0 0.0
      %2308 = vmatmul.mubr.f32.gmra.mxu0 %v1678
      %v2309 = vpop.f32.mrf.mxu0
      %v2310 = vadd.f32 %v2085, %v2309
      %v2311 = vpop.f32.mrf.mxu0
      %2312 = vmatprep.mubr.f32.mxu0 0.0
      %2313 = vmatmul.mubr.f32.gmra.mxu0 %v1680
      %v2314 = vpop.f32.mrf.mxu0
      %v2315 = vadd.f32 %v2090, %v2314
      %v2316 = vpop.f32.mrf.mxu0
      %2317 = vmatprep.mubr.f32.mxu0 0.0
      %2318 = vmatmul.mubr.f32.gmra.mxu0 %v1682
      %v2319 = vpop.f32.mrf.mxu0
      %v2320 = vadd.f32 %v2095, %v2319
      %v2321 = vpop.f32.mrf.mxu0
      %2322 = vmatprep.mubr.f32.mxu0 0.0
      %2323 = vmatmul.mubr.f32.gmra.mxu0 %v1684
      %v2324 = vpop.f32.mrf.mxu0
      %v2325 = vadd.f32 %v2100, %v2324
      %v2326 = vpop.f32.mrf.mxu0
      %2327 = vmatprep.mubr.f32.mxu0 0.0
      %2328 = vmatmul.mubr.f32.gmra.mxu0 %v1686
      %v2329 = vpop.f32.mrf.mxu0
      %v2330 = vadd.f32 %v2105, %v2329
      %v2331 = vpop.f32.mrf.mxu0
      %2332 = vmatprep.mubr.f32.mxu0 0.0
      %2333 = vmatmul.mubr.f32.gmra.mxu0 %v1688
      %v2334 = vpop.f32.mrf.mxu0
      %v2335 = vadd.f32 %v2110, %v2334
      %v2336 = vpop.f32.mrf.mxu0
      %2337 = vmatprep.mubr.f32.mxu0 0.0
      %2338 = vmatmul.mubr.f32.gmra.mxu0 %v1690
      %v2339 = vpop.f32.mrf.mxu0
      %v2340 = vadd.f32 %v2115, %v2339
      %v2341 = vpop.f32.mrf.mxu0
      %2342 = vmatprep.mubr.f32.mxu0 0.0
      %2343 = vmatmul.mubr.f32.gmra.mxu0 %v1692
      %v2344 = vpop.f32.mrf.mxu0
      %v2345 = vadd.f32 %v2120, %v2344
      %v2346 = vpop.f32.mrf.mxu0
      %2347 = vmatprep.mubr.f32.mxu0 0.0
      %2348 = vmatmul.mubr.f32.gmra.mxu0 %v1694
      %v2349 = vpop.f32.mrf.mxu0
      %v2350 = vadd.f32 %v2125, %v2349
      %v2351 = vpop.f32.mrf.mxu0
      %2352 = vmatprep.mubr.f32.mxu0 0.0
      %2353 = vmatmul.mubr.f32.gmra.mxu0 %v1696
      %v2354 = vpop.f32.mrf.mxu0
      %v2355 = vadd.f32 %v2130, %v2354
      %v2356 = vpop.f32.mrf.mxu0
      %2357 = vmatprep.mubr.f32.mxu0 0.0
      %2358 = vmatmul.mubr.f32.gmra.mxu0 %v1698
      %v2359 = vpop.f32.mrf.mxu0
      %v2360 = vadd.f32 %v2135, %v2359
      %v2361 = vpop.f32.mrf.mxu0
      %2362 = vmatprep.mubr.f32.mxu0 0.0
      %2363 = vmatmul.mubr.f32.gmra.mxu0 %v1700
      %v2364 = vpop.f32.mrf.mxu0
      %v2365 = vadd.f32 %v2140, %v2364
      %v2366 = vpop.f32.mrf.mxu0
      %2367 = vmatprep.mubr.f32.mxu0 0.0
      %2368 = vmatmul.mubr.f32.gmra.mxu0 %v1702
      %v2369 = vpop.f32.mrf.mxu0
      %v2370 = vadd.f32 %v2145, %v2369
      %v2371 = vpop.f32.mrf.mxu0
      %2372 = vmatprep.mubr.f32.mxu0 0.0
      %2373 = vmatmul.mubr.f32.gmra.mxu0 %v1704
      %v2374 = vpop.f32.mrf.mxu0
      %v2375 = vadd.f32 %v2150, %v2374
      %v2376 = vpop.f32.mrf.mxu0
      %2377 = vmatprep.mubr.f32.mxu0 0.0
      %2378 = vmatmul.mubr.f32.gmra.mxu0 %v1706
      %v2379 = vpop.f32.mrf.mxu0
      %v2380 = vadd.f32 %v2155, %v2379
      %v2381 = vpop.f32.mrf.mxu0
      %2382 = vdwg.mxu0
      %vm2383 = vcmask 31744
      %2384 = vst.msk [vmem:[%s258] sm:$0xff] %vm2383, %v2225
      %2385 = vst.msk [vmem:[%s258 + $0x8] sm:$0xff] %vm2383, %v2230
      %2386 = vst.msk [vmem:[%s258 + $0x10] sm:$0xff] %vm2383, %v2235
      %2387 = vst.msk [vmem:[%s258 + $0x18] sm:$0xff] %vm2383, %v2240
      %2388 = vst.msk [vmem:[%s258 + $0x20] sm:$0xff] %vm2383, %v2245
      %2389 = vst.msk [vmem:[%s258 + $0x28] sm:$0xff] %vm2383, %v2250
      %2390 = vst.msk [vmem:[%s258 + $0x30] sm:$0xff] %vm2383, %v2255
      %2391 = vst.msk [vmem:[%s258 + $0x38] sm:$0xff] %vm2383, %v2260
      %2392 = vst.msk [vmem:[%s258 + $0x40] sm:$0xff] %vm2383, %v2265
      %2393 = vst.msk [vmem:[%s258 + $0x48] sm:$0xff] %vm2383, %v2270
      %2394 = vst.msk [vmem:[%s258 + $0x50] sm:$0xff] %vm2383, %v2275
      %2395 = vst.msk [vmem:[%s258 + $0x58] sm:$0xff] %vm2383, %v2280
      %2396 = vst.msk [vmem:[%s258 + $0x60] sm:$0xff] %vm2383, %v2285
      %2397 = vst.msk [vmem:[%s258 + $0x68] sm:$0xff] %vm2383, %v2290
      %2398 = vst.msk [vmem:[%s258 + $0x70] sm:$0xff] %vm2383, %v2295
      %2399 = vst.msk [vmem:[%s258 + $0x78] sm:$0xff] %vm2383, %v2300
      %2400 = vst.msk [vmem:[%s258 + $0x80] sm:$0xff] %vm2383, %v2305
      %2401 = vst.msk [vmem:[%s258 + $0x88] sm:$0xff] %vm2383, %v2310
      %2402 = vst.msk [vmem:[%s258 + $0x90] sm:$0xff] %vm2383, %v2315
      %2403 = vst.msk [vmem:[%s258 + $0x98] sm:$0xff] %vm2383, %v2320
      %2404 = vst.msk [vmem:[%s258 + $0xa0] sm:$0xff] %vm2383, %v2325
      %2405 = vst.msk [vmem:[%s258 + $0xa8] sm:$0xff] %vm2383, %v2330
      %2406 = vst.msk [vmem:[%s258 + $0xb0] sm:$0xff] %vm2383, %v2335
      %2407 = vst.msk [vmem:[%s258 + $0xb8] sm:$0xff] %vm2383, %v2340
      %2408 = vst.msk [vmem:[%s258 + $0xc0] sm:$0xff] %vm2383, %v2345
      %2409 = vst.msk [vmem:[%s258 + $0xc8] sm:$0xff] %vm2383, %v2350
      %2410 = vst.msk [vmem:[%s258 + $0xd0] sm:$0xff] %vm2383, %v2355
      %2411 = vst.msk [vmem:[%s258 + $0xd8] sm:$0xff] %vm2383, %v2360
      %2412 = vst.msk [vmem:[%s258 + $0xe0] sm:$0xff] %vm2383, %v2365
      %2413 = vst.msk [vmem:[%s258 + $0xe8] sm:$0xff] %vm2383, %v2370
      %2414 = vst.msk [vmem:[%s258 + $0xf0] sm:$0xff] %vm2383, %v2375
      %2415 = vst.msk [vmem:[%s258 + $0xf8] sm:$0xff] %vm2383, %v2380
      %v2416 = vsel %vm2383, %v2225, 0.0
      %v2417 = vsel %vm2383, %v2230, 0.0
      %v2418 = vadd.f32 %v2416, %v2417
      %v2419 = vsel %vm2383, %v2235, 0.0
      %v2420 = vadd.f32 %v2418, %v2419
      %v2421 = vsel %vm2383, %v2240, 0.0
      %v2422 = vadd.f32 %v2420, %v2421
      %v2423 = vsel %vm2383, %v2245, 0.0
      %v2424 = vadd.f32 %v2422, %v2423
      %v2425 = vsel %vm2383, %v2250, 0.0
      %v2426 = vadd.f32 %v2424, %v2425
      %v2427 = vsel %vm2383, %v2255, 0.0
      %v2428 = vadd.f32 %v2426, %v2427
      %v2429 = vsel %vm2383, %v2260, 0.0
      %v2430 = vadd.f32 %v2428, %v2429
      %v2431 = vsel %vm2383, %v2265, 0.0
      %v2432 = vadd.f32 %v2430, %v2431
      %v2433 = vsel %vm2383, %v2270, 0.0
      %v2434 = vadd.f32 %v2432, %v2433
      %v2435 = vsel %vm2383, %v2275, 0.0
      %v2436 = vadd.f32 %v2434, %v2435
      %v2437 = vsel %vm2383, %v2280, 0.0
      %v2438 = vadd.f32 %v2436, %v2437
      %v2439 = vsel %vm2383, %v2285, 0.0
      %v2440 = vadd.f32 %v2438, %v2439
      %v2441 = vsel %vm2383, %v2290, 0.0
      %v2442 = vadd.f32 %v2440, %v2441
      %v2443 = vsel %vm2383, %v2295, 0.0
      %v2444 = vadd.f32 %v2442, %v2443
      %v2445 = vsel %vm2383, %v2300, 0.0
      %v2446 = vadd.f32 %v2444, %v2445
      %v2447 = vsel %vm2383, %v2305, 0.0
      %v2448 = vadd.f32 %v2446, %v2447
      %v2449 = vsel %vm2383, %v2310, 0.0
      %v2450 = vadd.f32 %v2448, %v2449
      %v2451 = vsel %vm2383, %v2315, 0.0
      %v2452 = vadd.f32 %v2450, %v2451
      %v2453 = vsel %vm2383, %v2320, 0.0
      %v2454 = vadd.f32 %v2452, %v2453
      %v2455 = vsel %vm2383, %v2325, 0.0
      %v2456 = vadd.f32 %v2454, %v2455
      %v2457 = vsel %vm2383, %v2330, 0.0
      %v2458 = vadd.f32 %v2456, %v2457
      %v2459 = vsel %vm2383, %v2335, 0.0
      %v2460 = vadd.f32 %v2458, %v2459
      %v2461 = vsel %vm2383, %v2340, 0.0
      %v2462 = vadd.f32 %v2460, %v2461
      %v2463 = vsel %vm2383, %v2345, 0.0
      %v2464 = vadd.f32 %v2462, %v2463
      %v2465 = vsel %vm2383, %v2350, 0.0
      %v2466 = vadd.f32 %v2464, %v2465
      %v2467 = vsel %vm2383, %v2355, 0.0
      %v2468 = vadd.f32 %v2466, %v2467
      %v2469 = vsel %vm2383, %v2360, 0.0
      %v2470 = vadd.f32 %v2468, %v2469
      %v2471 = vsel %vm2383, %v2365, 0.0
      %v2472 = vadd.f32 %v2470, %v2471
      %v2473 = vsel %vm2383, %v2370, 0.0
      %v2474 = vadd.f32 %v2472, %v2473
      %v2475 = vsel %vm2383, %v2375, 0.0
      %v2476 = vadd.f32 %v2474, %v2475
      %v2477 = vsel %vm2383, %v2380, 0.0
      %v2478 = vadd.f32 %v2476, %v2477
      %v2479 = vrot.slane %v2478, 4
      %v2480 = vadd.f32 %v2478, %v2479
      %v2481 = vrot.slane %v2480, 2
      %v2482 = vadd.f32 %v2480, %v2481
      %v2483 = vrot.slane %v2482, 1
      %v2484 = vadd.f32 %v2482, %v2483
      %v2485 = vmul.f32 %v2225, %v2225
      %v2486 = vmul.f32 %v2230, %v2230
      %v2487 = vmul.f32 %v2235, %v2235
      %v2488 = vmul.f32 %v2240, %v2240
      %v2489 = vmul.f32 %v2245, %v2245
      %v2490 = vmul.f32 %v2250, %v2250
      %v2491 = vmul.f32 %v2255, %v2255
      %v2492 = vmul.f32 %v2260, %v2260
      %v2493 = vmul.f32 %v2265, %v2265
      %v2494 = vmul.f32 %v2270, %v2270
      %v2495 = vmul.f32 %v2275, %v2275
      %v2496 = vmul.f32 %v2280, %v2280
      %v2497 = vmul.f32 %v2285, %v2285
      %v2498 = vmul.f32 %v2290, %v2290
      %v2499 = vmul.f32 %v2295, %v2295
      %v2500 = vmul.f32 %v2300, %v2300
      %v2501 = vmul.f32 %v2305, %v2305
      %v2502 = vmul.f32 %v2310, %v2310
      %v2503 = vmul.f32 %v2315, %v2315
      %v2504 = vmul.f32 %v2320, %v2320
      %v2505 = vmul.f32 %v2325, %v2325
      %v2506 = vmul.f32 %v2330, %v2330
      %v2507 = vmul.f32 %v2335, %v2335
      %v2508 = vmul.f32 %v2340, %v2340
      %v2509 = vmul.f32 %v2345, %v2345
      %v2510 = vmul.f32 %v2350, %v2350
      %v2511 = vmul.f32 %v2355, %v2355
      %v2512 = vmul.f32 %v2360, %v2360
      %v2513 = vmul.f32 %v2365, %v2365
      %v2514 = vmul.f32 %v2370, %v2370
      %v2515 = vmul.f32 %v2375, %v2375
      %v2516 = vmul.f32 %v2380, %v2380
      %v2517 = vsel %vm2383, %v2485, 0.0
      %v2518 = vsel %vm2383, %v2486, 0.0
      %v2519 = vadd.f32 %v2517, %v2518
      %v2520 = vsel %vm2383, %v2487, 0.0
      %v2521 = vadd.f32 %v2519, %v2520
      %v2522 = vsel %vm2383, %v2488, 0.0
      %v2523 = vadd.f32 %v2521, %v2522
      %v2524 = vsel %vm2383, %v2489, 0.0
      %v2525 = vadd.f32 %v2523, %v2524
      %v2526 = vsel %vm2383, %v2490, 0.0
      %v2527 = vadd.f32 %v2525, %v2526
      %v2528 = vsel %vm2383, %v2491, 0.0
      %v2529 = vadd.f32 %v2527, %v2528
      %v2530 = vsel %vm2383, %v2492, 0.0
      %v2531 = vadd.f32 %v2529, %v2530
      %v2532 = vsel %vm2383, %v2493, 0.0
      %v2533 = vadd.f32 %v2531, %v2532
      %v2534 = vsel %vm2383, %v2494, 0.0
      %v2535 = vadd.f32 %v2533, %v2534
      %v2536 = vsel %vm2383, %v2495, 0.0
      %v2537 = vadd.f32 %v2535, %v2536
      %v2538 = vsel %vm2383, %v2496, 0.0
      %v2539 = vadd.f32 %v2537, %v2538
      %v2540 = vsel %vm2383, %v2497, 0.0
      %v2541 = vadd.f32 %v2539, %v2540
      %v2542 = vsel %vm2383, %v2498, 0.0
      %v2543 = vadd.f32 %v2541, %v2542
      %v2544 = vsel %vm2383, %v2499, 0.0
      %v2545 = vadd.f32 %v2543, %v2544
      %v2546 = vsel %vm2383, %v2500, 0.0
      %v2547 = vadd.f32 %v2545, %v2546
      %v2548 = vsel %vm2383, %v2501, 0.0
      %v2549 = vadd.f32 %v2547, %v2548
      %v2550 = vsel %vm2383, %v2502, 0.0
      %v2551 = vadd.f32 %v2549, %v2550
      %v2552 = vsel %vm2383, %v2503, 0.0
      %v2553 = vadd.f32 %v2551, %v2552
      %v2554 = vsel %vm2383, %v2504, 0.0
      %v2555 = vadd.f32 %v2553, %v2554
      %v2556 = vsel %vm2383, %v2505, 0.0
      %v2557 = vadd.f32 %v2555, %v2556
      %v2558 = vsel %vm2383, %v2506, 0.0
      %v2559 = vadd.f32 %v2557, %v2558
      %v2560 = vsel %vm2383, %v2507, 0.0
      %v2561 = vadd.f32 %v2559, %v2560
      %v2562 = vsel %vm2383, %v2508, 0.0
      %v2563 = vadd.f32 %v2561, %v2562
      %v2564 = vsel %vm2383, %v2509, 0.0
      %v2565 = vadd.f32 %v2563, %v2564
      %v2566 = vsel %vm2383, %v2510, 0.0
      %v2567 = vadd.f32 %v2565, %v2566
      %v2568 = vsel %vm2383, %v2511, 0.0
      %v2569 = vadd.f32 %v2567, %v2568
      %v2570 = vsel %vm2383, %v2512, 0.0
      %v2571 = vadd.f32 %v2569, %v2570
      %v2572 = vsel %vm2383, %v2513, 0.0
      %v2573 = vadd.f32 %v2571, %v2572
      %v2574 = vsel %vm2383, %v2514, 0.0
      %v2575 = vadd.f32 %v2573, %v2574
      %v2576 = vsel %vm2383, %v2515, 0.0
      %v2577 = vadd.f32 %v2575, %v2576
      %v2578 = vsel %vm2383, %v2516, 0.0
      %v2579 = vadd.f32 %v2577, %v2578
      %v2580 = vrot.slane %v2579, 4
      %v2581 = vadd.f32 %v2579, %v2580
      %v2582 = vrot.slane %v2581, 2
      %v2583 = vadd.f32 %v2581, %v2582
      %v2584 = vrot.slane %v2583, 1
      %v2585 = vadd.f32 %v2583, %v2584
      %vm2586 = vcmask 1040384
      %v2587 = vsel %vm2586, %v2484, %v2585
      %vm2588 = vcmask 25600
      %2589 = vst.msk [vmem:[%s262] sm:$0x3] %vm2588, %v2587
      %p2590 = scmp.lt.s32.totalorder %s18, 1
      %s2591 = scalar_select %p2590, %s18, 1
      %s2592 = smul.addr %s2591, 32
      %s2593 = smul.addr %s2592, 8
      %s2594 = scalar_lea.vmem %s5, %s2593
      %p2595 = scmp.lt.s32.totalorder %s18, 1
      %s2596 = scalar_select %p2595, %s18, 1
      %s2597 = smul.addr %s2596, 2
      %s2598 = scalar_lea.vmem %s6, %s2597
      // Predicated region
      $region41: #{deep_supervision_block_v2.4} parent=39 // pred_check
        %p2599 = pneg %p146
      $region42: #{deep_supervision_block_v2.4} parent=39 // pred_check_branch
        %2601 = sbr.rel (%p2599) target = $region44
      $region43: #{deep_supervision_block_v2.4} parent=39 // pred_region
        _
      $region44: #{deep_supervision_block_v2.4} parent=39 // pred_fallthru
        _
      // Predicated region
      $region45: #{deep_supervision_block_v2.4} parent=39 // pred_check
        %p2602 = pneg %p172
      $region46: #{deep_supervision_block_v2.4} parent=39 // pred_check_branch
        %2604 = sbr.rel (%p2602) target = $region48
      $region47: #{deep_supervision_block_v2.4} parent=39 // pred_region
        _
      $region48: #{deep_supervision_block_v2.4} parent=39 // pred_fallthru
        _
    $region40: #{deep_supervision_block_v2.4} parent=5 // pred_fallthru
      _
    %p2605 = scmp.le.s32.totalorder 2, %s13
    // Predicated region
    $region49: #{deep_supervision_block_v2.4} parent=5 // pred_check
      %p2606 = pneg %p2605
    $region50: #{deep_supervision_block_v2.4} parent=5 // pred_check_branch
      %2608 = sbr.rel (%p2606) target = $region52
    $region51: #{deep_supervision_block_v2.4} parent=5 // pred_region
      %s2609 = ssub.s32 %s13, 2
      // Predicated region
      $region53: #{deep_supervision_block_v2.4} parent=51 // pred_check
        %p2610 = pneg %p152
      $region54: #{deep_supervision_block_v2.4} parent=51 // pred_check_branch
        %2612 = sbr.rel (%p2610) target = $region56
      $region55: #{deep_supervision_block_v2.4} parent=51 // pred_region
        %p2613 = scmp.lt.s32.totalorder %s19, 1
        %s2614 = scalar_select %p2613, %s19, 1
        %s2615 = smul.addr %s2614, 32
        %s2616 = smul.addr %s2615, 8
        %s2617 = scalar_lea.vmem %s5, %s2616
      $region56: #{deep_supervision_block_v2.4} parent=51 // pred_fallthru
        _
      // Predicated region
      $region57: #{deep_supervision_block_v2.4} parent=51 // pred_check
        %p2618 = pneg %p178
      $region58: #{deep_supervision_block_v2.4} parent=51 // pred_check_branch
        %2620 = sbr.rel (%p2618) target = $region60
      $region59: #{deep_supervision_block_v2.4} parent=51 // pred_region
        %p2621 = scmp.lt.s32.totalorder %s19, 1
        %s2622 = scalar_select %p2621, %s19, 1
        %s2623 = smul.addr %s2622, 2
        %s2624 = scalar_lea.vmem %s6, %s2623
      $region60: #{deep_supervision_block_v2.4} parent=51 // pred_fallthru
        _
    $region52: #{deep_supervision_block_v2.4} parent=5 // pred_fallthru
      _
  $region6: #{deep_supervision_block_v2.4} parent=0 // loop_footer
    %s17 = sadd.s32 1, %s13
  $region7: #{deep_supervision_block_v2.4} parent=0 // loop_footer_branch
    %12 = sbr.rel target = $region3
  $region8: #{deep_supervision_block_v2.4} parent=0 // loop_exit
    _

// kernel: deep_supervision_block_v2.5
$region0: #{deep_supervision_block_v2.5}
  #allocation0 [shape = 'u32[]', space=smem, size = 0x4, offset = 0x4, fixed_abs, tag = 'smem constant byte address 0x4 - core index']
  #allocation1 [shape = 'u32[144,128]{1,0:T(1,128)}', space=vmem, size = 0x12000, scoped, tag = 'internal scratch']
  %s0 = inlined_call_operand.vmem [shape: f32[2,4,256], index: 0, kind: input, shape index: {}]
  %s1 = inlined_call_operand.vmem [shape: f32[2,4,256], index: 1, kind: input, shape index: {}]
  %s2 = inlined_call_operand.vmem [shape: f32[4,1], index: 2, kind: input, shape index: {}]
  %s3 = inlined_call_operand.vmem [shape: f32[4,1], index: 3, kind: input, shape index: {}]
  %s4 = inlined_call_operand.vmem [shape: f32[3,4], index: 4, kind: input, shape index: {}]
  %s5 = inlined_call_operand.vmem [shape: f32[3,1], index: 5, kind: input, shape index: {}]
  %s6 = inlined_call_operand.vmem [shape: f32[256,1024], index: 6, kind: input, shape index: {}]
  %s7 = inlined_call_operand.vmem [shape: f32[2,3,1024], index: 7, kind: output, shape index: {}]
  %s8 = sld [smem:[#allocation0]]
  $region61: #{deep_supervision_block_v2.5} parent=0
    _
  %s10 = ssub.s32 1, %s8
  %s11 = scalar_select 0, %s10, %s8
  loop: start=0, step=1, limit=4
  $region2: #{deep_supervision_block_v2.5} parent=0 // loop_pre_header
    _
  $region3: #{deep_supervision_block_v2.5} parent=0 // loop_header
    %s13 = sphi 0, %s17
    %p14 = scmp.ge.s32.totalorder %s13, 4
    %s23 = sphi 0, %s25
    %s26 = sphi 0, %s23
    %s27 = sphi 0, %s26
    %s43 = sphi 0, %s27
    %s49 = sphi 0, %s51
    %s52 = sphi 0, %s49
    %s53 = sphi 0, %s52
    %s69 = sphi 0, %s53
    %s73 = sphi 0, %s73
    %s75 = sphi 0, %s73
    %s76 = sphi 0, %s75
    %s90 = sphi 0, %s76
    %s94 = sphi 0, %s94
    %s96 = sphi 0, %s94
    %s97 = sphi 0, %s96
    %s111 = sphi 0, %s97
    %s115 = sphi 0, %s115
    %s117 = sphi 0, %s115
    %s118 = sphi 0, %s117
    %s132 = sphi 0, %s118
    %s136 = sphi 0, %s136
    %s138 = sphi 0, %s136
    %s139 = sphi 0, %s138
    %s153 = sphi 0, %s139
    %s157 = sphi 0, %s157
    %s159 = sphi 0, %s157
    %s160 = sphi 0, %s159
    %s174 = sphi 0, %s160
    %s180 = sphi 0, %s182
    %s183 = sphi 0, %s180
    %s184 = sphi 0, %s183
    %s200 = sphi 0, %s184
  $region4: #{deep_supervision_block_v2.5} parent=0 // loop_header_branch
    %16 = sbr.rel (%p14) target = $region8
  $region5: #{deep_supervision_block_v2.5} parent=0 // loop_body
    %s18 = ssub.s32 %s13, 1
    %s19 = ssub.s32 %s13, 2
    %s20 = sadd.s32 %s13, 1
    %s21 = ssub.s32 %s13, %s20
    %p22 = scmp.eq.s32.totalorder %s21, 0
    %s24 = sadd.s32 %s23, 1
    %s25 = scalar_select %p22, %s23, %s24
    %p28 = pneg %p22
    %p29 = scmp.eq.s32.totalorder %s13, 1
    %p30 = por %p28, %p29
    %p31 = scmp.ne.s32.totalorder %s23, %s26
    %p32 = scmp.eq.s32.totalorder %s13, 0
    %p33 = por %p31, %p32
    %p34 = scmp.ne.s32.totalorder %s23, %s26
    %p35 = scmp.eq.s32.totalorder %s18, 1
    %p36 = por %p34, %p35
    %p37 = scmp.ne.s32.totalorder %s26, %s27
    %p38 = scmp.eq.s32.totalorder %s18, 0
    %p39 = por %p37, %p38
    %p40 = scmp.ne.s32.totalorder %s26, %s27
    %p41 = scmp.eq.s32.totalorder %s19, 1
    %p42 = por %p40, %p41
    %p44 = scmp.ne.s32.totalorder %s27, %s43
    %p45 = scmp.eq.s32.totalorder %s19, 0
    %p46 = por %p44, %p45
    %s47 = ssub.s32 %s13, %s20
    %p48 = scmp.eq.s32.totalorder %s47, 0
    %s50 = sadd.s32 %s49, 1
    %s51 = scalar_select %p48, %s49, %s50
    %p54 = pneg %p48
    %p55 = scmp.eq.s32.totalorder %s13, 1
    %p56 = por %p54, %p55
    %p57 = scmp.ne.s32.totalorder %s49, %s52
    %p58 = scmp.eq.s32.totalorder %s13, 0
    %p59 = por %p57, %p58
    %p60 = scmp.ne.s32.totalorder %s49, %s52
    %p61 = scmp.eq.s32.totalorder %s18, 1
    %p62 = por %p60, %p61
    %p63 = scmp.ne.s32.totalorder %s52, %s53
    %p64 = scmp.eq.s32.totalorder %s18, 0
    %p65 = por %p63, %p64
    %p66 = scmp.ne.s32.totalorder %s52, %s53
    %p67 = scmp.eq.s32.totalorder %s19, 1
    %p68 = por %p66, %p67
    %p70 = scmp.ne.s32.totalorder %s53, %s69
    %p71 = scmp.eq.s32.totalorder %s19, 0
    %p72 = por %p70, %p71
    %s74 = sadd.s32 %s73, 1
    %p77 = scmp.eq.s32.totalorder %s13, 1
    %p78 = scmp.ne.s32.totalorder %s73, %s75
    %p79 = scmp.eq.s32.totalorder %s13, 0
    %p80 = por %p78, %p79
    %p81 = scmp.ne.s32.totalorder %s73, %s75
    %p82 = scmp.eq.s32.totalorder %s18, 1
    %p83 = por %p81, %p82
    %p84 = scmp.ne.s32.totalorder %s75, %s76
    %p85 = scmp.eq.s32.totalorder %s18, 0
    %p86 = por %p84, %p85
    %p87 = scmp.ne.s32.totalorder %s75, %s76
    %p88 = scmp.eq.s32.totalorder %s19, 1
    %p89 = por %p87, %p88
    %p91 = scmp.ne.s32.totalorder %s76, %s90
    %p92 = scmp.eq.s32.totalorder %s19, 0
    %p93 = por %p91, %p92
    %s95 = sadd.s32 %s94, 1
    %p98 = scmp.eq.s32.totalorder %s13, 1
    %p99 = scmp.ne.s32.totalorder %s94, %s96
    %p100 = scmp.eq.s32.totalorder %s13, 0
    %p101 = por %p99, %p100
    %p102 = scmp.ne.s32.totalorder %s94, %s96
    %p103 = scmp.eq.s32.totalorder %s18, 1
    %p104 = por %p102, %p103
    %p105 = scmp.ne.s32.totalorder %s96, %s97
    %p106 = scmp.eq.s32.totalorder %s18, 0
    %p107 = por %p105, %p106
    %p108 = scmp.ne.s32.totalorder %s96, %s97
    %p109 = scmp.eq.s32.totalorder %s19, 1
    %p110 = por %p108, %p109
    %p112 = scmp.ne.s32.totalorder %s97, %s111
    %p113 = scmp.eq.s32.totalorder %s19, 0
    %p114 = por %p112, %p113
    %s116 = sadd.s32 %s115, 1
    %p119 = scmp.eq.s32.totalorder %s13, 1
    %p120 = scmp.ne.s32.totalorder %s115, %s117
    %p121 = scmp.eq.s32.totalorder %s13, 0
    %p122 = por %p120, %p121
    %p123 = scmp.ne.s32.totalorder %s115, %s117
    %p124 = scmp.eq.s32.totalorder %s18, 1
    %p125 = por %p123, %p124
    %p126 = scmp.ne.s32.totalorder %s117, %s118
    %p127 = scmp.eq.s32.totalorder %s18, 0
    %p128 = por %p126, %p127
    %p129 = scmp.ne.s32.totalorder %s117, %s118
    %p130 = scmp.eq.s32.totalorder %s19, 1
    %p131 = por %p129, %p130
    %p133 = scmp.ne.s32.totalorder %s118, %s132
    %p134 = scmp.eq.s32.totalorder %s19, 0
    %p135 = por %p133, %p134
    %s137 = sadd.s32 %s136, 1
    %p140 = scmp.eq.s32.totalorder %s13, 1
    %p141 = scmp.ne.s32.totalorder %s136, %s138
    %p142 = scmp.eq.s32.totalorder %s13, 0
    %p143 = por %p141, %p142
    %p144 = scmp.ne.s32.totalorder %s136, %s138
    %p145 = scmp.eq.s32.totalorder %s18, 1
    %p146 = por %p144, %p145
    %p147 = scmp.ne.s32.totalorder %s138, %s139
    %p148 = scmp.eq.s32.totalorder %s18, 0
    %p149 = por %p147, %p148
    %p150 = scmp.ne.s32.totalorder %s138, %s139
    %p151 = scmp.eq.s32.totalorder %s19, 1
    %p152 = por %p150, %p151
    %p154 = scmp.ne.s32.totalorder %s139, %s153
    %p155 = scmp.eq.s32.totalorder %s19, 0
    %p156 = por %p154, %p155
    %s158 = sadd.s32 %s157, 1
    %p161 = scmp.eq.s32.totalorder %s13, 1
    %p162 = scmp.ne.s32.totalorder %s157, %s159
    %p163 = scmp.eq.s32.totalorder %s13, 0
    %p164 = por %p162, %p163
    %p165 = scmp.ne.s32.totalorder %s157, %s159
    %p166 = scmp.eq.s32.totalorder %s18, 1
    %p167 = por %p165, %p166
    %p168 = scmp.ne.s32.totalorder %s159, %s160
    %p169 = scmp.eq.s32.totalorder %s18, 0
    %p170 = por %p168, %p169
    %p171 = scmp.ne.s32.totalorder %s159, %s160
    %p172 = scmp.eq.s32.totalorder %s19, 1
    %p173 = por %p171, %p172
    %p175 = scmp.ne.s32.totalorder %s160, %s174
    %p176 = scmp.eq.s32.totalorder %s19, 0
    %p177 = por %p175, %p176
    %s178 = ssub.s32 %s13, %s20
    %p179 = scmp.eq.s32.totalorder %s178, 0
    %s181 = sadd.s32 %s180, 1
    %s182 = scalar_select %p179, %s180, %s181
    %p185 = pneg %p179
    %p186 = scmp.eq.s32.totalorder %s13, 1
    %p187 = por %p185, %p186
    %p188 = scmp.ne.s32.totalorder %s180, %s183
    %p189 = scmp.eq.s32.totalorder %s13, 0
    %p190 = por %p188, %p189
    %p191 = scmp.ne.s32.totalorder %s180, %s183
    %p192 = scmp.eq.s32.totalorder %s18, 1
    %p193 = por %p191, %p192
    %p194 = scmp.ne.s32.totalorder %s183, %s184
    %p195 = scmp.eq.s32.totalorder %s18, 0
    %p196 = por %p194, %p195
    %p197 = scmp.ne.s32.totalorder %s183, %s184
    %p198 = scmp.eq.s32.totalorder %s19, 1
    %p199 = por %p197, %p198
    %p201 = scmp.ne.s32.totalorder %s184, %s200
    %p202 = scmp.eq.s32.totalorder %s19, 0
    %p203 = por %p201, %p202
    %p204 = scmp.le.s32.totalorder 1, %s13
    %p205 = scmp.lt.s32.totalorder %s13, 3
    %p206 = pnand %p204, %p205
    %p207 = pneg %p206
    // Predicated region
    $region9: #{deep_supervision_block_v2.5} parent=5 // pred_check
      _
    $region10: #{deep_supervision_block_v2.5} parent=5 // pred_check_branch
      %209 = sbr.rel (%p206) target = $region12
    $region11: #{deep_supervision_block_v2.5} parent=5 // pred_region
      %s210 = ssub.s32 %s13, 1
      // Predicated region
      $region13: #{deep_supervision_block_v2.5} parent=11 // pred_check
        %p211 = pneg %p86
      $region14: #{deep_supervision_block_v2.5} parent=11 // pred_check_branch
        %213 = sbr.rel (%p211) target = $region16
      $region15: #{deep_supervision_block_v2.5} parent=11 // pred_region
        _
      $region16: #{deep_supervision_block_v2.5} parent=11 // pred_fallthru
        _
      // Predicated region
      $region17: #{deep_supervision_block_v2.5} parent=11 // pred_check
        %p214 = pneg %p107
      $region18: #{deep_supervision_block_v2.5} parent=11 // pred_check_branch
        %216 = sbr.rel (%p214) target = $region20
      $region19: #{deep_supervision_block_v2.5} parent=11 // pred_region
        _
      $region20: #{deep_supervision_block_v2.5} parent=11 // pred_fallthru
        _
      // Predicated region
      $region21: #{deep_supervision_block_v2.5} parent=11 // pred_check
        %p217 = pneg %p128
      $region22: #{deep_supervision_block_v2.5} parent=11 // pred_check_branch
        %219 = sbr.rel (%p217) target = $region24
      $region23: #{deep_supervision_block_v2.5} parent=11 // pred_region
        _
      $region24: #{deep_supervision_block_v2.5} parent=11 // pred_fallthru
        _
      // Predicated region
      $region25: #{deep_supervision_block_v2.5} parent=11 // pred_check
        %p220 = pneg %p149
      $region26: #{deep_supervision_block_v2.5} parent=11 // pred_check_branch
        %222 = sbr.rel (%p220) target = $region28
      $region27: #{deep_supervision_block_v2.5} parent=11 // pred_region
        _
      $region28: #{deep_supervision_block_v2.5} parent=11 // pred_fallthru
        _
      // Predicated region
      $region29: #{deep_supervision_block_v2.5} parent=11 // pred_check
        %p223 = pneg %p170
      $region30: #{deep_supervision_block_v2.5} parent=11 // pred_check_branch
        %225 = sbr.rel (%p223) target = $region32
      $region31: #{deep_supervision_block_v2.5} parent=11 // pred_region
        _
      $region32: #{deep_supervision_block_v2.5} parent=11 // pred_fallthru
        _
    $region12: #{deep_supervision_block_v2.5} parent=5 // pred_fallthru
      _
    %p226 = scmp.lt.s32.totalorder %s13, 2
    // Predicated region
    $region33: #{deep_supervision_block_v2.5} parent=5 // pred_check
      %p227 = pneg %p226
    $region34: #{deep_supervision_block_v2.5} parent=5 // pred_check_branch
      %229 = sbr.rel (%p227) target = $region36
    $region35: #{deep_supervision_block_v2.5} parent=5 // pred_region
      // Predicated region
      $region37: #{deep_supervision_block_v2.5} parent=35 // pred_check
        %p230 = pneg %p33
      $region38: #{deep_supervision_block_v2.5} parent=35 // pred_check_branch
        %232 = sbr.rel (%p230) target = $region40
      $region39: #{deep_supervision_block_v2.5} parent=35 // pred_region
        %p233 = scmp.lt.s32.totalorder %s13, 1
        %s234 = scalar_select %p233, %s13, 1
        %s235 = smul.addr %s234, 2
        %s236 = smul.addr %s235, 4
        %s237 = scalar_lea.vmem %s0, %s236
      $region40: #{deep_supervision_block_v2.5} parent=35 // pred_fallthru
        _
      // Predicated region
      $region41: #{deep_supervision_block_v2.5} parent=35 // pred_check
        %p238 = pneg %p59
      $region42: #{deep_supervision_block_v2.5} parent=35 // pred_check_branch
        %240 = sbr.rel (%p238) target = $region44
      $region43: #{deep_supervision_block_v2.5} parent=35 // pred_region
        %p241 = scmp.lt.s32.totalorder %s13, 1
        %s242 = scalar_select %p241, %s13, 1
        %s243 = smul.addr %s242, 2
        %s244 = smul.addr %s243, 4
        %s245 = scalar_lea.vmem %s1, %s244
      $region44: #{deep_supervision_block_v2.5} parent=35 // pred_fallthru
        _
    $region36: #{deep_supervision_block_v2.5} parent=5 // pred_fallthru
      _
    %p246 = scmp.le.s32.totalorder 1, %s13
    %p247 = scmp.lt.s32.totalorder %s13, 3
    %p248 = pnand %p246, %p247
    %p249 = pneg %p248
    // Predicated region
    $region45: #{deep_supervision_block_v2.5} parent=5 // pred_check
      _
    $region46: #{deep_supervision_block_v2.5} parent=5 // pred_check_branch
      %251 = sbr.rel (%p248) target = $region48
    $region47: #{deep_supervision_block_v2.5} parent=5 // pred_region
      %s252 = ssub.s32 %s13, 1
      %p253 = scmp.lt.s32.totalorder %s18, 1
      %s254 = scalar_select %p253, %s18, 1
      %s255 = smul.addr %s254, 2
      %s256 = smul.addr %s255, 4
      %s257 = scalar_lea.vmem %s0, %s256
      %p258 = pneg %p39
      %p259 = pneg %p36
      %p260 = scmp.lt.s32.totalorder %s18, 1
      %s261 = scalar_select %p260, %s18, 1
      %s262 = smul.addr %s261, 2
      %s263 = smul.addr %s262, 4
      %s264 = scalar_lea.vmem %s1, %s263
      %p265 = pneg %p65
      %p266 = pneg %p62
      %p267 = pneg %p86
      %p268 = pneg %p83
      %p269 = pneg %p107
      %p270 = pneg %p104
      %p271 = pneg %p128
      %p272 = pneg %p125
      %p273 = pneg %p149
      %p274 = pneg %p146
      %p275 = pneg %p170
      %p276 = pneg %p167
      %p277 = pneg %p196
      %p278 = pneg %p193
      %p279 = scmp.lt.s32.totalorder %s18, 1
      %s280 = scalar_select %p279, %s18, 1
      %s281 = smul.addr %s280, 8
      %s282 = smul.addr %s281, 4
      %s283 = scalar_lea.vmem %s7, %s282
      %p284 = scmp.lt.s32.totalorder %s18, 1
      %s285 = scalar_select %p284, %s18, 1
      %s286 = smul.addr %s285, 2
      %s287 = smul.addr %s286, 4
      %s288 = scalar_lea.vmem %s0, %s287
      %p289 = scmp.lt.s32.totalorder %s18, 1
      %s290 = scalar_select %p289, %s18, 1
      %s291 = smul.addr %s290, 2
      %s292 = smul.addr %s291, 4
      %s293 = scalar_lea.vmem %s1, %s292
      %p294 = scmp.lt.s32.totalorder %s18, 1
      %s295 = scalar_select %p294, %s18, 1
      %s296 = smul.addr %s295, 8
      %s297 = smul.addr %s296, 4
      %s298 = scalar_lea.vmem %s7, %s297
      %v299 = vld [vmem:[%s288] sm:$0xff]
      %v300 = vld [vmem:[%s2] sm:$0xf]
      %302 = vset.pattern.permute.xlu0 0
      %303 = vperm.xlu0 %302, %v300
      %v304 = vpop.permute.xlu0 %303
      %v306 = vunpack.c.l.s4 839922192
      %v307 = vunpack.c.0.s8 %v306
      %v308 = vlaneseq
      %v309 = vshrl.u32 %v308, 7
      %v310 = vsub.s32 %v307, %v309
      %v311 = vrot.slane %v304, %v310
      %v313 = vmul.f32 %v299, %v311
      %v314 = vld [vmem:[%s3] sm:$0xf]
      %316 = vset.pattern.permute.xlu0 0
      %317 = vperm.xlu0 %316, %v314
      %v318 = vpop.permute.xlu0 %317
      %v320 = vunpack.c.l.s4 839922192
      %v321 = vunpack.c.0.s8 %v320
      %v322 = vlaneseq
      %v323 = vshrl.u32 %v322, 7
      %v324 = vsub.s32 %v321, %v323
      %v325 = vrot.slane %v318, %v324
      %v327 = vadd.f32 %v313, %v325
      %v328 = vld [vmem:[%s293] sm:$0xff]
      %v329 = vadd.f32 %v327, %v328
      %v330 = vmax.f32 %v329, 0.0
      %v331 = vld [vmem:[%s4] sm:$0x7]
      %v332 = vld [vmem:[%s5] sm:$0x7]
      %334 = vset.pattern.permute.xlu0 0
      %335 = vperm.xlu0 %334, %v332
      %v336 = vpop.permute.xlu0 %335
      %v339 = vcombine.high %v330, %v330
      %vm340 = vcmask 31744
      %v342 = vsel %vm340, %v331, 0
      %vm344 = vcmask 1043456
      %v345 = vsel %vm344, %v330, 0
      %v347 = vsel %vm344, %v339, 0
      %349 = vmatprep.subr.mxu0 0.0
      %350 = vmatpush1.msra.mxu0 0.0
      %351 = vmatprep.subr.mxu0 0.0
      %352 = vmatpush1.msra.mxu0 0.0
      %353 = vmatprep.subr.mxu0 0.0
      %354 = vmatpush1.msra.mxu0 0.0
      %355 = vmatprep.subr.mxu0 0.0
      %356 = vmatpush1.msra.mxu0 0.0
      %357 = vmatprep.subr.mxu0 0.0
      %358 = vmatpush1.msra.mxu0 0.0
      %359 = vmatprep.subr.mxu0 0.0
      %360 = vmatpush1.msra.mxu0 0.0
      %361 = vmatprep.subr.mxu0 0.0
      %362 = vmatpush1.msra.mxu0 0.0
      %363 = vmatprep.subr.mxu0 0.0
      %364 = vmatpush1.msra.mxu0 0.0
      %365 = vmatprep.subr.mxu0 0.0
      %366 = vmatpush1.msra.mxu0 0.0
      %367 = vmatprep.subr.mxu0 0.0
      %368 = vmatpush1.msra.mxu0 0.0
      %369 = vmatprep.subr.mxu0 0.0
      %370 = vmatpush1.msra.mxu0 0.0
      %371 = vmatprep.subr.mxu0 0.0
      %372 = vmatpush1.msra.mxu0 0.0
      %373 = vmatprep.subr.mxu0 0.0
      %374 = vmatpush1.msra.mxu0 0.0
      %375 = vmatprep.subr.mxu0 0.0
      %376 = vmatpush1.msra.mxu0 0.0
      %377 = vmatprep.subr.mxu0 0.0
      %378 = vmatpush1.msra.mxu0 0.0
      %379 = vmatprep.subr.mxu0 %v347
      %380 = vmatpush1.msra.mxu0 %v345
      %381 = vmatprep.subr.mxu0 0.0
      %382 = vmatpush2.msra.mxu0 0.0
      %383 = vmatprep.subr.mxu0 0.0
      %384 = vmatpush2.msra.mxu0 0.0
      %385 = vmatprep.subr.mxu0 0.0
      %386 = vmatpush2.msra.mxu0 0.0
      %387 = vmatprep.subr.mxu0 0.0
      %388 = vmatpush2.msra.mxu0 0.0
      %389 = vmatprep.subr.mxu0 0.0
      %390 = vmatpush2.msra.mxu0 0.0
      %391 = vmatprep.subr.mxu0 0.0
      %392 = vmatpush2.msra.mxu0 0.0
      %393 = vmatprep.subr.mxu0 0.0
      %394 = vmatpush2.msra.mxu0 0.0
      %395 = vmatprep.subr.mxu0 0.0
      %396 = vmatpush2.msra.mxu0 0.0
      %397 = vmatprep.subr.mxu0 0.0
      %398 = vmatpush2.msra.mxu0 0.0
      %399 = vmatprep.subr.mxu0 0.0
      %400 = vmatpush2.msra.mxu0 0.0
      %401 = vmatprep.subr.mxu0 0.0
      %402 = vmatpush2.msra.mxu0 0.0
      %403 = vmatprep.subr.mxu0 0.0
      %404 = vmatpush2.msra.mxu0 0.0
      %405 = vmatprep.subr.mxu0 0.0
      %406 = vmatpush2.msra.mxu0 0.0
      %407 = vmatprep.subr.mxu0 0.0
      %408 = vmatpush2.msra.mxu0 0.0
      %409 = vmatprep.subr.mxu0 0.0
      %410 = vmatpush2.msra.mxu0 0.0
      %411 = vmatprep.subr.mxu0 0.0
      %412 = vmatpush2.msra.mxu0 0.0
      %413 = vmatprep.mubr.f32.mxu0 0.0
      %414 = vmatmul.mubr.f32.gmra.mxu0 %v342
      %v415 = vpop.f32.mrf.mxu0
      %v416 = vadd.f32 %v336, %v415
      %v417 = vpop.f32.mrf.mxu0
      %v418 = vadd.f32 %v336, %v417
      %419 = vdwg.mxu0
      %v420 = vld [vmem:[%s6] sm:$0xff]
      %v421 = vld [vmem:[%s6 + $0x8] sm:$0xff]
      %v422 = vld [vmem:[%s6 + $0x10] sm:$0xff]
      %v423 = vld [vmem:[%s6 + $0x18] sm:$0xff]
      %v424 = vld [vmem:[%s6 + $0x20] sm:$0xff]
      %v425 = vld [vmem:[%s6 + $0x28] sm:$0xff]
      %v426 = vld [vmem:[%s6 + $0x30] sm:$0xff]
      %v427 = vld [vmem:[%s6 + $0x38] sm:$0xff]
      %v428 = vld [vmem:[%s6 + $0x40] sm:$0xff]
      %v429 = vld [vmem:[%s6 + $0x48] sm:$0xff]
      %v430 = vld [vmem:[%s6 + $0x50] sm:$0xff]
      %v431 = vld [vmem:[%s6 + $0x58] sm:$0xff]
      %v432 = vld [vmem:[%s6 + $0x60] sm:$0xff]
      %v433 = vld [vmem:[%s6 + $0x68] sm:$0xff]
      %v434 = vld [vmem:[%s6 + $0x70] sm:$0xff]
      %v435 = vld [vmem:[%s6 + $0x78] sm:$0xff]
      %v436 = vld [vmem:[%s6 + $0x80] sm:$0xff]
      %v437 = vld [vmem:[%s6 + $0x88] sm:$0xff]
      %v438 = vld [vmem:[%s6 + $0x90] sm:$0xff]
      %v439 = vld [vmem:[%s6 + $0x98] sm:$0xff]
      %v440 = vld [vmem:[%s6 + $0xa0] sm:$0xff]
      %v441 = vld [vmem:[%s6 + $0xa8] sm:$0xff]
      %v442 = vld [vmem:[%s6 + $0xb0] sm:$0xff]
      %v443 = vld [vmem:[%s6 + $0xb8] sm:$0xff]
      %v444 = vld [vmem:[%s6 + $0xc0] sm:$0xff]
      %v445 = vld [vmem:[%s6 + $0xc8] sm:$0xff]
      %v446 = vld [vmem:[%s6 + $0xd0] sm:$0xff]
      %v447 = vld [vmem:[%s6 + $0xd8] sm:$0xff]
      %v448 = vld [vmem:[%s6 + $0xe0] sm:$0xff]
      %v449 = vld [vmem:[%s6 + $0xe8] sm:$0xff]
      %v450 = vld [vmem:[%s6 + $0xf0] sm:$0xff]
      %v451 = vld [vmem:[%s6 + $0xf8] sm:$0xff]
      %v452 = vld [vmem:[%s6 + $0x100] sm:$0xff]
      %v453 = vld [vmem:[%s6 + $0x108] sm:$0xff]
      %v454 = vld [vmem:[%s6 + $0x110] sm:$0xff]
      %v455 = vld [vmem:[%s6 + $0x118] sm:$0xff]
      %v456 = vld [vmem:[%s6 + $0x120] sm:$0xff]
      %v457 = vld [vmem:[%s6 + $0x128] sm:$0xff]
      %v458 = vld [vmem:[%s6 + $0x130] sm:$0xff]
      %v459 = vld [vmem:[%s6 + $0x138] sm:$0xff]
      %v460 = vld [vmem:[%s6 + $0x140] sm:$0xff]
      %v461 = vld [vmem:[%s6 + $0x148] sm:$0xff]
      %v462 = vld [vmem:[%s6 + $0x150] sm:$0xff]
      %v463 = vld [vmem:[%s6 + $0x158] sm:$0xff]
      %v464 = vld [vmem:[%s6 + $0x160] sm:$0xff]
      %v465 = vld [vmem:[%s6 + $0x168] sm:$0xff]
      %v466 = vld [vmem:[%s6 + $0x170] sm:$0xff]
      %v467 = vld [vmem:[%s6 + $0x178] sm:$0xff]
      %v468 = vld [vmem:[%s6 + $0x180] sm:$0xff]
      %v469 = vld [vmem:[%s6 + $0x188] sm:$0xff]
      %v470 = vld [vmem:[%s6 + $0x190] sm:$0xff]
      %v471 = vld [vmem:[%s6 + $0x198] sm:$0xff]
      %v472 = vld [vmem:[%s6 + $0x1a0] sm:$0xff]
      %v473 = vld [vmem:[%s6 + $0x1a8] sm:$0xff]
      %v474 = vld [vmem:[%s6 + $0x1b0] sm:$0xff]
      %v475 = vld [vmem:[%s6 + $0x1b8] sm:$0xff]
      %v476 = vld [vmem:[%s6 + $0x1c0] sm:$0xff]
      %v477 = vld [vmem:[%s6 + $0x1c8] sm:$0xff]
      %v478 = vld [vmem:[%s6 + $0x1d0] sm:$0xff]
      %v479 = vld [vmem:[%s6 + $0x1d8] sm:$0xff]
      %v480 = vld [vmem:[%s6 + $0x1e0] sm:$0xff]
      %v481 = vld [vmem:[%s6 + $0x1e8] sm:$0xff]
      %v482 = vld [vmem:[%s6 + $0x1f0] sm:$0xff]
      %v483 = vld [vmem:[%s6 + $0x1f8] sm:$0xff]
      %v484 = vld [vmem:[%s6 + $0x200] sm:$0xff]
      %v485 = vld [vmem:[%s6 + $0x208] sm:$0xff]
      %v486 = vld [vmem:[%s6 + $0x210] sm:$0xff]
      %v487 = vld [vmem:[%s6 + $0x218] sm:$0xff]
      %v488 = vld [vmem:[%s6 + $0x220] sm:$0xff]
      %v489 = vld [vmem:[%s6 + $0x228] sm:$0xff]
      %v490 = vld [vmem:[%s6 + $0x230] sm:$0xff]
      %v491 = vld [vmem:[%s6 + $0x238] sm:$0xff]
      %v492 = vld [vmem:[%s6 + $0x240] sm:$0xff]
      %v493 = vld [vmem:[%s6 + $0x248] sm:$0xff]
      %v494 = vld [vmem:[%s6 + $0x250] sm:$0xff]
      %v495 = vld [vmem:[%s6 + $0x258] sm:$0xff]
      %v496 = vld [vmem:[%s6 + $0x260] sm:$0xff]
      %v497 = vld [vmem:[%s6 + $0x268] sm:$0xff]
      %v498 = vld [vmem:[%s6 + $0x270] sm:$0xff]
      %v499 = vld [vmem:[%s6 + $0x278] sm:$0xff]
      %v500 = vld [vmem:[%s6 + $0x280] sm:$0xff]
      %v501 = vld [vmem:[%s6 + $0x288] sm:$0xff]
      %v502 = vld [vmem:[%s6 + $0x290] sm:$0xff]
      %v503 = vld [vmem:[%s6 + $0x298] sm:$0xff]
      %v504 = vld [vmem:[%s6 + $0x2a0] sm:$0xff]
      %v505 = vld [vmem:[%s6 + $0x2a8] sm:$0xff]
      %v506 = vld [vmem:[%s6 + $0x2b0] sm:$0xff]
      %v507 = vld [vmem:[%s6 + $0x2b8] sm:$0xff]
      %v508 = vld [vmem:[%s6 + $0x2c0] sm:$0xff]
      %v509 = vld [vmem:[%s6 + $0x2c8] sm:$0xff]
      %v510 = vld [vmem:[%s6 + $0x2d0] sm:$0xff]
      %v511 = vld [vmem:[%s6 + $0x2d8] sm:$0xff]
      %v512 = vld [vmem:[%s6 + $0x2e0] sm:$0xff]
      %v513 = vld [vmem:[%s6 + $0x2e8] sm:$0xff]
      %v514 = vld [vmem:[%s6 + $0x2f0] sm:$0xff]
      %v515 = vld [vmem:[%s6 + $0x2f8] sm:$0xff]
      %v516 = vld [vmem:[%s6 + $0x300] sm:$0xff]
      %v517 = vld [vmem:[%s6 + $0x308] sm:$0xff]
      %v518 = vld [vmem:[%s6 + $0x310] sm:$0xff]
      %v519 = vld [vmem:[%s6 + $0x318] sm:$0xff]
      %v520 = vld [vmem:[%s6 + $0x320] sm:$0xff]
      %v521 = vld [vmem:[%s6 + $0x328] sm:$0xff]
      %v522 = vld [vmem:[%s6 + $0x330] sm:$0xff]
      %v523 = vld [vmem:[%s6 + $0x338] sm:$0xff]
      %v524 = vld [vmem:[%s6 + $0x340] sm:$0xff]
      %v525 = vld [vmem:[%s6 + $0x348] sm:$0xff]
      %v526 = vld [vmem:[%s6 + $0x350] sm:$0xff]
      %v527 = vld [vmem:[%s6 + $0x358] sm:$0xff]
      %v528 = vld [vmem:[%s6 + $0x360] sm:$0xff]
      %v529 = vld [vmem:[%s6 + $0x368] sm:$0xff]
      %v530 = vld [vmem:[%s6 + $0x370] sm:$0xff]
      %v531 = vld [vmem:[%s6 + $0x378] sm:$0xff]
      %v532 = vld [vmem:[%s6 + $0x380] sm:$0xff]
      %v533 = vld [vmem:[%s6 + $0x388] sm:$0xff]
      %v534 = vld [vmem:[%s6 + $0x390] sm:$0xff]
      %v535 = vld [vmem:[%s6 + $0x398] sm:$0xff]
      %v536 = vld [vmem:[%s6 + $0x3a0] sm:$0xff]
      %v537 = vld [vmem:[%s6 + $0x3a8] sm:$0xff]
      %v538 = vld [vmem:[%s6 + $0x3b0] sm:$0xff]
      %v539 = vld [vmem:[%s6 + $0x3b8] sm:$0xff]
      %v540 = vld [vmem:[%s6 + $0x3c0] sm:$0xff]
      %v541 = vld [vmem:[%s6 + $0x3c8] sm:$0xff]
      %v542 = vld [vmem:[%s6 + $0x3d0] sm:$0xff]
      %v543 = vld [vmem:[%s6 + $0x3d8] sm:$0xff]
      %v544 = vld [vmem:[%s6 + $0x3e0] sm:$0xff]
      %v545 = vld [vmem:[%s6 + $0x3e8] sm:$0xff]
      %v546 = vld [vmem:[%s6 + $0x3f0] sm:$0xff]
      %v547 = vld [vmem:[%s6 + $0x3f8] sm:$0xff]
      %v548 = vld [vmem:[%s6 + $0x400] sm:$0xff]
      %v549 = vld [vmem:[%s6 + $0x408] sm:$0xff]
      %v550 = vld [vmem:[%s6 + $0x410] sm:$0xff]
      %v551 = vld [vmem:[%s6 + $0x418] sm:$0xff]
      %v552 = vld [vmem:[%s6 + $0x420] sm:$0xff]
      %v553 = vld [vmem:[%s6 + $0x428] sm:$0xff]
      %v554 = vld [vmem:[%s6 + $0x430] sm:$0xff]
      %v555 = vld [vmem:[%s6 + $0x438] sm:$0xff]
      %v556 = vld [vmem:[%s6 + $0x440] sm:$0xff]
      %v557 = vld [vmem:[%s6 + $0x448] sm:$0xff]
      %v558 = vld [vmem:[%s6 + $0x450] sm:$0xff]
      %v559 = vld [vmem:[%s6 + $0x458] sm:$0xff]
      %v560 = vld [vmem:[%s6 + $0x460] sm:$0xff]
      %v561 = vld [vmem:[%s6 + $0x468] sm:$0xff]
      %v562 = vld [vmem:[%s6 + $0x470] sm:$0xff]
      %v563 = vld [vmem:[%s6 + $0x478] sm:$0xff]
      %v564 = vld [vmem:[%s6 + $0x480] sm:$0xff]
      %v565 = vld [vmem:[%s6 + $0x488] sm:$0xff]
      %v566 = vld [vmem:[%s6 + $0x490] sm:$0xff]
      %v567 = vld [vmem:[%s6 + $0x498] sm:$0xff]
      %v568 = vld [vmem:[%s6 + $0x4a0] sm:$0xff]
      %v569 = vld [vmem:[%s6 + $0x4a8] sm:$0xff]
      %v570 = vld [vmem:[%s6 + $0x4b0] sm:$0xff]
      %v571 = vld [vmem:[%s6 + $0x4b8] sm:$0xff]
      %v572 = vld [vmem:[%s6 + $0x4c0] sm:$0xff]
      %v573 = vld [vmem:[%s6 + $0x4c8] sm:$0xff]
      %v574 = vld [vmem:[%s6 + $0x4d0] sm:$0xff]
      %v575 = vld [vmem:[%s6 + $0x4d8] sm:$0xff]
      %v576 = vld [vmem:[%s6 + $0x4e0] sm:$0xff]
      %v577 = vld [vmem:[%s6 + $0x4e8] sm:$0xff]
      %v578 = vld [vmem:[%s6 + $0x4f0] sm:$0xff]
      %v579 = vld [vmem:[%s6 + $0x4f8] sm:$0xff]
      %v580 = vld [vmem:[%s6 + $0x500] sm:$0xff]
      %v581 = vld [vmem:[%s6 + $0x508] sm:$0xff]
      %v582 = vld [vmem:[%s6 + $0x510] sm:$0xff]
      %v583 = vld [vmem:[%s6 + $0x518] sm:$0xff]
      %v584 = vld [vmem:[%s6 + $0x520] sm:$0xff]
      %v585 = vld [vmem:[%s6 + $0x528] sm:$0xff]
      %v586 = vld [vmem:[%s6 + $0x530] sm:$0xff]
      %v587 = vld [vmem:[%s6 + $0x538] sm:$0xff]
      %v588 = vld [vmem:[%s6 + $0x540] sm:$0xff]
      %v589 = vld [vmem:[%s6 + $0x548] sm:$0xff]
      %v590 = vld [vmem:[%s6 + $0x550] sm:$0xff]
      %v591 = vld [vmem:[%s6 + $0x558] sm:$0xff]
      %v592 = vld [vmem:[%s6 + $0x560] sm:$0xff]
      %v593 = vld [vmem:[%s6 + $0x568] sm:$0xff]
      %v594 = vld [vmem:[%s6 + $0x570] sm:$0xff]
      %v595 = vld [vmem:[%s6 + $0x578] sm:$0xff]
      %v596 = vld [vmem:[%s6 + $0x580] sm:$0xff]
      %v597 = vld [vmem:[%s6 + $0x588] sm:$0xff]
      %v598 = vld [vmem:[%s6 + $0x590] sm:$0xff]
      %v599 = vld [vmem:[%s6 + $0x598] sm:$0xff]
      %v600 = vld [vmem:[%s6 + $0x5a0] sm:$0xff]
      %v601 = vld [vmem:[%s6 + $0x5a8] sm:$0xff]
      %v602 = vld [vmem:[%s6 + $0x5b0] sm:$0xff]
      %v603 = vld [vmem:[%s6 + $0x5b8] sm:$0xff]
      %v604 = vld [vmem:[%s6 + $0x5c0] sm:$0xff]
      %v605 = vld [vmem:[%s6 + $0x5c8] sm:$0xff]
      %v606 = vld [vmem:[%s6 + $0x5d0] sm:$0xff]
      %v607 = vld [vmem:[%s6 + $0x5d8] sm:$0xff]
      %v608 = vld [vmem:[%s6 + $0x5e0] sm:$0xff]
      %v609 = vld [vmem:[%s6 + $0x5e8] sm:$0xff]
      %v610 = vld [vmem:[%s6 + $0x5f0] sm:$0xff]
      %v611 = vld [vmem:[%s6 + $0x5f8] sm:$0xff]
      %v612 = vld [vmem:[%s6 + $0x600] sm:$0xff]
      %v613 = vld [vmem:[%s6 + $0x608] sm:$0xff]
      %v614 = vld [vmem:[%s6 + $0x610] sm:$0xff]
      %v615 = vld [vmem:[%s6 + $0x618] sm:$0xff]
      %v616 = vld [vmem:[%s6 + $0x620] sm:$0xff]
      %v617 = vld [vmem:[%s6 + $0x628] sm:$0xff]
      %v618 = vld [vmem:[%s6 + $0x630] sm:$0xff]
      %v619 = vld [vmem:[%s6 + $0x638] sm:$0xff]
      %v620 = vld [vmem:[%s6 + $0x640] sm:$0xff]
      %v621 = vld [vmem:[%s6 + $0x648] sm:$0xff]
      %v622 = vld [vmem:[%s6 + $0x650] sm:$0xff]
      %v623 = vld [vmem:[%s6 + $0x658] sm:$0xff]
      %v624 = vld [vmem:[%s6 + $0x660] sm:$0xff]
      %v625 = vld [vmem:[%s6 + $0x668] sm:$0xff]
      %v626 = vld [vmem:[%s6 + $0x670] sm:$0xff]
      %v627 = vld [vmem:[%s6 + $0x678] sm:$0xff]
      %v628 = vld [vmem:[%s6 + $0x680] sm:$0xff]
      %v629 = vld [vmem:[%s6 + $0x688] sm:$0xff]
      %v630 = vld [vmem:[%s6 + $0x690] sm:$0xff]
      %v631 = vld [vmem:[%s6 + $0x698] sm:$0xff]
      %v632 = vld [vmem:[%s6 + $0x6a0] sm:$0xff]
      %v633 = vld [vmem:[%s6 + $0x6a8] sm:$0xff]
      %v634 = vld [vmem:[%s6 + $0x6b0] sm:$0xff]
      %v635 = vld [vmem:[%s6 + $0x6b8] sm:$0xff]
      %v636 = vld [vmem:[%s6 + $0x6c0] sm:$0xff]
      %v637 = vld [vmem:[%s6 + $0x6c8] sm:$0xff]
      %v638 = vld [vmem:[%s6 + $0x6d0] sm:$0xff]
      %v639 = vld [vmem:[%s6 + $0x6d8] sm:$0xff]
      %v640 = vld [vmem:[%s6 + $0x6e0] sm:$0xff]
      %v641 = vld [vmem:[%s6 + $0x6e8] sm:$0xff]
      %v642 = vld [vmem:[%s6 + $0x6f0] sm:$0xff]
      %v643 = vld [vmem:[%s6 + $0x6f8] sm:$0xff]
      %v644 = vld [vmem:[%s6 + $0x700] sm:$0xff]
      %v645 = vld [vmem:[%s6 + $0x708] sm:$0xff]
      %v646 = vld [vmem:[%s6 + $0x710] sm:$0xff]
      %v647 = vld [vmem:[%s6 + $0x718] sm:$0xff]
      %v648 = vld [vmem:[%s6 + $0x720] sm:$0xff]
      %v649 = vld [vmem:[%s6 + $0x728] sm:$0xff]
      %v650 = vld [vmem:[%s6 + $0x730] sm:$0xff]
      %v651 = vld [vmem:[%s6 + $0x738] sm:$0xff]
      %v652 = vld [vmem:[%s6 + $0x740] sm:$0xff]
      %v653 = vld [vmem:[%s6 + $0x748] sm:$0xff]
      %v654 = vld [vmem:[%s6 + $0x750] sm:$0xff]
      %v655 = vld [vmem:[%s6 + $0x758] sm:$0xff]
      %v656 = vld [vmem:[%s6 + $0x760] sm:$0xff]
      %v657 = vld [vmem:[%s6 + $0x768] sm:$0xff]
      %v658 = vld [vmem:[%s6 + $0x770] sm:$0xff]
      %v659 = vld [vmem:[%s6 + $0x778] sm:$0xff]
      %v660 = vld [vmem:[%s6 + $0x780] sm:$0xff]
      %v661 = vld [vmem:[%s6 + $0x788] sm:$0xff]
      %v662 = vld [vmem:[%s6 + $0x790] sm:$0xff]
      %v663 = vld [vmem:[%s6 + $0x798] sm:$0xff]
      %v664 = vld [vmem:[%s6 + $0x7a0] sm:$0xff]
      %v665 = vld [vmem:[%s6 + $0x7a8] sm:$0xff]
      %v666 = vld [vmem:[%s6 + $0x7b0] sm:$0xff]
      %v667 = vld [vmem:[%s6 + $0x7b8] sm:$0xff]
      %v668 = vld [vmem:[%s6 + $0x7c0] sm:$0xff]
      %v669 = vld [vmem:[%s6 + $0x7c8] sm:$0xff]
      %v670 = vld [vmem:[%s6 + $0x7d0] sm:$0xff]
      %v671 = vld [vmem:[%s6 + $0x7d8] sm:$0xff]
      %v672 = vld [vmem:[%s6 + $0x7e0] sm:$0xff]
      %v673 = vld [vmem:[%s6 + $0x7e8] sm:$0xff]
      %v674 = vld [vmem:[%s6 + $0x7f0] sm:$0xff]
      %v675 = vld [vmem:[%s6 + $0x7f8] sm:$0xff]
      %676 = vmatprep.subr.mxu0 %v541
      %677 = vmatpush1.msra.mxu0 %v540
      %678 = vmatprep.subr.mxu0 %v533
      %679 = vmatpush1.msra.mxu0 %v532
      %680 = vmatprep.subr.mxu0 %v525
      %681 = vmatpush1.msra.mxu0 %v524
      %682 = vmatprep.subr.mxu0 %v517
      %683 = vmatpush1.msra.mxu0 %v516
      %684 = vmatprep.subr.mxu0 %v509
      %685 = vmatpush1.msra.mxu0 %v508
      %686 = vmatprep.subr.mxu0 %v501
      %687 = vmatpush1.msra.mxu0 %v500
      %688 = vmatprep.subr.mxu0 %v493
      %689 = vmatpush1.msra.mxu0 %v492
      %690 = vmatprep.subr.mxu0 %v485
      %691 = vmatpush1.msra.mxu0 %v484
      %692 = vmatprep.subr.mxu0 %v477
      %693 = vmatpush1.msra.mxu0 %v476
      %694 = vmatprep.subr.mxu0 %v469
      %695 = vmatpush1.msra.mxu0 %v468
      %696 = vmatprep.subr.mxu0 %v461
      %697 = vmatpush1.msra.mxu0 %v460
      %698 = vmatprep.subr.mxu0 %v453
      %699 = vmatpush1.msra.mxu0 %v452
      %700 = vmatprep.subr.mxu0 %v445
      %701 = vmatpush1.msra.mxu0 %v444
      %702 = vmatprep.subr.mxu0 %v437
      %703 = vmatpush1.msra.mxu0 %v436
      %704 = vmatprep.subr.mxu0 %v429
      %705 = vmatpush1.msra.mxu0 %v428
      %706 = vmatprep.subr.mxu0 %v421
      %707 = vmatpush1.msra.mxu0 %v420
      %708 = vmatprep.subr.mxu0 %v669
      %709 = vmatpush2.msra.mxu0 %v668
      %710 = vmatprep.subr.mxu0 %v661
      %711 = vmatpush2.msra.mxu0 %v660
      %712 = vmatprep.subr.mxu0 %v653
      %713 = vmatpush2.msra.mxu0 %v652
      %714 = vmatprep.subr.mxu0 %v645
      %715 = vmatpush2.msra.mxu0 %v644
      %716 = vmatprep.subr.mxu0 %v637
      %717 = vmatpush2.msra.mxu0 %v636
      %718 = vmatprep.subr.mxu0 %v629
      %719 = vmatpush2.msra.mxu0 %v628
      %720 = vmatprep.subr.mxu0 %v621
      %721 = vmatpush2.msra.mxu0 %v620
      %722 = vmatprep.subr.mxu0 %v613
      %723 = vmatpush2.msra.mxu0 %v612
      %724 = vmatprep.subr.mxu0 %v605
      %725 = vmatpush2.msra.mxu0 %v604
      %726 = vmatprep.subr.mxu0 %v597
      %727 = vmatpush2.msra.mxu0 %v596
      %728 = vmatprep.subr.mxu0 %v589
      %729 = vmatpush2.msra.mxu0 %v588
      %730 = vmatprep.subr.mxu0 %v581
      %731 = vmatpush2.msra.mxu0 %v580
      %732 = vmatprep.subr.mxu0 %v573
      %733 = vmatpush2.msra.mxu0 %v572
      %734 = vmatprep.subr.mxu0 %v565
      %735 = vmatpush2.msra.mxu0 %v564
      %736 = vmatprep.subr.mxu0 %v557
      %737 = vmatpush2.msra.mxu0 %v556
      %738 = vmatprep.subr.mxu0 %v549
      %739 = vmatpush2.msra.mxu0 %v548
      %740 = vmatprep.mubr.f32.mxu0 %v418
      %741 = vmatmul.mubr.f32.gmra.mxu0 %v416
      %v742 = vpop.f32.mrf.mxu0
      %v743 = vadd.f32 0.0, %v742
      %v744 = vpop.f32.mrf.mxu0
      %v745 = vadd.f32 0.0, %v744
      %746 = vdwg.mxu0
      %747 = vmatprep.subr.mxu0 %v543
      %748 = vmatpush1.msra.mxu0 %v542
      %749 = vmatprep.subr.mxu0 %v535
      %750 = vmatpush1.msra.mxu0 %v534
      %751 = vmatprep.subr.mxu0 %v527
      %752 = vmatpush1.msra.mxu0 %v526
      %753 = vmatprep.subr.mxu0 %v519
      %754 = vmatpush1.msra.mxu0 %v518
      %755 = vmatprep.subr.mxu0 %v511
      %756 = vmatpush1.msra.mxu0 %v510
      %757 = vmatprep.subr.mxu0 %v503
      %758 = vmatpush1.msra.mxu0 %v502
      %759 = vmatprep.subr.mxu0 %v495
      %760 = vmatpush1.msra.mxu0 %v494
      %761 = vmatprep.subr.mxu0 %v487
      %762 = vmatpush1.msra.mxu0 %v486
      %763 = vmatprep.subr.mxu0 %v479
      %764 = vmatpush1.msra.mxu0 %v478
      %765 = vmatprep.subr.mxu0 %v471
      %766 = vmatpush1.msra.mxu0 %v470
      %767 = vmatprep.subr.mxu0 %v463
      %768 = vmatpush1.msra.mxu0 %v462
      %769 = vmatprep.subr.mxu0 %v455
      %770 = vmatpush1.msra.mxu0 %v454
      %771 = vmatprep.subr.mxu0 %v447
      %772 = vmatpush1.msra.mxu0 %v446
      %773 = vmatprep.subr.mxu0 %v439
      %774 = vmatpush1.msra.mxu0 %v438
      %775 = vmatprep.subr.mxu0 %v431
      %776 = vmatpush1.msra.mxu0 %v430
      %777 = vmatprep.subr.mxu0 %v423
      %778 = vmatpush1.msra.mxu0 %v422
      %779 = vmatprep.subr.mxu0 %v671
      %780 = vmatpush2.msra.mxu0 %v670
      %781 = vmatprep.subr.mxu0 %v663
      %782 = vmatpush2.msra.mxu0 %v662
      %783 = vmatprep.subr.mxu0 %v655
      %784 = vmatpush2.msra.mxu0 %v654
      %785 = vmatprep.subr.mxu0 %v647
      %786 = vmatpush2.msra.mxu0 %v646
      %787 = vmatprep.subr.mxu0 %v639
      %788 = vmatpush2.msra.mxu0 %v638
      %789 = vmatprep.subr.mxu0 %v631
      %790 = vmatpush2.msra.mxu0 %v630
      %791 = vmatprep.subr.mxu0 %v623
      %792 = vmatpush2.msra.mxu0 %v622
      %793 = vmatprep.subr.mxu0 %v615
      %794 = vmatpush2.msra.mxu0 %v614
      %795 = vmatprep.subr.mxu0 %v607
      %796 = vmatpush2.msra.mxu0 %v606
      %797 = vmatprep.subr.mxu0 %v599
      %798 = vmatpush2.msra.mxu0 %v598
      %799 = vmatprep.subr.mxu0 %v591
      %800 = vmatpush2.msra.mxu0 %v590
      %801 = vmatprep.subr.mxu0 %v583
      %802 = vmatpush2.msra.mxu0 %v582
      %803 = vmatprep.subr.mxu0 %v575
      %804 = vmatpush2.msra.mxu0 %v574
      %805 = vmatprep.subr.mxu0 %v567
      %806 = vmatpush2.msra.mxu0 %v566
      %807 = vmatprep.subr.mxu0 %v559
      %808 = vmatpush2.msra.mxu0 %v558
      %809 = vmatprep.subr.mxu0 %v551
      %810 = vmatpush2.msra.mxu0 %v550
      %811 = vmatprep.mubr.f32.mxu0 %v418
      %812 = vmatmul.mubr.f32.gmra.mxu0 %v416
      %v813 = vpop.f32.mrf.mxu0
      %v814 = vadd.f32 0.0, %v813
      %v815 = vpop.f32.mrf.mxu0
      %v816 = vadd.f32 0.0, %v815
      %817 = vdwg.mxu0
      %818 = vmatprep.subr.mxu0 %v545
      %819 = vmatpush1.msra.mxu0 %v544
      %820 = vmatprep.subr.mxu0 %v537
      %821 = vmatpush1.msra.mxu0 %v536
      %822 = vmatprep.subr.mxu0 %v529
      %823 = vmatpush1.msra.mxu0 %v528
      %824 = vmatprep.subr.mxu0 %v521
      %825 = vmatpush1.msra.mxu0 %v520
      %826 = vmatprep.subr.mxu0 %v513
      %827 = vmatpush1.msra.mxu0 %v512
      %828 = vmatprep.subr.mxu0 %v505
      %829 = vmatpush1.msra.mxu0 %v504
      %830 = vmatprep.subr.mxu0 %v497
      %831 = vmatpush1.msra.mxu0 %v496
      %832 = vmatprep.subr.mxu0 %v489
      %833 = vmatpush1.msra.mxu0 %v488
      %834 = vmatprep.subr.mxu0 %v481
      %835 = vmatpush1.msra.mxu0 %v480
      %836 = vmatprep.subr.mxu0 %v473
      %837 = vmatpush1.msra.mxu0 %v472
      %838 = vmatprep.subr.mxu0 %v465
      %839 = vmatpush1.msra.mxu0 %v464
      %840 = vmatprep.subr.mxu0 %v457
      %841 = vmatpush1.msra.mxu0 %v456
      %842 = vmatprep.subr.mxu0 %v449
      %843 = vmatpush1.msra.mxu0 %v448
      %844 = vmatprep.subr.mxu0 %v441
      %845 = vmatpush1.msra.mxu0 %v440
      %846 = vmatprep.subr.mxu0 %v433
      %847 = vmatpush1.msra.mxu0 %v432
      %848 = vmatprep.subr.mxu0 %v425
      %849 = vmatpush1.msra.mxu0 %v424
      %850 = vmatprep.subr.mxu0 %v673
      %851 = vmatpush2.msra.mxu0 %v672
      %852 = vmatprep.subr.mxu0 %v665
      %853 = vmatpush2.msra.mxu0 %v664
      %854 = vmatprep.subr.mxu0 %v657
      %855 = vmatpush2.msra.mxu0 %v656
      %856 = vmatprep.subr.mxu0 %v649
      %857 = vmatpush2.msra.mxu0 %v648
      %858 = vmatprep.subr.mxu0 %v641
      %859 = vmatpush2.msra.mxu0 %v640
      %860 = vmatprep.subr.mxu0 %v633
      %861 = vmatpush2.msra.mxu0 %v632
      %862 = vmatprep.subr.mxu0 %v625
      %863 = vmatpush2.msra.mxu0 %v624
      %864 = vmatprep.subr.mxu0 %v617
      %865 = vmatpush2.msra.mxu0 %v616
      %866 = vmatprep.subr.mxu0 %v609
      %867 = vmatpush2.msra.mxu0 %v608
      %868 = vmatprep.subr.mxu0 %v601
      %869 = vmatpush2.msra.mxu0 %v600
      %870 = vmatprep.subr.mxu0 %v593
      %871 = vmatpush2.msra.mxu0 %v592
      %872 = vmatprep.subr.mxu0 %v585
      %873 = vmatpush2.msra.mxu0 %v584
      %874 = vmatprep.subr.mxu0 %v577
      %875 = vmatpush2.msra.mxu0 %v576
      %876 = vmatprep.subr.mxu0 %v569
      %877 = vmatpush2.msra.mxu0 %v568
      %878 = vmatprep.subr.mxu0 %v561
      %879 = vmatpush2.msra.mxu0 %v560
      %880 = vmatprep.subr.mxu0 %v553
      %881 = vmatpush2.msra.mxu0 %v552
      %882 = vmatprep.mubr.f32.mxu0 %v418
      %883 = vmatmul.mubr.f32.gmra.mxu0 %v416
      %v884 = vpop.f32.mrf.mxu0
      %v885 = vadd.f32 0.0, %v884
      %v886 = vpop.f32.mrf.mxu0
      %v887 = vadd.f32 0.0, %v886
      %888 = vdwg.mxu0
      %889 = vmatprep.subr.mxu0 %v547
      %890 = vmatpush1.msra.mxu0 %v546
      %891 = vmatprep.subr.mxu0 %v539
      %892 = vmatpush1.msra.mxu0 %v538
      %893 = vmatprep.subr.mxu0 %v531
      %894 = vmatpush1.msra.mxu0 %v530
      %895 = vmatprep.subr.mxu0 %v523
      %896 = vmatpush1.msra.mxu0 %v522
      %897 = vmatprep.subr.mxu0 %v515
      %898 = vmatpush1.msra.mxu0 %v514
      %899 = vmatprep.subr.mxu0 %v507
      %900 = vmatpush1.msra.mxu0 %v506
      %901 = vmatprep.subr.mxu0 %v499
      %902 = vmatpush1.msra.mxu0 %v498
      %903 = vmatprep.subr.mxu0 %v491
      %904 = vmatpush1.msra.mxu0 %v490
      %905 = vmatprep.subr.mxu0 %v483
      %906 = vmatpush1.msra.mxu0 %v482
      %907 = vmatprep.subr.mxu0 %v475
      %908 = vmatpush1.msra.mxu0 %v474
      %909 = vmatprep.subr.mxu0 %v467
      %910 = vmatpush1.msra.mxu0 %v466
      %911 = vmatprep.subr.mxu0 %v459
      %912 = vmatpush1.msra.mxu0 %v458
      %913 = vmatprep.subr.mxu0 %v451
      %914 = vmatpush1.msra.mxu0 %v450
      %915 = vmatprep.subr.mxu0 %v443
      %916 = vmatpush1.msra.mxu0 %v442
      %917 = vmatprep.subr.mxu0 %v435
      %918 = vmatpush1.msra.mxu0 %v434
      %919 = vmatprep.subr.mxu0 %v427
      %920 = vmatpush1.msra.mxu0 %v426
      %921 = vmatprep.subr.mxu0 %v675
      %922 = vmatpush2.msra.mxu0 %v674
      %923 = vmatprep.subr.mxu0 %v667
      %924 = vmatpush2.msra.mxu0 %v666
      %925 = vmatprep.subr.mxu0 %v659
      %926 = vmatpush2.msra.mxu0 %v658
      %927 = vmatprep.subr.mxu0 %v651
      %928 = vmatpush2.msra.mxu0 %v650
      %929 = vmatprep.subr.mxu0 %v643
      %930 = vmatpush2.msra.mxu0 %v642
      %931 = vmatprep.subr.mxu0 %v635
      %932 = vmatpush2.msra.mxu0 %v634
      %933 = vmatprep.subr.mxu0 %v627
      %934 = vmatpush2.msra.mxu0 %v626
      %935 = vmatprep.subr.mxu0 %v619
      %936 = vmatpush2.msra.mxu0 %v618
      %937 = vmatprep.subr.mxu0 %v611
      %938 = vmatpush2.msra.mxu0 %v610
      %939 = vmatprep.subr.mxu0 %v603
      %940 = vmatpush2.msra.mxu0 %v602
      %941 = vmatprep.subr.mxu0 %v595
      %942 = vmatpush2.msra.mxu0 %v594
      %943 = vmatprep.subr.mxu0 %v587
      %944 = vmatpush2.msra.mxu0 %v586
      %945 = vmatprep.subr.mxu0 %v579
      %946 = vmatpush2.msra.mxu0 %v578
      %947 = vmatprep.subr.mxu0 %v571
      %948 = vmatpush2.msra.mxu0 %v570
      %949 = vmatprep.subr.mxu0 %v563
      %950 = vmatpush2.msra.mxu0 %v562
      %951 = vmatprep.subr.mxu0 %v555
      %952 = vmatpush2.msra.mxu0 %v554
      %953 = vmatprep.mubr.f32.mxu0 %v418
      %954 = vmatmul.mubr.f32.gmra.mxu0 %v416
      %v955 = vpop.f32.mrf.mxu0
      %v956 = vadd.f32 0.0, %v955
      %v957 = vpop.f32.mrf.mxu0
      %v958 = vadd.f32 0.0, %v957
      %959 = vdwg.mxu0
      %v968 = vcombine.low %v743, %v745
      %v969 = vcombine.low %v814, %v816
      %v970 = vcombine.low %v885, %v887
      %v971 = vcombine.low %v956, %v958
      %976 = vst [vmem:[%s298] sm:$0x77] %v968
      %977 = vst [vmem:[%s298 + $0x8] sm:$0x77] %v969
      %978 = vst [vmem:[%s298 + $0x10] sm:$0x77] %v970
      %979 = vst [vmem:[%s298 + $0x18] sm:$0x77] %v971
      %p980 = scmp.lt.s32.totalorder %s18, 1
      %s981 = scalar_select %p980, %s18, 1
      %s982 = smul.addr %s981, 8
      %s983 = smul.addr %s982, 4
      %s984 = scalar_lea.vmem %s7, %s983
      // Predicated region
      $region49: #{deep_supervision_block_v2.5} parent=47 // pred_check
        %p985 = pneg %p193
      $region50: #{deep_supervision_block_v2.5} parent=47 // pred_check_branch
        %987 = sbr.rel (%p985) target = $region52
      $region51: #{deep_supervision_block_v2.5} parent=47 // pred_region
        _
      $region52: #{deep_supervision_block_v2.5} parent=47 // pred_fallthru
        _
    $region48: #{deep_supervision_block_v2.5} parent=5 // pred_fallthru
      _
    %p988 = scmp.le.s32.totalorder 2, %s13
    // Predicated region
    $region53: #{deep_supervision_block_v2.5} parent=5 // pred_check
      %p989 = pneg %p988
    $region54: #{deep_supervision_block_v2.5} parent=5 // pred_check_branch
      %991 = sbr.rel (%p989) target = $region56
    $region55: #{deep_supervision_block_v2.5} parent=5 // pred_region
      %s992 = ssub.s32 %s13, 2
      // Predicated region
      $region57: #{deep_supervision_block_v2.5} parent=55 // pred_check
        %p993 = pneg %p199
      $region58: #{deep_supervision_block_v2.5} parent=55 // pred_check_branch
        %995 = sbr.rel (%p993) target = $region60
      $region59: #{deep_supervision_block_v2.5} parent=55 // pred_region
        %p996 = scmp.lt.s32.totalorder %s19, 1
        %s997 = scalar_select %p996, %s19, 1
        %s998 = smul.addr %s997, 8
        %s999 = smul.addr %s998, 4
        %s1000 = scalar_lea.vmem %s7, %s999
      $region60: #{deep_supervision_block_v2.5} parent=55 // pred_fallthru
        _
    $region56: #{deep_supervision_block_v2.5} parent=5 // pred_fallthru
      _
  $region6: #{deep_supervision_block_v2.5} parent=0 // loop_footer
    %s17 = sadd.s32 1, %s13
  $region7: #{deep_supervision_block_v2.5} parent=0 // loop_footer_branch
    %12 = sbr.rel target = $region3
  $region8: #{deep_supervision_block_v2.5} parent=0 // loop_exit
    _

</llo_original>
